<compile_context>
chip_gen: v7x
topology: tpu7x:2x2x1
jax: 0.10.0
libtpu: 0.0.40
codegen_flags: <defaults>
</compile_context>

<pallas_src>
import functools

import numpy as np
import jax
import jax.numpy as jnp
from jax import lax
from jax.experimental import pallas as pl
from jax.experimental.pallas import tpu as pltpu


def _round_up(v, m):
    return ((v + m - 1) // m) * m


def _layernorm_channels(x, g, b):
    """WithBias LayerNorm over the channel (sublane) axis of a (C, L) map."""
    mu = jnp.mean(x, axis=0, keepdims=True)
    xc = x - mu
    var = jnp.mean(xc * xc, axis=0, keepdims=True)
    return xc * lax.rsqrt(var + 1e-5) * g + b


def _gelu_tanh(x):
    # TODO(synk): PyTorch F.gelu default is the exact erf form; the tanh
    # approximation used in-kernel differs by < 1e-3 absolute.
    c = 0.7978845608028654  # sqrt(2/pi)
    return 0.5 * x * (1.0 + jnp.tanh(c * (x + 0.044715 * x * x * x)))


def _dwconv3x3_halo(z, taps, bias, Wh, L):
    """Depthwise 3x3 conv (padding=1) on a halo-padded (Cz, L) map.

    `z` must already have its halo / pad / tail columns zeroed (single `*real`
    pre-mask), so each tap is a pure lane roll + weight FMA (XLU + VALU), no
    per-tap border masks.  Tap t=ky*3+kx shifts by (ky-1)*(W+2)+(kx-1); real
    destinations only ever read sources inside their own image slab.
    """
    acc = None
    for t in range(9):
        off = (t // 3 - 1) * Wh + (t % 3 - 1)
        s = z if off == 0 else pltpu.roll(z, (-off) % L, axis=1)
        term = taps[:, t:t + 1] * s
        acc = term if acc is None else acc + term
    return acc + bias


def _block_kernel(x_ref, cvec_ref, hmask_ref, real_ref,
                  w_qkv_ref, attn_cb_ref, w_po_ref,
                  w_in_ref, ffn_cb_ref, w_out_ref,
                  o_ref, att_sc, *, C, Hf, Wh, S, nB):
    f32, bf16 = jnp.float32, jnp.bfloat16
    L = nB * S
    x = x_ref[0].astype(f32)                      # (C, L)
    real = real_ref[...]                          # (1, L) 1 = real pixel column

    cvec = cvec_ref[...]                          # (C, 7) packed per-channel consts
    g1, b1 = cvec[:, 0:1], cvec[:, 1:2]
    g2, b2 = cvec[:, 2:3], cvec[:, 3:4]
    b_po, b_out = cvec[:, 4:5], cvec[:, 5:6]
    temp = cvec[:, 6:7]                           # per-row (query-channel) temperature

    attn_cb = attn_cb_ref[...]                    # (3C, 11): [b_qkv | 9 dw taps | b_dw]
    ffn_cb = ffn_cb_ref[...]                      # (2Hf,11): [b_in  | 9 dw taps | b_dw2]

    # ---------------- attention branch: x + Attn(LN1(x)) ----------------
    y1 = _layernorm_channels(x, g1, b1)

    # qkv = Conv2d(C, 3C, 1): channel matmul on the MXU (bf16 in, f32 acc)
    qkv = jnp.dot(w_qkv_ref[...], y1.astype(bf16),
                  preferred_element_type=f32) + attn_cb[:, 0:1]         # (3C, L)
    qkv = qkv * real                              # single pre-mask: halo/pad cols -> 0
    qkv = _dwconv3x3_halo(qkv, attn_cb[:, 1:10], attn_cb[:, 10:11], Wh, L)

    q = qkv[0:C, :] * real                        # q/k need clean padded columns
    k = qkv[C:2 * C, :] * real
    v = qkv[2 * C:3 * C, :]                       # v's padded cols never reach real outs

    # Per-image slabs: normalize / gram / softmax / attn@v must not mix images
    # along the lane contraction.  Static unrolled loop (nB is small).
    # NOTE: the fused block-diagonal (C,C) head trick is right for C=16; for
    # C >= 128 switch to per-head grams instead.
    for i in range(nB):
        lo, hi = i * S, (i + 1) * S
        qi, ki, vi = q[:, lo:hi], k[:, lo:hi], v[:, lo:hi]
        qn = qi * lax.rsqrt(jnp.maximum(jnp.sum(qi * qi, -1, keepdims=True), 1e-24))
        kn = ki * lax.rsqrt(jnp.maximum(jnp.sum(ki * ki, -1, keepdims=True), 1e-24))
        gram = lax.dot_general(qn.astype(bf16), kn.astype(bf16),
                               (((1,), (1,)), ((), ())),
                               preferred_element_type=f32)              # (C, C)
        # q,k unit-norm => |gram*temp| <= max(temp); masked entries (-1e30)
        # underflow exp to 0, so no max-subtraction is needed.
        logits = gram * temp + hmask_ref[...]
        e = jnp.exp(logits)
        p = e * pl.reciprocal(jnp.sum(e, -1, keepdims=True), approx=True)
        att_sc[:, lo:hi] = jnp.dot(p.astype(bf16), vi.astype(bf16),
                                   preferred_element_type=f32)

    att = jnp.dot(w_po_ref[...], att_sc[...].astype(bf16),
                  preferred_element_type=f32) + b_po                    # project_out
    x1 = x + att

    # ---------------- FFN branch: x1 + FFN(LN2(x1)) ----------------
    y2 = _layernorm_channels(x1, g2, b2)
    h = jnp.dot(w_in_ref[...], y2.astype(bf16),
                preferred_element_type=f32) + ffn_cb[:, 0:1]            # (2Hf, L)
    h = h * real
    h = _dwconv3x3_halo(h, ffn_cb[:, 1:10], ffn_cb[:, 10:11], Wh, L)
    gated = _gelu_tanh(h[0:Hf, :]) * h[Hf:2 * Hf, :]
    ffn = jnp.dot(w_out_ref[...], gated.astype(bf16),
                  preferred_element_type=f32) + b_out                   # (C, L)

    o_ref[0] = (x1 + ffn).astype(o_ref.dtype)


# ----------------------------------------------------------------------------
# Packed layout helpers.  For a stack of TransformerBlocks the packed bf16
# (Bg, C, nB*S) layout should be the persistent inter-layer HBM format so the
# pad / fold / unpad cost is paid once, not per block.
# ----------------------------------------------------------------------------

def _pick_fold(B, S, max_lanes=2048):
    nb = max(1, min(B, max_lanes // S))
    if B >= 2:
        nb = min(nb, max(1, B // 2))   # keep >= 2 grid steps (v7x has 2 TCs)
    return nb


def pack_input(x, nB, S):
    """(B, C, H, W) f32/bf16 -> (ceil(B/nB), C, nB*S) bf16, halo spatial layout."""
    B, C, H, W = x.shape
    Bp = _round_up(B, nB)
    xp = jnp.pad(x, ((0, Bp - B), (0, 0), (1, 1), (1, 1)))              # halo + batch pad
    xp = xp.reshape(Bp, C, (H + 2) * (W + 2))
    xp = jnp.pad(xp, ((0, 0), (0, 0), (0, S - (H + 2) * (W + 2))))
    xp = xp.reshape(Bp // nB, nB, C, S).transpose(0, 2, 1, 3)
    return xp.reshape(Bp // nB, C, nB * S).astype(jnp.bfloat16)


def unpack_output(o, B, H, W, nB, S):
    """Inverse of pack_input (drops halo/pad columns and padded batch rows)."""
    Bg, C, _ = o.shape
    o = o.reshape(Bg, C, nB, S).transpose(0, 2, 1, 3).reshape(Bg * nB, C, S)
    o = o[:B, :, :(H + 2) * (W + 2)].reshape(B, C, H + 2, W + 2)
    return o[:, :, 1:H + 1, 1:W + 1].astype(jnp.float32)


def transformer_block_forward_packed(x_packed, params, num_heads, H, W, nB, S):
    """Runs the block on the packed (Bg, C, nB*S) bf16 layout, returns same layout."""
    Bg, C, L = x_packed.shape
    assert L == nB * S
    Hf = params['w_out'].shape[1]
    cph = C // num_heads
    C3, Wh = 3 * C, W + 2
    bf16 = jnp.bfloat16

    # "real pixel" column mask, tiled over the nB image slabs.
    col = np.arange(S)
    r, c = col // Wh, col % Wh
    real = ((col < (H + 2) * (W + 2)) & (r >= 1) & (r <= H)
            & (c >= 1) & (c <= W)).astype(np.float32)
    real_L = jnp.asarray(np.tile(real, nB)[None, :])                    # (1, L)

    # Block-diagonal head mask (additive) and per-row temperature vector.
    hid = np.arange(C) // cph
    hmask = jnp.asarray(
        np.where(hid[:, None] == hid[None, :], 0.0, -1e30).astype(np.float32))
    temp_row = jnp.repeat(params['temperature'].reshape(num_heads), cph)

    f32c = lambda a: a.astype(jnp.float32)
    # Packed per-channel constants (one small buffer instead of ~10).
    cvec = jnp.stack([f32c(params['ln1_w']), f32c(params['ln1_b']),
                      f32c(params['ln2_w']), f32c(params['ln2_b']),
                      f32c(params['b_po']), f32c(params['b_out']),
                      f32c(temp_row)], axis=1)                          # (C, 7)
    attn_cb = jnp.concatenate([f32c(params['b_qkv'])[:, None],
                               f32c(params['w_dw']).reshape(C3, 9),
                               f32c(params['b_dw'])[:, None]], axis=1)  # (3C, 11)
    ffn_cb = jnp.concatenate([f32c(params['b_in'])[:, None],
                              f32c(params['w_dw2']).reshape(2 * Hf, 9),
                              f32c(params['b_dw2'])[:, None]], axis=1)  # (2Hf, 11)

    const_args = (cvec, hmask, real_L,
                  params['w_qkv'].astype(bf16), attn_cb,
                  params['w_po'].astype(bf16),
                  params['w_in'].astype(bf16), ffn_cb,
                  params['w_out'].astype(bf16))

    in_specs = [pl.BlockSpec((1, C, L), lambda g: (g, 0, 0))]
    in_specs += [pl.BlockSpec(a.shape, lambda g: (0, 0)) for a in const_args]

    # Generation-aware VMEM budgeting: floor at the 32 MiB default, cap at
    # 48 MiB so the same block size still fits v7x's 64 MiB physical VMEM.
    est = (2 * (2 * C * L * 2)              # x + out blocks (bf16, double-buffered)
           + 2 * 3 * C * L * 4              # qkv + dwconv temporaries (f32)
           + 2 * 2 * Hf * L * 4 * 2         # h + dwconv temporaries (f32)
           + C * L * 4                      # attention scratch
           + 4 * C * C * 4)                 # gram/logits/softmax
    vmem_limit = int(min(max(2 * est, 32 * 2 ** 20), 48 * 2 ** 20))

    kernel = functools.partial(_block_kernel, C=C, Hf=Hf, Wh=Wh, S=S, nB=nB)

    return pl.pallas_call(
        kernel,
        out_shape=jax.ShapeDtypeStruct((Bg, C, L), jnp.bfloat16),
        grid=(Bg,),
        in_specs=in_specs,
        out_specs=pl.BlockSpec((1, C, L), lambda g: (g, 0, 0)),
        scratch_shapes=[pltpu.VMEM((C, L), jnp.float32)],
        compiler_params=pltpu.CompilerParams(
            dimension_semantics=("parallel",),
            vmem_limit_bytes=vmem_limit),
    )(x_packed, *const_args)


def transformer_block_forward(x, params, num_heads):
    """Convenience wrapper: pack -> kernel -> unpack.  In a multi-block stack,
    hoist pack/unpack outside the stack and chain the packed calls."""
    B, C, H, W = x.shape
    S = _round_up((H + 2) * (W + 2), 128)        # lane-dense halo slab per image
    nB = _pick_fold(B, S)
    x_packed = pack_input(x, nB, S)
    o_packed = transformer_block_forward_packed(x_packed, params, num_heads,
                                                H, W, nB, S)
    return unpack_output(o_packed, B, H, W, nB, S)


def reference(x, params, num_heads):
    """Pure-JAX f32 reference matching the PyTorch TransformerBlock forward
    (LayerNorm_type='WithBias', exact-erf GELU)."""
    B, C, H, W = x.shape
    cph = C // num_heads

    def ln(t, w, b):
        mu = jnp.mean(t, axis=1, keepdims=True)
        var = jnp.mean((t - mu) ** 2, axis=1, keepdims=True)
        return ((t - mu) / jnp.sqrt(var + 1e-5) * w[None, :, None, None]
                + b[None, :, None, None])

    def conv1x1(t, w, b):
        return jnp.einsum('oc,bchw->bohw', w, t) + b[None, :, None, None]

    def dwconv(t, w, b):
        cz = t.shape[1]
        y = lax.conv_general_dilated(
            t, w.reshape(cz, 1, 3, 3), (1, 1), ((1, 1), (1, 1)),
            dimension_numbers=('NCHW', 'OIHW', 'NCHW'),
            feature_group_count=cz)
        return y + b[None, :, None, None]

    def nrm(t):
        return t / jnp.maximum(
            jnp.sqrt(jnp.sum(t * t, axis=-1, keepdims=True)), 1e-12)

    # attention
    y1 = ln(x, params['ln1_w'], params['ln1_b'])
    qkv = dwconv(conv1x1(y1, params['w_qkv'], params['b_qkv']),
                 params['w_dw'], params['b_dw'])
    q, k, v = jnp.split(qkv, 3, axis=1)
    rsh = lambda t: t.reshape(B, num_heads, cph, H * W)
    q, k, v = nrm(rsh(q)), nrm(rsh(k)), rsh(v)
    attn = (jnp.einsum('bhcn,bhdn->bhcd', q, k)
            * params['temperature'].reshape(1, num_heads, 1, 1))
    attn = jax.nn.softmax(attn, axis=-1)
    out = jnp.einsum('bhcd,bhdn->bhcn', attn, v).reshape(B, C, H, W)
    x = x + conv1x1(out, params['w_po'], params['b_po'])

    # feed-forward
    y2 = ln(x, params['ln2_w'], params['ln2_b'])
    h = dwconv(conv1x1(y2, params['w_in'], params['b_in']),
               params['w_dw2'], params['b_dw2'])
    h1, h2 = jnp.split(h, 2, axis=1)
    x = x + conv1x1(jax.nn.gelu(h1, approximate=False) * h2,
                    params['w_out'], params['b_out'])
    return x


if __name__ == "__main__":
    # Shapes consistent with TransformerBlock(dim=16, num_heads=2,
    # ffn_expansion_factor=2.0, bias=True, LayerNorm_type='WithBias').
    # B=8 exercises batch folding (nB=4 images per grid step, 2 grid steps).
    B, dim, num_heads, H, W = 8, 16, 2, 8, 8
    Hf = int(dim * 2.0)

    key = jax.random.PRNGKey(0)
    ks = jax.random.split(key, 18)
    x = jax.random.normal(ks[0], (B, dim, H, W), jnp.float32)

    params = dict(
        ln1_w=1.0 + 0.05 * jax.random.normal(ks[1], (dim,), jnp.float32),
        ln1_b=0.05 * jax.random.normal(ks[2], (dim,), jnp.float32),
        w_qkv=0.2 * jax.random.normal(ks[3], (3 * dim, dim), jnp.float32),
        b_qkv=0.1 * jax.random.normal(ks[4], (3 * dim,), jnp.float32),
        w_dw=0.2 * jax.random.normal(ks[5], (3 * dim, 3, 3), jnp.float32),
        b_dw=0.1 * jax.random.normal(ks[6], (3 * dim,), jnp.float32),
        temperature=jax.random.uniform(ks[7], (num_heads,), jnp.float32, 0.5, 1.5),
        w_po=0.2 * jax.random.normal(ks[8], (dim, dim), jnp.float32),
        b_po=0.1 * jax.random.normal(ks[9], (dim,), jnp.float32),
        ln2_w=1.0 + 0.05 * jax.random.normal(ks[10], (dim,), jnp.float32),
        ln2_b=0.05 * jax.random.normal(ks[11], (dim,), jnp.float32),
        w_in=0.2 * jax.random.normal(ks[12], (2 * Hf, dim), jnp.float32),
        b_in=0.1 * jax.random.normal(ks[13], (2 * Hf,), jnp.float32),
        w_dw2=0.2 * jax.random.normal(ks[14], (2 * Hf, 3, 3), jnp.float32),
        b_dw2=0.1 * jax.random.normal(ks[15], (2 * Hf,), jnp.float32),
        w_out=0.2 * jax.random.normal(ks[16], (dim, Hf), jnp.float32),
        b_out=0.1 * jax.random.normal(ks[17], (dim,), jnp.float32),
    )

    out = transformer_block_forward(x, params, num_heads)
    out = jax.block_until_ready(out)

    ref = reference(x, params, num_heads)
    # bf16 activations in HBM + bf16 MXU operands + approx reciprocal +
    # tanh-GELU => slightly loose tolerance vs the f32 erf reference.
    np.testing.assert_allclose(np.asarray(out), np.asarray(ref),
                               rtol=3e-2, atol=3e-2)
    print("KERNEL_OK")
</pallas_src>

<mosaic_0001>
module attributes {stable_mosaic.version = 11 : i64} {
  func.func @_block_kernel(%arg0: i32, %arg1: memref<1x16x512xbf16, #tpu.memory_space<vmem>>, %arg2: memref<16x7xf32, #tpu.memory_space<vmem>>, %arg3: memref<16x16xf32, #tpu.memory_space<vmem>>, %arg4: memref<1x512xf32, #tpu.memory_space<vmem>>, %arg5: memref<48x16xbf16, #tpu.memory_space<vmem>>, %arg6: memref<48x11xf32, #tpu.memory_space<vmem>>, %arg7: memref<16x16xbf16, #tpu.memory_space<vmem>>, %arg8: memref<64x16xbf16, #tpu.memory_space<vmem>>, %arg9: memref<64x11xf32, #tpu.memory_space<vmem>>, %arg10: memref<16x32xbf16, #tpu.memory_space<vmem>>, %arg11: memref<1x16x512xbf16, #tpu.memory_space<vmem>>, %arg12: memref<16x512xf32, #tpu.memory_space<vmem>>) attributes {dimension_semantics = [#tpu.dimension_semantics<parallel>], iteration_bounds = array<i64: 2>, scalar_prefetch = 0 : i64, scratch_operands = 1 : i64, tpu.core_type = #tpu.core_type<tc>, window_params = [{transform_indices = @transform_0, window_bounds = array<i64: 1, 16, 512>}, {pipeline_mode = #tpu.pipeline_mode<synchronous>, transform_indices = @transform_1, window_bounds = array<i64: 16, 7>}, {pipeline_mode = #tpu.pipeline_mode<synchronous>, transform_indices = @transform_2, window_bounds = array<i64: 16, 16>}, {pipeline_mode = #tpu.pipeline_mode<synchronous>, transform_indices = @transform_3, window_bounds = array<i64: 1, 512>}, {pipeline_mode = #tpu.pipeline_mode<synchronous>, transform_indices = @transform_4, window_bounds = array<i64: 48, 16>}, {pipeline_mode = #tpu.pipeline_mode<synchronous>, transform_indices = @transform_5, window_bounds = array<i64: 48, 11>}, {pipeline_mode = #tpu.pipeline_mode<synchronous>, transform_indices = @transform_6, window_bounds = array<i64: 16, 16>}, {pipeline_mode = #tpu.pipeline_mode<synchronous>, transform_indices = @transform_7, window_bounds = array<i64: 64, 16>}, {pipeline_mode = #tpu.pipeline_mode<synchronous>, transform_indices = @transform_8, window_bounds = array<i64: 64, 11>}, {pipeline_mode = #tpu.pipeline_mode<synchronous>, transform_indices = @transform_9, window_bounds = array<i64: 16, 32>}, {transform_indices = @transform_10, window_bounds = array<i64: 1, 16, 512>}]} {
    %c0 = arith.constant 0 : index
    %c0_0 = arith.constant 0 : index
    %c0_1 = arith.constant 0 : index
    %0 = vector.load %arg1[%c0, %c0_0, %c0_1] : memref<1x16x512xbf16, #tpu.memory_space<vmem>>, vector<1x16x512xbf16>
    %1 = vector.shape_cast %0 : vector<1x16x512xbf16> to vector<16x512xbf16>
    %2 = arith.extf %1 : vector<16x512xbf16> to vector<16x512xf32>
    %c0_2 = arith.constant 0 : index
    %c0_3 = arith.constant 0 : index
    %3 = vector.load %arg4[%c0_2, %c0_3] : memref<1x512xf32, #tpu.memory_space<vmem>>, vector<1x512xf32>
    %c0_4 = arith.constant 0 : index
    %c0_5 = arith.constant 0 : index
    %4 = vector.load %arg2[%c0_4, %c0_5] : memref<16x7xf32, #tpu.memory_space<vmem>>, vector<16x7xf32>
    %5 = vector.extract_strided_slice %4 {offsets = [0, 0], sizes = [16, 1], strides = [1, 1]} : vector<16x7xf32> to vector<16x1xf32>
    %6 = vector.extract_strided_slice %4 {offsets = [0, 1], sizes = [16, 1], strides = [1, 1]} : vector<16x7xf32> to vector<16x1xf32>
    %7 = vector.extract_strided_slice %4 {offsets = [0, 2], sizes = [16, 1], strides = [1, 1]} : vector<16x7xf32> to vector<16x1xf32>
    %8 = vector.extract_strided_slice %4 {offsets = [0, 3], sizes = [16, 1], strides = [1, 1]} : vector<16x7xf32> to vector<16x1xf32>
    %9 = vector.extract_strided_slice %4 {offsets = [0, 4], sizes = [16, 1], strides = [1, 1]} : vector<16x7xf32> to vector<16x1xf32>
    %10 = vector.extract_strided_slice %4 {offsets = [0, 5], sizes = [16, 1], strides = [1, 1]} : vector<16x7xf32> to vector<16x1xf32>
    %11 = vector.extract_strided_slice %4 {offsets = [0, 6], sizes = [16, 1], strides = [1, 1]} : vector<16x7xf32> to vector<16x1xf32>
    %c0_6 = arith.constant 0 : index
    %c0_7 = arith.constant 0 : index
    %12 = vector.load %arg6[%c0_6, %c0_7] : memref<48x11xf32, #tpu.memory_space<vmem>>, vector<48x11xf32>
    %c0_8 = arith.constant 0 : index
    %c0_9 = arith.constant 0 : index
    %13 = vector.load %arg9[%c0_8, %c0_9] : memref<64x11xf32, #tpu.memory_space<vmem>>, vector<64x11xf32>
    %cst = arith.constant dense<0.000000e+00> : vector<512xf32>
    %14 = vector.multi_reduction <add>, %2, %cst [0] : vector<16x512xf32> to vector<512xf32>
    %15 = vector.shape_cast %14 : vector<512xf32> to vector<1x512xf32>
    %cst_10 = arith.constant 1.600000e+01 : f32
    %16 = vector.broadcast %cst_10 : f32 to vector<1x512xf32>
    %17 = arith.divf %15, %16 : vector<1x512xf32>
    %18 = vector.broadcast %17 : vector<1x512xf32> to vector<16x512xf32>
    %19 = arith.subf %2, %18 : vector<16x512xf32>
    %20 = arith.mulf %19, %19 : vector<16x512xf32>
    %cst_11 = arith.constant dense<0.000000e+00> : vector<512xf32>
    %21 = vector.multi_reduction <add>, %20, %cst_11 [0] : vector<16x512xf32> to vector<512xf32>
    %22 = vector.shape_cast %21 : vector<512xf32> to vector<1x512xf32>
    %cst_12 = arith.constant 1.600000e+01 : f32
    %23 = vector.broadcast %cst_12 : f32 to vector<1x512xf32>
    %24 = arith.divf %22, %23 : vector<1x512xf32>
    %cst_13 = arith.constant 9.99999974E-6 : f32
    %25 = vector.broadcast %cst_13 : f32 to vector<1x512xf32>
    %26 = arith.addf %24, %25 : vector<1x512xf32>
    %27 = math.rsqrt %26 : vector<1x512xf32>
    %28 = vector.broadcast %27 : vector<1x512xf32> to vector<16x512xf32>
    %29 = arith.mulf %19, %28 : vector<16x512xf32>
    %30 = vector.broadcast %5 : vector<16x1xf32> to vector<16x512xf32>
    %31 = arith.mulf %29, %30 : vector<16x512xf32>
    %32 = vector.broadcast %6 : vector<16x1xf32> to vector<16x512xf32>
    %33 = arith.addf %31, %32 : vector<16x512xf32>
    %c0_14 = arith.constant 0 : index
    %c0_15 = arith.constant 0 : index
    %34 = vector.load %arg5[%c0_14, %c0_15] : memref<48x16xbf16, #tpu.memory_space<vmem>>, vector<48x16xbf16>
    %35 = arith.truncf %33 : vector<16x512xf32> to vector<16x512xbf16>
    %cst_16 = arith.constant dense<0.000000e+00> : vector<48x512xf32>
    %36 = tpu.matmul %34, %35, %cst_16 {dimension_numbers = #tpu.dot_dimension_numbers<[1], [0], [0], [1], [0, 0, 1, 1], [], []>} : vector<48x16xbf16>, vector<16x512xbf16>, vector<48x512xf32> -> vector<48x512xf32>
    %37 = vector.extract_strided_slice %12 {offsets = [0, 0], sizes = [48, 1], strides = [1, 1]} : vector<48x11xf32> to vector<48x1xf32>
    %38 = vector.broadcast %37 : vector<48x1xf32> to vector<48x512xf32>
    %39 = arith.addf %36, %38 : vector<48x512xf32>
    %40 = vector.broadcast %3 : vector<1x512xf32> to vector<48x512xf32>
    %41 = arith.mulf %39, %40 : vector<48x512xf32>
    %42 = vector.extract_strided_slice %12 {offsets = [0, 1], sizes = [48, 9], strides = [1, 1]} : vector<48x11xf32> to vector<48x9xf32>
    %43 = vector.extract_strided_slice %12 {offsets = [0, 10], sizes = [48, 1], strides = [1, 1]} : vector<48x11xf32> to vector<48x1xf32>
    %c11_i32 = arith.constant 11 : i32
    %44 = tpu.dynamic_rotate %41 by %c11_i32 dim 1 : vector<48x512xf32>, i32 -> vector<48x512xf32>
    %45 = vector.extract_strided_slice %42 {offsets = [0, 0], sizes = [48, 1], strides = [1, 1]} : vector<48x9xf32> to vector<48x1xf32>
    %46 = vector.broadcast %45 : vector<48x1xf32> to vector<48x512xf32>
    %47 = arith.mulf %46, %44 : vector<48x512xf32>
    %c10_i32 = arith.constant 10 : i32
    %48 = tpu.dynamic_rotate %41 by %c10_i32 dim 1 : vector<48x512xf32>, i32 -> vector<48x512xf32>
    %49 = vector.extract_strided_slice %42 {offsets = [0, 1], sizes = [48, 1], strides = [1, 1]} : vector<48x9xf32> to vector<48x1xf32>
    %50 = vector.broadcast %49 : vector<48x1xf32> to vector<48x512xf32>
    %51 = arith.mulf %50, %48 : vector<48x512xf32>
    %52 = arith.addf %47, %51 : vector<48x512xf32>
    %c9_i32 = arith.constant 9 : i32
    %53 = tpu.dynamic_rotate %41 by %c9_i32 dim 1 : vector<48x512xf32>, i32 -> vector<48x512xf32>
    %54 = vector.extract_strided_slice %42 {offsets = [0, 2], sizes = [48, 1], strides = [1, 1]} : vector<48x9xf32> to vector<48x1xf32>
    %55 = vector.broadcast %54 : vector<48x1xf32> to vector<48x512xf32>
    %56 = arith.mulf %55, %53 : vector<48x512xf32>
    %57 = arith.addf %52, %56 : vector<48x512xf32>
    %c1_i32 = arith.constant 1 : i32
    %58 = tpu.dynamic_rotate %41 by %c1_i32 dim 1 : vector<48x512xf32>, i32 -> vector<48x512xf32>
    %59 = vector.extract_strided_slice %42 {offsets = [0, 3], sizes = [48, 1], strides = [1, 1]} : vector<48x9xf32> to vector<48x1xf32>
    %60 = vector.broadcast %59 : vector<48x1xf32> to vector<48x512xf32>
    %61 = arith.mulf %60, %58 : vector<48x512xf32>
    %62 = arith.addf %57, %61 : vector<48x512xf32>
    %63 = vector.extract_strided_slice %42 {offsets = [0, 4], sizes = [48, 1], strides = [1, 1]} : vector<48x9xf32> to vector<48x1xf32>
    %64 = vector.broadcast %63 : vector<48x1xf32> to vector<48x512xf32>
    %65 = arith.mulf %64, %41 : vector<48x512xf32>
    %66 = arith.addf %62, %65 : vector<48x512xf32>
    %c511_i32 = arith.constant 511 : i32
    %67 = tpu.dynamic_rotate %41 by %c511_i32 dim 1 : vector<48x512xf32>, i32 -> vector<48x512xf32>
    %68 = vector.extract_strided_slice %42 {offsets = [0, 5], sizes = [48, 1], strides = [1, 1]} : vector<48x9xf32> to vector<48x1xf32>
    %69 = vector.broadcast %68 : vector<48x1xf32> to vector<48x512xf32>
    %70 = arith.mulf %69, %67 : vector<48x512xf32>
    %71 = arith.addf %66, %70 : vector<48x512xf32>
    %c503_i32 = arith.constant 503 : i32
    %72 = tpu.dynamic_rotate %41 by %c503_i32 dim 1 : vector<48x512xf32>, i32 -> vector<48x512xf32>
    %73 = vector.extract_strided_slice %42 {offsets = [0, 6], sizes = [48, 1], strides = [1, 1]} : vector<48x9xf32> to vector<48x1xf32>
    %74 = vector.broadcast %73 : vector<48x1xf32> to vector<48x512xf32>
    %75 = arith.mulf %74, %72 : vector<48x512xf32>
    %76 = arith.addf %71, %75 : vector<48x512xf32>
    %c502_i32 = arith.constant 502 : i32
    %77 = tpu.dynamic_rotate %41 by %c502_i32 dim 1 : vector<48x512xf32>, i32 -> vector<48x512xf32>
    %78 = vector.extract_strided_slice %42 {offsets = [0, 7], sizes = [48, 1], strides = [1, 1]} : vector<48x9xf32> to vector<48x1xf32>
    %79 = vector.broadcast %78 : vector<48x1xf32> to vector<48x512xf32>
    %80 = arith.mulf %79, %77 : vector<48x512xf32>
    %81 = arith.addf %76, %80 : vector<48x512xf32>
    %c501_i32 = arith.constant 501 : i32
    %82 = tpu.dynamic_rotate %41 by %c501_i32 dim 1 : vector<48x512xf32>, i32 -> vector<48x512xf32>
    %83 = vector.extract_strided_slice %42 {offsets = [0, 8], sizes = [48, 1], strides = [1, 1]} : vector<48x9xf32> to vector<48x1xf32>
    %84 = vector.broadcast %83 : vector<48x1xf32> to vector<48x512xf32>
    %85 = arith.mulf %84, %82 : vector<48x512xf32>
    %86 = arith.addf %81, %85 : vector<48x512xf32>
    %87 = vector.broadcast %43 : vector<48x1xf32> to vector<48x512xf32>
    %88 = arith.addf %86, %87 : vector<48x512xf32>
    %89 = vector.extract_strided_slice %88 {offsets = [0, 0], sizes = [16, 512], strides = [1, 1]} : vector<48x512xf32> to vector<16x512xf32>
    %90 = vector.broadcast %3 : vector<1x512xf32> to vector<16x512xf32>
    %91 = arith.mulf %89, %90 : vector<16x512xf32>
    %92 = vector.extract_strided_slice %88 {offsets = [16, 0], sizes = [16, 512], strides = [1, 1]} : vector<48x512xf32> to vector<16x512xf32>
    %93 = vector.broadcast %3 : vector<1x512xf32> to vector<16x512xf32>
    %94 = arith.mulf %92, %93 : vector<16x512xf32>
    %95 = vector.extract_strided_slice %88 {offsets = [32, 0], sizes = [16, 512], strides = [1, 1]} : vector<48x512xf32> to vector<16x512xf32>
    %96 = vector.extract_strided_slice %91 {offsets = [0, 0], sizes = [16, 128], strides = [1, 1]} : vector<16x512xf32> to vector<16x128xf32>
    %97 = vector.extract_strided_slice %94 {offsets = [0, 0], sizes = [16, 128], strides = [1, 1]} : vector<16x512xf32> to vector<16x128xf32>
    %98 = vector.extract_strided_slice %95 {offsets = [0, 0], sizes = [16, 128], strides = [1, 1]} : vector<16x512xf32> to vector<16x128xf32>
    %99 = arith.mulf %96, %96 : vector<16x128xf32>
    %cst_17 = arith.constant dense<0.000000e+00> : vector<16xf32>
    %100 = vector.multi_reduction <add>, %99, %cst_17 [1] : vector<16x128xf32> to vector<16xf32>
    %101 = vector.shape_cast %100 : vector<16xf32> to vector<16x1xf32>
    %cst_18 = arith.constant 1.000000e-24 : f32
    %102 = vector.broadcast %cst_18 : f32 to vector<16x1xf32>
    %103 = arith.maximumf %101, %102 : vector<16x1xf32>
    %104 = math.rsqrt %103 : vector<16x1xf32>
    %105 = vector.broadcast %104 : vector<16x1xf32> to vector<16x128xf32>
    %106 = arith.mulf %96, %105 : vector<16x128xf32>
    %107 = arith.mulf %97, %97 : vector<16x128xf32>
    %cst_19 = arith.constant dense<0.000000e+00> : vector<16xf32>
    %108 = vector.multi_reduction <add>, %107, %cst_19 [1] : vector<16x128xf32> to vector<16xf32>
    %109 = vector.shape_cast %108 : vector<16xf32> to vector<16x1xf32>
    %cst_20 = arith.constant 1.000000e-24 : f32
    %110 = vector.broadcast %cst_20 : f32 to vector<16x1xf32>
    %111 = arith.maximumf %109, %110 : vector<16x1xf32>
    %112 = math.rsqrt %111 : vector<16x1xf32>
    %113 = vector.broadcast %112 : vector<16x1xf32> to vector<16x128xf32>
    %114 = arith.mulf %97, %113 : vector<16x128xf32>
    %115 = arith.truncf %106 : vector<16x128xf32> to vector<16x128xbf16>
    %116 = arith.truncf %114 : vector<16x128xf32> to vector<16x128xbf16>
    %cst_21 = arith.constant dense<0.000000e+00> : vector<16x16xf32>
    %117 = tpu.matmul %115, %116, %cst_21 {dimension_numbers = #tpu.dot_dimension_numbers<[1], [1], [0], [0], [0, 0, 1, 0], [], []>} : vector<16x128xbf16>, vector<16x128xbf16>, vector<16x16xf32> -> vector<16x16xf32>
    %118 = vector.broadcast %11 : vector<16x1xf32> to vector<16x16xf32>
    %119 = arith.mulf %117, %118 : vector<16x16xf32>
    %c0_22 = arith.constant 0 : index
    %c0_23 = arith.constant 0 : index
    %120 = vector.load %arg3[%c0_22, %c0_23] : memref<16x16xf32, #tpu.memory_space<vmem>>, vector<16x16xf32>
    %121 = arith.addf %119, %120 : vector<16x16xf32>
    %122 = math.exp %121 : vector<16x16xf32>
    %cst_24 = arith.constant dense<0.000000e+00> : vector<16xf32>
    %123 = vector.multi_reduction <add>, %122, %cst_24 [1] : vector<16x16xf32> to vector<16xf32>
    %124 = vector.shape_cast %123 : vector<16xf32> to vector<16x1xf32>
    %125 = tpu.reciprocal %124 {approx = true} : vector<16x1xf32> -> vector<16x1xf32>
    %126 = vector.broadcast %125 : vector<16x1xf32> to vector<16x16xf32>
    %127 = arith.mulf %122, %126 : vector<16x16xf32>
    %128 = arith.truncf %127 : vector<16x16xf32> to vector<16x16xbf16>
    %129 = arith.truncf %98 : vector<16x128xf32> to vector<16x128xbf16>
    %cst_25 = arith.constant dense<0.000000e+00> : vector<16x128xf32>
    %130 = tpu.matmul %128, %129, %cst_25 {dimension_numbers = #tpu.dot_dimension_numbers<[1], [0], [0], [1], [0, 0, 1, 1], [], []>} : vector<16x16xbf16>, vector<16x128xbf16>, vector<16x128xf32> -> vector<16x128xf32>
    %c0_26 = arith.constant 0 : index
    %c0_27 = arith.constant 0 : index
    %131 = vector.load %arg12[%c0_26, %c0_27] : memref<16x512xf32, #tpu.memory_space<vmem>>, vector<16x128xf32>
    tpu.vector_store %arg12[%c0_26, %c0_27], %130 {strides = array<i32>} : memref<16x512xf32, #tpu.memory_space<vmem>>, vector<16x128xf32>,
    %132 = vector.extract_strided_slice %91 {offsets = [0, 128], sizes = [16, 128], strides = [1, 1]} : vector<16x512xf32> to vector<16x128xf32>
    %133 = vector.extract_strided_slice %94 {offsets = [0, 128], sizes = [16, 128], strides = [1, 1]} : vector<16x512xf32> to vector<16x128xf32>
    %134 = vector.extract_strided_slice %95 {offsets = [0, 128], sizes = [16, 128], strides = [1, 1]} : vector<16x512xf32> to vector<16x128xf32>
    %135 = arith.mulf %132, %132 : vector<16x128xf32>
    %cst_28 = arith.constant dense<0.000000e+00> : vector<16xf32>
    %136 = vector.multi_reduction <add>, %135, %cst_28 [1] : vector<16x128xf32> to vector<16xf32>
    %137 = vector.shape_cast %136 : vector<16xf32> to vector<16x1xf32>
    %cst_29 = arith.constant 1.000000e-24 : f32
    %138 = vector.broadcast %cst_29 : f32 to vector<16x1xf32>
    %139 = arith.maximumf %137, %138 : vector<16x1xf32>
    %140 = math.rsqrt %139 : vector<16x1xf32>
    %141 = vector.broadcast %140 : vector<16x1xf32> to vector<16x128xf32>
    %142 = arith.mulf %132, %141 : vector<16x128xf32>
    %143 = arith.mulf %133, %133 : vector<16x128xf32>
    %cst_30 = arith.constant dense<0.000000e+00> : vector<16xf32>
    %144 = vector.multi_reduction <add>, %143, %cst_30 [1] : vector<16x128xf32> to vector<16xf32>
    %145 = vector.shape_cast %144 : vector<16xf32> to vector<16x1xf32>
    %cst_31 = arith.constant 1.000000e-24 : f32
    %146 = vector.broadcast %cst_31 : f32 to vector<16x1xf32>
    %147 = arith.maximumf %145, %146 : vector<16x1xf32>
    %148 = math.rsqrt %147 : vector<16x1xf32>
    %149 = vector.broadcast %148 : vector<16x1xf32> to vector<16x128xf32>
    %150 = arith.mulf %133, %149 : vector<16x128xf32>
    %151 = arith.truncf %142 : vector<16x128xf32> to vector<16x128xbf16>
    %152 = arith.truncf %150 : vector<16x128xf32> to vector<16x128xbf16>
    %cst_32 = arith.constant dense<0.000000e+00> : vector<16x16xf32>
    %153 = tpu.matmul %151, %152, %cst_32 {dimension_numbers = #tpu.dot_dimension_numbers<[1], [1], [0], [0], [0, 0, 1, 0], [], []>} : vector<16x128xbf16>, vector<16x128xbf16>, vector<16x16xf32> -> vector<16x16xf32>
    %154 = vector.broadcast %11 : vector<16x1xf32> to vector<16x16xf32>
    %155 = arith.mulf %153, %154 : vector<16x16xf32>
    %c0_33 = arith.constant 0 : index
    %c0_34 = arith.constant 0 : index
    %156 = vector.load %arg3[%c0_33, %c0_34] : memref<16x16xf32, #tpu.memory_space<vmem>>, vector<16x16xf32>
    %157 = arith.addf %155, %156 : vector<16x16xf32>
    %158 = math.exp %157 : vector<16x16xf32>
    %cst_35 = arith.constant dense<0.000000e+00> : vector<16xf32>
    %159 = vector.multi_reduction <add>, %158, %cst_35 [1] : vector<16x16xf32> to vector<16xf32>
    %160 = vector.shape_cast %159 : vector<16xf32> to vector<16x1xf32>
    %161 = tpu.reciprocal %160 {approx = true} : vector<16x1xf32> -> vector<16x1xf32>
    %162 = vector.broadcast %161 : vector<16x1xf32> to vector<16x16xf32>
    %163 = arith.mulf %158, %162 : vector<16x16xf32>
    %164 = arith.truncf %163 : vector<16x16xf32> to vector<16x16xbf16>
    %165 = arith.truncf %134 : vector<16x128xf32> to vector<16x128xbf16>
    %cst_36 = arith.constant dense<0.000000e+00> : vector<16x128xf32>
    %166 = tpu.matmul %164, %165, %cst_36 {dimension_numbers = #tpu.dot_dimension_numbers<[1], [0], [0], [1], [0, 0, 1, 1], [], []>} : vector<16x16xbf16>, vector<16x128xbf16>, vector<16x128xf32> -> vector<16x128xf32>
    %c0_37 = arith.constant 0 : index
    %c128 = arith.constant 128 : index
    %167 = vector.load %arg12[%c0_37, %c128] : memref<16x512xf32, #tpu.memory_space<vmem>>, vector<16x128xf32>
    tpu.vector_store %arg12[%c0_37, %c128], %166 {strides = array<i32>} : memref<16x512xf32, #tpu.memory_space<vmem>>, vector<16x128xf32>,
    %168 = vector.extract_strided_slice %91 {offsets = [0, 256], sizes = [16, 128], strides = [1, 1]} : vector<16x512xf32> to vector<16x128xf32>
    %169 = vector.extract_strided_slice %94 {offsets = [0, 256], sizes = [16, 128], strides = [1, 1]} : vector<16x512xf32> to vector<16x128xf32>
    %170 = vector.extract_strided_slice %95 {offsets = [0, 256], sizes = [16, 128], strides = [1, 1]} : vector<16x512xf32> to vector<16x128xf32>
    %171 = arith.mulf %168, %168 : vector<16x128xf32>
    %cst_38 = arith.constant dense<0.000000e+00> : vector<16xf32>
    %172 = vector.multi_reduction <add>, %171, %cst_38 [1] : vector<16x128xf32> to vector<16xf32>
    %173 = vector.shape_cast %172 : vector<16xf32> to vector<16x1xf32>
    %cst_39 = arith.constant 1.000000e-24 : f32
    %174 = vector.broadcast %cst_39 : f32 to vector<16x1xf32>
    %175 = arith.maximumf %173, %174 : vector<16x1xf32>
    %176 = math.rsqrt %175 : vector<16x1xf32>
    %177 = vector.broadcast %176 : vector<16x1xf32> to vector<16x128xf32>
    %178 = arith.mulf %168, %177 : vector<16x128xf32>
    %179 = arith.mulf %169, %169 : vector<16x128xf32>
    %cst_40 = arith.constant dense<0.000000e+00> : vector<16xf32>
    %180 = vector.multi_reduction <add>, %179, %cst_40 [1] : vector<16x128xf32> to vector<16xf32>
    %181 = vector.shape_cast %180 : vector<16xf32> to vector<16x1xf32>
    %cst_41 = arith.constant 1.000000e-24 : f32
    %182 = vector.broadcast %cst_41 : f32 to vector<16x1xf32>
    %183 = arith.maximumf %181, %182 : vector<16x1xf32>
    %184 = math.rsqrt %183 : vector<16x1xf32>
    %185 = vector.broadcast %184 : vector<16x1xf32> to vector<16x128xf32>
    %186 = arith.mulf %169, %185 : vector<16x128xf32>
    %187 = arith.truncf %178 : vector<16x128xf32> to vector<16x128xbf16>
    %188 = arith.truncf %186 : vector<16x128xf32> to vector<16x128xbf16>
    %cst_42 = arith.constant dense<0.000000e+00> : vector<16x16xf32>
    %189 = tpu.matmul %187, %188, %cst_42 {dimension_numbers = #tpu.dot_dimension_numbers<[1], [1], [0], [0], [0, 0, 1, 0], [], []>} : vector<16x128xbf16>, vector<16x128xbf16>, vector<16x16xf32> -> vector<16x16xf32>
    %190 = vector.broadcast %11 : vector<16x1xf32> to vector<16x16xf32>
    %191 = arith.mulf %189, %190 : vector<16x16xf32>
    %c0_43 = arith.constant 0 : index
    %c0_44 = arith.constant 0 : index
    %192 = vector.load %arg3[%c0_43, %c0_44] : memref<16x16xf32, #tpu.memory_space<vmem>>, vector<16x16xf32>
    %193 = arith.addf %191, %192 : vector<16x16xf32>
    %194 = math.exp %193 : vector<16x16xf32>
    %cst_45 = arith.constant dense<0.000000e+00> : vector<16xf32>
    %195 = vector.multi_reduction <add>, %194, %cst_45 [1] : vector<16x16xf32> to vector<16xf32>
    %196 = vector.shape_cast %195 : vector<16xf32> to vector<16x1xf32>
    %197 = tpu.reciprocal %196 {approx = true} : vector<16x1xf32> -> vector<16x1xf32>
    %198 = vector.broadcast %197 : vector<16x1xf32> to vector<16x16xf32>
    %199 = arith.mulf %194, %198 : vector<16x16xf32>
    %200 = arith.truncf %199 : vector<16x16xf32> to vector<16x16xbf16>
    %201 = arith.truncf %170 : vector<16x128xf32> to vector<16x128xbf16>
    %cst_46 = arith.constant dense<0.000000e+00> : vector<16x128xf32>
    %202 = tpu.matmul %200, %201, %cst_46 {dimension_numbers = #tpu.dot_dimension_numbers<[1], [0], [0], [1], [0, 0, 1, 1], [], []>} : vector<16x16xbf16>, vector<16x128xbf16>, vector<16x128xf32> -> vector<16x128xf32>
    %c0_47 = arith.constant 0 : index
    %c256 = arith.constant 256 : index
    %203 = vector.load %arg12[%c0_47, %c256] : memref<16x512xf32, #tpu.memory_space<vmem>>, vector<16x128xf32>
    tpu.vector_store %arg12[%c0_47, %c256], %202 {strides = array<i32>} : memref<16x512xf32, #tpu.memory_space<vmem>>, vector<16x128xf32>,
    %204 = vector.extract_strided_slice %91 {offsets = [0, 384], sizes = [16, 128], strides = [1, 1]} : vector<16x512xf32> to vector<16x128xf32>
    %205 = vector.extract_strided_slice %94 {offsets = [0, 384], sizes = [16, 128], strides = [1, 1]} : vector<16x512xf32> to vector<16x128xf32>
    %206 = vector.extract_strided_slice %95 {offsets = [0, 384], sizes = [16, 128], strides = [1, 1]} : vector<16x512xf32> to vector<16x128xf32>
    %207 = arith.mulf %204, %204 : vector<16x128xf32>
    %cst_48 = arith.constant dense<0.000000e+00> : vector<16xf32>
    %208 = vector.multi_reduction <add>, %207, %cst_48 [1] : vector<16x128xf32> to vector<16xf32>
    %209 = vector.shape_cast %208 : vector<16xf32> to vector<16x1xf32>
    %cst_49 = arith.constant 1.000000e-24 : f32
    %210 = vector.broadcast %cst_49 : f32 to vector<16x1xf32>
    %211 = arith.maximumf %209, %210 : vector<16x1xf32>
    %212 = math.rsqrt %211 : vector<16x1xf32>
    %213 = vector.broadcast %212 : vector<16x1xf32> to vector<16x128xf32>
    %214 = arith.mulf %204, %213 : vector<16x128xf32>
    %215 = arith.mulf %205, %205 : vector<16x128xf32>
    %cst_50 = arith.constant dense<0.000000e+00> : vector<16xf32>
    %216 = vector.multi_reduction <add>, %215, %cst_50 [1] : vector<16x128xf32> to vector<16xf32>
    %217 = vector.shape_cast %216 : vector<16xf32> to vector<16x1xf32>
    %cst_51 = arith.constant 1.000000e-24 : f32
    %218 = vector.broadcast %cst_51 : f32 to vector<16x1xf32>
    %219 = arith.maximumf %217, %218 : vector<16x1xf32>
    %220 = math.rsqrt %219 : vector<16x1xf32>
    %221 = vector.broadcast %220 : vector<16x1xf32> to vector<16x128xf32>
    %222 = arith.mulf %205, %221 : vector<16x128xf32>
    %223 = arith.truncf %214 : vector<16x128xf32> to vector<16x128xbf16>
    %224 = arith.truncf %222 : vector<16x128xf32> to vector<16x128xbf16>
    %cst_52 = arith.constant dense<0.000000e+00> : vector<16x16xf32>
    %225 = tpu.matmul %223, %224, %cst_52 {dimension_numbers = #tpu.dot_dimension_numbers<[1], [1], [0], [0], [0, 0, 1, 0], [], []>} : vector<16x128xbf16>, vector<16x128xbf16>, vector<16x16xf32> -> vector<16x16xf32>
    %226 = vector.broadcast %11 : vector<16x1xf32> to vector<16x16xf32>
    %227 = arith.mulf %225, %226 : vector<16x16xf32>
    %c0_53 = arith.constant 0 : index
    %c0_54 = arith.constant 0 : index
    %228 = vector.load %arg3[%c0_53, %c0_54] : memref<16x16xf32, #tpu.memory_space<vmem>>, vector<16x16xf32>
    %229 = arith.addf %227, %228 : vector<16x16xf32>
    %230 = math.exp %229 : vector<16x16xf32>
    %cst_55 = arith.constant dense<0.000000e+00> : vector<16xf32>
    %231 = vector.multi_reduction <add>, %230, %cst_55 [1] : vector<16x16xf32> to vector<16xf32>
    %232 = vector.shape_cast %231 : vector<16xf32> to vector<16x1xf32>
    %233 = tpu.reciprocal %232 {approx = true} : vector<16x1xf32> -> vector<16x1xf32>
    %234 = vector.broadcast %233 : vector<16x1xf32> to vector<16x16xf32>
    %235 = arith.mulf %230, %234 : vector<16x16xf32>
    %236 = arith.truncf %235 : vector<16x16xf32> to vector<16x16xbf16>
    %237 = arith.truncf %206 : vector<16x128xf32> to vector<16x128xbf16>
    %cst_56 = arith.constant dense<0.000000e+00> : vector<16x128xf32>
    %238 = tpu.matmul %236, %237, %cst_56 {dimension_numbers = #tpu.dot_dimension_numbers<[1], [0], [0], [1], [0, 0, 1, 1], [], []>} : vector<16x16xbf16>, vector<16x128xbf16>, vector<16x128xf32> -> vector<16x128xf32>
    %c0_57 = arith.constant 0 : index
    %c384 = arith.constant 384 : index
    %239 = vector.load %arg12[%c0_57, %c384] : memref<16x512xf32, #tpu.memory_space<vmem>>, vector<16x128xf32>
    tpu.vector_store %arg12[%c0_57, %c384], %238 {strides = array<i32>} : memref<16x512xf32, #tpu.memory_space<vmem>>, vector<16x128xf32>,
    %c0_58 = arith.constant 0 : index
    %c0_59 = arith.constant 0 : index
    %240 = vector.load %arg7[%c0_58, %c0_59] : memref<16x16xbf16, #tpu.memory_space<vmem>>, vector<16x16xbf16>
    %c0_60 = arith.constant 0 : index
    %c0_61 = arith.constant 0 : index
    %241 = vector.load %arg12[%c0_60, %c0_61] : memref<16x512xf32, #tpu.memory_space<vmem>>, vector<16x512xf32>
    %242 = arith.truncf %241 : vector<16x512xf32> to vector<16x512xbf16>
    %cst_62 = arith.constant dense<0.000000e+00> : vector<16x512xf32>
    %243 = tpu.matmul %240, %242, %cst_62 {dimension_numbers = #tpu.dot_dimension_numbers<[1], [0], [0], [1], [0, 0, 1, 1], [], []>} : vector<16x16xbf16>, vector<16x512xbf16>, vector<16x512xf32> -> vector<16x512xf32>
    %244 = vector.broadcast %9 : vector<16x1xf32> to vector<16x512xf32>
    %245 = arith.addf %243, %244 : vector<16x512xf32>
    %246 = arith.addf %2, %245 : vector<16x512xf32>
    %cst_63 = arith.constant dense<0.000000e+00> : vector<512xf32>
    %247 = vector.multi_reduction <add>, %246, %cst_63 [0] : vector<16x512xf32> to vector<512xf32>
    %248 = vector.shape_cast %247 : vector<512xf32> to vector<1x512xf32>
    %cst_64 = arith.constant 1.600000e+01 : f32
    %249 = vector.broadcast %cst_64 : f32 to vector<1x512xf32>
    %250 = arith.divf %248, %249 : vector<1x512xf32>
    %251 = vector.broadcast %250 : vector<1x512xf32> to vector<16x512xf32>
    %252 = arith.subf %246, %251 : vector<16x512xf32>
    %253 = arith.mulf %252, %252 : vector<16x512xf32>
    %cst_65 = arith.constant dense<0.000000e+00> : vector<512xf32>
    %254 = vector.multi_reduction <add>, %253, %cst_65 [0] : vector<16x512xf32> to vector<512xf32>
    %255 = vector.shape_cast %254 : vector<512xf32> to vector<1x512xf32>
    %cst_66 = arith.constant 1.600000e+01 : f32
    %256 = vector.broadcast %cst_66 : f32 to vector<1x512xf32>
    %257 = arith.divf %255, %256 : vector<1x512xf32>
    %cst_67 = arith.constant 9.99999974E-6 : f32
    %258 = vector.broadcast %cst_67 : f32 to vector<1x512xf32>
    %259 = arith.addf %257, %258 : vector<1x512xf32>
    %260 = math.rsqrt %259 : vector<1x512xf32>
    %261 = vector.broadcast %260 : vector<1x512xf32> to vector<16x512xf32>
    %262 = arith.mulf %252, %261 : vector<16x512xf32>
    %263 = vector.broadcast %7 : vector<16x1xf32> to vector<16x512xf32>
    %264 = arith.mulf %262, %263 : vector<16x512xf32>
    %265 = vector.broadcast %8 : vector<16x1xf32> to vector<16x512xf32>
    %266 = arith.addf %264, %265 : vector<16x512xf32>
    %c0_68 = arith.constant 0 : index
    %c0_69 = arith.constant 0 : index
    %267 = vector.load %arg8[%c0_68, %c0_69] : memref<64x16xbf16, #tpu.memory_space<vmem>>, vector<64x16xbf16>
    %268 = arith.truncf %266 : vector<16x512xf32> to vector<16x512xbf16>
    %cst_70 = arith.constant dense<0.000000e+00> : vector<64x512xf32>
    %269 = tpu.matmul %267, %268, %cst_70 {dimension_numbers = #tpu.dot_dimension_numbers<[1], [0], [0], [1], [0, 0, 1, 1], [], []>} : vector<64x16xbf16>, vector<16x512xbf16>, vector<64x512xf32> -> vector<64x512xf32>
    %270 = vector.extract_strided_slice %13 {offsets = [0, 0], sizes = [64, 1], strides = [1, 1]} : vector<64x11xf32> to vector<64x1xf32>
    %271 = vector.broadcast %270 : vector<64x1xf32> to vector<64x512xf32>
    %272 = arith.addf %269, %271 : vector<64x512xf32>
    %273 = vector.broadcast %3 : vector<1x512xf32> to vector<64x512xf32>
    %274 = arith.mulf %272, %273 : vector<64x512xf32>
    %275 = vector.extract_strided_slice %13 {offsets = [0, 1], sizes = [64, 9], strides = [1, 1]} : vector<64x11xf32> to vector<64x9xf32>
    %276 = vector.extract_strided_slice %13 {offsets = [0, 10], sizes = [64, 1], strides = [1, 1]} : vector<64x11xf32> to vector<64x1xf32>
    %c11_i32_71 = arith.constant 11 : i32
    %277 = tpu.dynamic_rotate %274 by %c11_i32_71 dim 1 : vector<64x512xf32>, i32 -> vector<64x512xf32>
    %278 = vector.extract_strided_slice %275 {offsets = [0, 0], sizes = [64, 1], strides = [1, 1]} : vector<64x9xf32> to vector<64x1xf32>
    %279 = vector.broadcast %278 : vector<64x1xf32> to vector<64x512xf32>
    %280 = arith.mulf %279, %277 : vector<64x512xf32>
    %c10_i32_72 = arith.constant 10 : i32
    %281 = tpu.dynamic_rotate %274 by %c10_i32_72 dim 1 : vector<64x512xf32>, i32 -> vector<64x512xf32>
    %282 = vector.extract_strided_slice %275 {offsets = [0, 1], sizes = [64, 1], strides = [1, 1]} : vector<64x9xf32> to vector<64x1xf32>
    %283 = vector.broadcast %282 : vector<64x1xf32> to vector<64x512xf32>
    %284 = arith.mulf %283, %281 : vector<64x512xf32>
    %285 = arith.addf %280, %284 : vector<64x512xf32>
    %c9_i32_73 = arith.constant 9 : i32
    %286 = tpu.dynamic_rotate %274 by %c9_i32_73 dim 1 : vector<64x512xf32>, i32 -> vector<64x512xf32>
    %287 = vector.extract_strided_slice %275 {offsets = [0, 2], sizes = [64, 1], strides = [1, 1]} : vector<64x9xf32> to vector<64x1xf32>
    %288 = vector.broadcast %287 : vector<64x1xf32> to vector<64x512xf32>
    %289 = arith.mulf %288, %286 : vector<64x512xf32>
    %290 = arith.addf %285, %289 : vector<64x512xf32>
    %c1_i32_74 = arith.constant 1 : i32
    %291 = tpu.dynamic_rotate %274 by %c1_i32_74 dim 1 : vector<64x512xf32>, i32 -> vector<64x512xf32>
    %292 = vector.extract_strided_slice %275 {offsets = [0, 3], sizes = [64, 1], strides = [1, 1]} : vector<64x9xf32> to vector<64x1xf32>
    %293 = vector.broadcast %292 : vector<64x1xf32> to vector<64x512xf32>
    %294 = arith.mulf %293, %291 : vector<64x512xf32>
    %295 = arith.addf %290, %294 : vector<64x512xf32>
    %296 = vector.extract_strided_slice %275 {offsets = [0, 4], sizes = [64, 1], strides = [1, 1]} : vector<64x9xf32> to vector<64x1xf32>
    %297 = vector.broadcast %296 : vector<64x1xf32> to vector<64x512xf32>
    %298 = arith.mulf %297, %274 : vector<64x512xf32>
    %299 = arith.addf %295, %298 : vector<64x512xf32>
    %c511_i32_75 = arith.constant 511 : i32
    %300 = tpu.dynamic_rotate %274 by %c511_i32_75 dim 1 : vector<64x512xf32>, i32 -> vector<64x512xf32>
    %301 = vector.extract_strided_slice %275 {offsets = [0, 5], sizes = [64, 1], strides = [1, 1]} : vector<64x9xf32> to vector<64x1xf32>
    %302 = vector.broadcast %301 : vector<64x1xf32> to vector<64x512xf32>
    %303 = arith.mulf %302, %300 : vector<64x512xf32>
    %304 = arith.addf %299, %303 : vector<64x512xf32>
    %c503_i32_76 = arith.constant 503 : i32
    %305 = tpu.dynamic_rotate %274 by %c503_i32_76 dim 1 : vector<64x512xf32>, i32 -> vector<64x512xf32>
    %306 = vector.extract_strided_slice %275 {offsets = [0, 6], sizes = [64, 1], strides = [1, 1]} : vector<64x9xf32> to vector<64x1xf32>
    %307 = vector.broadcast %306 : vector<64x1xf32> to vector<64x512xf32>
    %308 = arith.mulf %307, %305 : vector<64x512xf32>
    %309 = arith.addf %304, %308 : vector<64x512xf32>
    %c502_i32_77 = arith.constant 502 : i32
    %310 = tpu.dynamic_rotate %274 by %c502_i32_77 dim 1 : vector<64x512xf32>, i32 -> vector<64x512xf32>
    %311 = vector.extract_strided_slice %275 {offsets = [0, 7], sizes = [64, 1], strides = [1, 1]} : vector<64x9xf32> to vector<64x1xf32>
    %312 = vector.broadcast %311 : vector<64x1xf32> to vector<64x512xf32>
    %313 = arith.mulf %312, %310 : vector<64x512xf32>
    %314 = arith.addf %309, %313 : vector<64x512xf32>
    %c501_i32_78 = arith.constant 501 : i32
    %315 = tpu.dynamic_rotate %274 by %c501_i32_78 dim 1 : vector<64x512xf32>, i32 -> vector<64x512xf32>
    %316 = vector.extract_strided_slice %275 {offsets = [0, 8], sizes = [64, 1], strides = [1, 1]} : vector<64x9xf32> to vector<64x1xf32>
    %317 = vector.broadcast %316 : vector<64x1xf32> to vector<64x512xf32>
    %318 = arith.mulf %317, %315 : vector<64x512xf32>
    %319 = arith.addf %314, %318 : vector<64x512xf32>
    %320 = vector.broadcast %276 : vector<64x1xf32> to vector<64x512xf32>
    %321 = arith.addf %319, %320 : vector<64x512xf32>
    %322 = vector.extract_strided_slice %321 {offsets = [0, 0], sizes = [32, 512], strides = [1, 1]} : vector<64x512xf32> to vector<32x512xf32>
    %cst_79 = arith.constant 5.000000e-01 : f32
    %323 = vector.broadcast %cst_79 : f32 to vector<32x512xf32>
    %324 = arith.mulf %323, %322 : vector<32x512xf32>
    %cst_80 = arith.constant 4.471500e-02 : f32
    %325 = vector.broadcast %cst_80 : f32 to vector<32x512xf32>
    %326 = arith.mulf %325, %322 : vector<32x512xf32>
    %327 = arith.mulf %326, %322 : vector<32x512xf32>
    %328 = arith.mulf %327, %322 : vector<32x512xf32>
    %329 = arith.addf %322, %328 : vector<32x512xf32>
    %cst_81 = arith.constant 0.797884583 : f32
    %330 = vector.broadcast %cst_81 : f32 to vector<32x512xf32>
    %331 = arith.mulf %330, %329 : vector<32x512xf32>
    %332 = math.tanh %331 : vector<32x512xf32>
    %cst_82 = arith.constant 1.000000e+00 : f32
    %333 = vector.broadcast %cst_82 : f32 to vector<32x512xf32>
    %334 = arith.addf %333, %332 : vector<32x512xf32>
    %335 = arith.mulf %324, %334 : vector<32x512xf32>
    %336 = vector.extract_strided_slice %321 {offsets = [32, 0], sizes = [32, 512], strides = [1, 1]} : vector<64x512xf32> to vector<32x512xf32>
    %337 = arith.mulf %335, %336 : vector<32x512xf32>
    %c0_83 = arith.constant 0 : index
    %c0_84 = arith.constant 0 : index
    %338 = vector.load %arg10[%c0_83, %c0_84] : memref<16x32xbf16, #tpu.memory_space<vmem>>, vector<16x32xbf16>
    %339 = arith.truncf %337 : vector<32x512xf32> to vector<32x512xbf16>
    %cst_85 = arith.constant dense<0.000000e+00> : vector<16x512xf32>
    %340 = tpu.matmul %338, %339, %cst_85 {dimension_numbers = #tpu.dot_dimension_numbers<[1], [0], [0], [1], [0, 0, 1, 1], [], []>} : vector<16x32xbf16>, vector<32x512xbf16>, vector<16x512xf32> -> vector<16x512xf32>
    %341 = vector.broadcast %10 : vector<16x1xf32> to vector<16x512xf32>
    %342 = arith.addf %340, %341 : vector<16x512xf32>
    %343 = arith.addf %246, %342 : vector<16x512xf32>
    %344 = arith.truncf %343 : vector<16x512xf32> to vector<16x512xbf16>
    %c0_86 = arith.constant 0 : index
    %c0_87 = arith.constant 0 : index
    %c0_88 = arith.constant 0 : index
    %345 = vector.load %arg11[%c0_86, %c0_87, %c0_88] : memref<1x16x512xbf16, #tpu.memory_space<vmem>>, vector<1x16x512xbf16>
    %346 = vector.shape_cast %345 : vector<1x16x512xbf16> to vector<16x512xbf16>
    %347 = vector.shape_cast %344 : vector<16x512xbf16> to vector<1x16x512xbf16>
    tpu.vector_store %arg11[%c0_86, %c0_87, %c0_88], %347 {strides = array<i32>} : memref<1x16x512xbf16, #tpu.memory_space<vmem>>, vector<1x16x512xbf16>,
    return
  }
  func.func @transform_0(%arg0: i32) -> (i32, i32, i32) {
    %c0_i32 = arith.constant 0 : i32
    %c0_i32_0 = arith.constant 0 : i32
    %c0_i32_1 = arith.constant 0 : i32
    return %arg0, %c0_i32, %c0_i32_0 : i32, i32, i32
  }
  func.func @transform_1(%arg0: i32) -> (i32, i32) {
    %c0_i32 = arith.constant 0 : i32
    %c0_i32_0 = arith.constant 0 : i32
    %c0_i32_1 = arith.constant 0 : i32
    return %c0_i32, %c0_i32_0 : i32, i32
  }
  func.func @transform_2(%arg0: i32) -> (i32, i32) {
    %c0_i32 = arith.constant 0 : i32
    %c0_i32_0 = arith.constant 0 : i32
    %c0_i32_1 = arith.constant 0 : i32
    return %c0_i32, %c0_i32_0 : i32, i32
  }
  func.func @transform_3(%arg0: i32) -> (i32, i32) {
    %c0_i32 = arith.constant 0 : i32
    %c0_i32_0 = arith.constant 0 : i32
    %c0_i32_1 = arith.constant 0 : i32
    return %c0_i32, %c0_i32_0 : i32, i32
  }
  func.func @transform_4(%arg0: i32) -> (i32, i32) {
    %c0_i32 = arith.constant 0 : i32
    %c0_i32_0 = arith.constant 0 : i32
    %c0_i32_1 = arith.constant 0 : i32
    return %c0_i32, %c0_i32_0 : i32, i32
  }
  func.func @transform_5(%arg0: i32) -> (i32, i32) {
    %c0_i32 = arith.constant 0 : i32
    %c0_i32_0 = arith.constant 0 : i32
    %c0_i32_1 = arith.constant 0 : i32
    return %c0_i32, %c0_i32_0 : i32, i32
  }
  func.func @transform_6(%arg0: i32) -> (i32, i32) {
    %c0_i32 = arith.constant 0 : i32
    %c0_i32_0 = arith.constant 0 : i32
    %c0_i32_1 = arith.constant 0 : i32
    return %c0_i32, %c0_i32_0 : i32, i32
  }
  func.func @transform_7(%arg0: i32) -> (i32, i32) {
    %c0_i32 = arith.constant 0 : i32
    %c0_i32_0 = arith.constant 0 : i32
    %c0_i32_1 = arith.constant 0 : i32
    return %c0_i32, %c0_i32_0 : i32, i32
  }
  func.func @transform_8(%arg0: i32) -> (i32, i32) {
    %c0_i32 = arith.constant 0 : i32
    %c0_i32_0 = arith.constant 0 : i32
    %c0_i32_1 = arith.constant 0 : i32
    return %c0_i32, %c0_i32_0 : i32, i32
  }
  func.func @transform_9(%arg0: i32) -> (i32, i32) {
    %c0_i32 = arith.constant 0 : i32
    %c0_i32_0 = arith.constant 0 : i32
    %c0_i32_1 = arith.constant 0 : i32
    return %c0_i32, %c0_i32_0 : i32, i32
  }
  func.func @transform_10(%arg0: i32) -> (i32, i32, i32) {
    %c0_i32 = arith.constant 0 : i32
    %c0_i32_0 = arith.constant 0 : i32
    %c0_i32_1 = arith.constant 0 : i32
    return %arg0, %c0_i32, %c0_i32_0 : i32, i32, i32
  }
}

</mosaic_0001>

<llo_original>
// kernel: tpu_custom_call.1
$region0: #{tpu_custom_call.1}
  #allocation0 [shape = 'u32[]', space=smem, size = 0x4, offset = 0x4, fixed_abs, tag = 'smem constant byte address 0x4 - core index']
  #allocation1 [shape = 'u32[144,128]{1,0:T(1,128)}', space=vmem, size = 0x12000, scoped, tag = 'internal scratch']
  #allocation2 [shape = 'f32[16,512]{1,0:T(8,128)}', space=vmem, size = 0x8000, scoped, tag = 'scratch operand']
  %s0 = inlined_call_operand.vmem [shape: bf16[2,16,512], index: 0, kind: input, shape index: {}]
  %s1 = inlined_call_operand.vmem [shape: f32[16,7], index: 1, kind: input, shape index: {}]
  %s2 = inlined_call_operand.vmem [shape: f32[16,16], index: 2, kind: input, shape index: {}]
  %s3 = inlined_call_operand.vmem [shape: f32[1,512], index: 3, kind: input, shape index: {}]
  %s4 = inlined_call_operand.vmem [shape: bf16[48,16], index: 4, kind: input, shape index: {}]
  %s5 = inlined_call_operand.vmem [shape: f32[48,11], index: 5, kind: input, shape index: {}]
  %s6 = inlined_call_operand.vmem [shape: bf16[16,16], index: 6, kind: input, shape index: {}]
  %s7 = inlined_call_operand.vmem [shape: bf16[64,16], index: 7, kind: input, shape index: {}]
  %s8 = inlined_call_operand.vmem [shape: f32[64,11], index: 8, kind: input, shape index: {}]
  %s9 = inlined_call_operand.vmem [shape: bf16[16,32], index: 9, kind: input, shape index: {}]
  %s10 = inlined_call_operand.hbm [shape: bf16[2,16,512], index: 10, kind: output, shape index: {}]
  %s11 = sld [smem:[#allocation0]]
  $region73: #{tpu_custom_call.1} parent=0
    _
  %s13 = ssub.s32 1, %s11
  %s14 = scalar_select 0, %s13, %s11
  $region1: #{tpu_custom_call.1} parent=0
    #allocation3 [shape = 'u8[32768]{0}', space=vmem, size = 0x8000, scoped, tag = 'output window, operand 0']
    #allocation4 [shape = 's32[2]{0}', space=sflag, size = 0x8, scoped, tag = 'scoped memory for tpu_custom_call.1']
    %15 = vsyncpa [#allocation4], 0
    %s16 = scalar_lea.sflag [#allocation4], 1
    %17 = vsyncpa %s16, 0
    loop: start=0, step=1, limit=4
    $region2: #{tpu_custom_call.1} parent=1 // loop_pre_header
      _
    $region3: #{tpu_custom_call.1} parent=1 // loop_header
      %s19 = sphi 0, %s23
      %p20 = scmp.ge.s32.totalorder %s19, 4
      %s29 = sphi 0, %s31
      %s32 = sphi 0, %s29
      %s33 = sphi 0, %s32
      %s49 = sphi 0, %s33
      %s53 = sphi 0, %s53
      %s55 = sphi 0, %s53
      %s56 = sphi 0, %s55
      %s70 = sphi 0, %s56
      %s74 = sphi 0, %s74
      %s76 = sphi 0, %s74
      %s77 = sphi 0, %s76
      %s91 = sphi 0, %s77
      %s95 = sphi 0, %s95
      %s97 = sphi 0, %s95
      %s98 = sphi 0, %s97
      %s112 = sphi 0, %s98
      %s116 = sphi 0, %s116
      %s118 = sphi 0, %s116
      %s119 = sphi 0, %s118
      %s133 = sphi 0, %s119
      %s137 = sphi 0, %s137
      %s139 = sphi 0, %s137
      %s140 = sphi 0, %s139
      %s154 = sphi 0, %s140
      %s158 = sphi 0, %s158
      %s160 = sphi 0, %s158
      %s161 = sphi 0, %s160
      %s175 = sphi 0, %s161
      %s179 = sphi 0, %s179
      %s181 = sphi 0, %s179
      %s182 = sphi 0, %s181
      %s196 = sphi 0, %s182
      %s200 = sphi 0, %s200
      %s202 = sphi 0, %s200
      %s203 = sphi 0, %s202
      %s217 = sphi 0, %s203
      %s221 = sphi 0, %s221
      %s223 = sphi 0, %s221
      %s224 = sphi 0, %s223
      %s238 = sphi 0, %s224
      %s244 = sphi 0, %s246
      %s247 = sphi 0, %s244
      %s248 = sphi 0, %s247
      %s264 = sphi 0, %s248
    $region4: #{tpu_custom_call.1} parent=1 // loop_header_branch
      %22 = sbr.rel (%p20) target = $region8
    $region5: #{tpu_custom_call.1} parent=1 // loop_body
      %s24 = ssub.s32 %s19, 1
      %s25 = ssub.s32 %s19, 2
      %s26 = sadd.s32 %s19, 1
      %s27 = ssub.s32 %s19, %s26
      %p28 = scmp.eq.s32.totalorder %s27, 0
      %s30 = sadd.s32 %s29, 1
      %s31 = scalar_select %p28, %s29, %s30
      %p34 = pneg %p28
      %p35 = scmp.eq.s32.totalorder %s19, 1
      %p36 = por %p34, %p35
      %p37 = scmp.ne.s32.totalorder %s29, %s32
      %p38 = scmp.eq.s32.totalorder %s19, 0
      %p39 = por %p37, %p38
      %p40 = scmp.ne.s32.totalorder %s29, %s32
      %p41 = scmp.eq.s32.totalorder %s24, 1
      %p42 = por %p40, %p41
      %p43 = scmp.ne.s32.totalorder %s32, %s33
      %p44 = scmp.eq.s32.totalorder %s24, 0
      %p45 = por %p43, %p44
      %p46 = scmp.ne.s32.totalorder %s32, %s33
      %p47 = scmp.eq.s32.totalorder %s25, 1
      %p48 = por %p46, %p47
      %p50 = scmp.ne.s32.totalorder %s33, %s49
      %p51 = scmp.eq.s32.totalorder %s25, 0
      %p52 = por %p50, %p51
      %s54 = sadd.s32 %s53, 1
      %p57 = scmp.eq.s32.totalorder %s19, 1
      %p58 = scmp.ne.s32.totalorder %s53, %s55
      %p59 = scmp.eq.s32.totalorder %s19, 0
      %p60 = por %p58, %p59
      %p61 = scmp.ne.s32.totalorder %s53, %s55
      %p62 = scmp.eq.s32.totalorder %s24, 1
      %p63 = por %p61, %p62
      %p64 = scmp.ne.s32.totalorder %s55, %s56
      %p65 = scmp.eq.s32.totalorder %s24, 0
      %p66 = por %p64, %p65
      %p67 = scmp.ne.s32.totalorder %s55, %s56
      %p68 = scmp.eq.s32.totalorder %s25, 1
      %p69 = por %p67, %p68
      %p71 = scmp.ne.s32.totalorder %s56, %s70
      %p72 = scmp.eq.s32.totalorder %s25, 0
      %p73 = por %p71, %p72
      %s75 = sadd.s32 %s74, 1
      %p78 = scmp.eq.s32.totalorder %s19, 1
      %p79 = scmp.ne.s32.totalorder %s74, %s76
      %p80 = scmp.eq.s32.totalorder %s19, 0
      %p81 = por %p79, %p80
      %p82 = scmp.ne.s32.totalorder %s74, %s76
      %p83 = scmp.eq.s32.totalorder %s24, 1
      %p84 = por %p82, %p83
      %p85 = scmp.ne.s32.totalorder %s76, %s77
      %p86 = scmp.eq.s32.totalorder %s24, 0
      %p87 = por %p85, %p86
      %p88 = scmp.ne.s32.totalorder %s76, %s77
      %p89 = scmp.eq.s32.totalorder %s25, 1
      %p90 = por %p88, %p89
      %p92 = scmp.ne.s32.totalorder %s77, %s91
      %p93 = scmp.eq.s32.totalorder %s25, 0
      %p94 = por %p92, %p93
      %s96 = sadd.s32 %s95, 1
      %p99 = scmp.eq.s32.totalorder %s19, 1
      %p100 = scmp.ne.s32.totalorder %s95, %s97
      %p101 = scmp.eq.s32.totalorder %s19, 0
      %p102 = por %p100, %p101
      %p103 = scmp.ne.s32.totalorder %s95, %s97
      %p104 = scmp.eq.s32.totalorder %s24, 1
      %p105 = por %p103, %p104
      %p106 = scmp.ne.s32.totalorder %s97, %s98
      %p107 = scmp.eq.s32.totalorder %s24, 0
      %p108 = por %p106, %p107
      %p109 = scmp.ne.s32.totalorder %s97, %s98
      %p110 = scmp.eq.s32.totalorder %s25, 1
      %p111 = por %p109, %p110
      %p113 = scmp.ne.s32.totalorder %s98, %s112
      %p114 = scmp.eq.s32.totalorder %s25, 0
      %p115 = por %p113, %p114
      %s117 = sadd.s32 %s116, 1
      %p120 = scmp.eq.s32.totalorder %s19, 1
      %p121 = scmp.ne.s32.totalorder %s116, %s118
      %p122 = scmp.eq.s32.totalorder %s19, 0
      %p123 = por %p121, %p122
      %p124 = scmp.ne.s32.totalorder %s116, %s118
      %p125 = scmp.eq.s32.totalorder %s24, 1
      %p126 = por %p124, %p125
      %p127 = scmp.ne.s32.totalorder %s118, %s119
      %p128 = scmp.eq.s32.totalorder %s24, 0
      %p129 = por %p127, %p128
      %p130 = scmp.ne.s32.totalorder %s118, %s119
      %p131 = scmp.eq.s32.totalorder %s25, 1
      %p132 = por %p130, %p131
      %p134 = scmp.ne.s32.totalorder %s119, %s133
      %p135 = scmp.eq.s32.totalorder %s25, 0
      %p136 = por %p134, %p135
      %s138 = sadd.s32 %s137, 1
      %p141 = scmp.eq.s32.totalorder %s19, 1
      %p142 = scmp.ne.s32.totalorder %s137, %s139
      %p143 = scmp.eq.s32.totalorder %s19, 0
      %p144 = por %p142, %p143
      %p145 = scmp.ne.s32.totalorder %s137, %s139
      %p146 = scmp.eq.s32.totalorder %s24, 1
      %p147 = por %p145, %p146
      %p148 = scmp.ne.s32.totalorder %s139, %s140
      %p149 = scmp.eq.s32.totalorder %s24, 0
      %p150 = por %p148, %p149
      %p151 = scmp.ne.s32.totalorder %s139, %s140
      %p152 = scmp.eq.s32.totalorder %s25, 1
      %p153 = por %p151, %p152
      %p155 = scmp.ne.s32.totalorder %s140, %s154
      %p156 = scmp.eq.s32.totalorder %s25, 0
      %p157 = por %p155, %p156
      %s159 = sadd.s32 %s158, 1
      %p162 = scmp.eq.s32.totalorder %s19, 1
      %p163 = scmp.ne.s32.totalorder %s158, %s160
      %p164 = scmp.eq.s32.totalorder %s19, 0
      %p165 = por %p163, %p164
      %p166 = scmp.ne.s32.totalorder %s158, %s160
      %p167 = scmp.eq.s32.totalorder %s24, 1
      %p168 = por %p166, %p167
      %p169 = scmp.ne.s32.totalorder %s160, %s161
      %p170 = scmp.eq.s32.totalorder %s24, 0
      %p171 = por %p169, %p170
      %p172 = scmp.ne.s32.totalorder %s160, %s161
      %p173 = scmp.eq.s32.totalorder %s25, 1
      %p174 = por %p172, %p173
      %p176 = scmp.ne.s32.totalorder %s161, %s175
      %p177 = scmp.eq.s32.totalorder %s25, 0
      %p178 = por %p176, %p177
      %s180 = sadd.s32 %s179, 1
      %p183 = scmp.eq.s32.totalorder %s19, 1
      %p184 = scmp.ne.s32.totalorder %s179, %s181
      %p185 = scmp.eq.s32.totalorder %s19, 0
      %p186 = por %p184, %p185
      %p187 = scmp.ne.s32.totalorder %s179, %s181
      %p188 = scmp.eq.s32.totalorder %s24, 1
      %p189 = por %p187, %p188
      %p190 = scmp.ne.s32.totalorder %s181, %s182
      %p191 = scmp.eq.s32.totalorder %s24, 0
      %p192 = por %p190, %p191
      %p193 = scmp.ne.s32.totalorder %s181, %s182
      %p194 = scmp.eq.s32.totalorder %s25, 1
      %p195 = por %p193, %p194
      %p197 = scmp.ne.s32.totalorder %s182, %s196
      %p198 = scmp.eq.s32.totalorder %s25, 0
      %p199 = por %p197, %p198
      %s201 = sadd.s32 %s200, 1
      %p204 = scmp.eq.s32.totalorder %s19, 1
      %p205 = scmp.ne.s32.totalorder %s200, %s202
      %p206 = scmp.eq.s32.totalorder %s19, 0
      %p207 = por %p205, %p206
      %p208 = scmp.ne.s32.totalorder %s200, %s202
      %p209 = scmp.eq.s32.totalorder %s24, 1
      %p210 = por %p208, %p209
      %p211 = scmp.ne.s32.totalorder %s202, %s203
      %p212 = scmp.eq.s32.totalorder %s24, 0
      %p213 = por %p211, %p212
      %p214 = scmp.ne.s32.totalorder %s202, %s203
      %p215 = scmp.eq.s32.totalorder %s25, 1
      %p216 = por %p214, %p215
      %p218 = scmp.ne.s32.totalorder %s203, %s217
      %p219 = scmp.eq.s32.totalorder %s25, 0
      %p220 = por %p218, %p219
      %s222 = sadd.s32 %s221, 1
      %p225 = scmp.eq.s32.totalorder %s19, 1
      %p226 = scmp.ne.s32.totalorder %s221, %s223
      %p227 = scmp.eq.s32.totalorder %s19, 0
      %p228 = por %p226, %p227
      %p229 = scmp.ne.s32.totalorder %s221, %s223
      %p230 = scmp.eq.s32.totalorder %s24, 1
      %p231 = por %p229, %p230
      %p232 = scmp.ne.s32.totalorder %s223, %s224
      %p233 = scmp.eq.s32.totalorder %s24, 0
      %p234 = por %p232, %p233
      %p235 = scmp.ne.s32.totalorder %s223, %s224
      %p236 = scmp.eq.s32.totalorder %s25, 1
      %p237 = por %p235, %p236
      %p239 = scmp.ne.s32.totalorder %s224, %s238
      %p240 = scmp.eq.s32.totalorder %s25, 0
      %p241 = por %p239, %p240
      %s242 = ssub.s32 %s19, %s26
      %p243 = scmp.eq.s32.totalorder %s242, 0
      %s245 = sadd.s32 %s244, 1
      %s246 = scalar_select %p243, %s244, %s245
      %p249 = pneg %p243
      %p250 = scmp.eq.s32.totalorder %s19, 1
      %p251 = por %p249, %p250
      %p252 = scmp.ne.s32.totalorder %s244, %s247
      %p253 = scmp.eq.s32.totalorder %s19, 0
      %p254 = por %p252, %p253
      %p255 = scmp.ne.s32.totalorder %s244, %s247
      %p256 = scmp.eq.s32.totalorder %s24, 1
      %p257 = por %p255, %p256
      %p258 = scmp.ne.s32.totalorder %s247, %s248
      %p259 = scmp.eq.s32.totalorder %s24, 0
      %p260 = por %p258, %p259
      %p261 = scmp.ne.s32.totalorder %s247, %s248
      %p262 = scmp.eq.s32.totalorder %s25, 1
      %p263 = por %p261, %p262
      %p265 = scmp.ne.s32.totalorder %s248, %s264
      %p266 = scmp.eq.s32.totalorder %s25, 0
      %p267 = por %p265, %p266
      %p268 = scmp.le.s32.totalorder 1, %s19
      %p269 = scmp.lt.s32.totalorder %s19, 3
      %p270 = pnand %p268, %p269
      %p271 = pneg %p270
      // Predicated region
      $region9: #{tpu_custom_call.1} parent=5 // pred_check
        _
      $region10: #{tpu_custom_call.1} parent=5 // pred_check_branch
        %273 = sbr.rel (%p270) target = $region12
      $region11: #{tpu_custom_call.1} parent=5 // pred_region
        %s274 = ssub.s32 %s19, 1
        // Predicated region
        $region13: #{tpu_custom_call.1} parent=11 // pred_check
          %p275 = pneg %p66
        $region14: #{tpu_custom_call.1} parent=11 // pred_check_branch
          %277 = sbr.rel (%p275) target = $region16
        $region15: #{tpu_custom_call.1} parent=11 // pred_region
          _
        $region16: #{tpu_custom_call.1} parent=11 // pred_fallthru
          _
        // Predicated region
        $region17: #{tpu_custom_call.1} parent=11 // pred_check
          %p278 = pneg %p87
        $region18: #{tpu_custom_call.1} parent=11 // pred_check_branch
          %280 = sbr.rel (%p278) target = $region20
        $region19: #{tpu_custom_call.1} parent=11 // pred_region
          _
        $region20: #{tpu_custom_call.1} parent=11 // pred_fallthru
          _
        // Predicated region
        $region21: #{tpu_custom_call.1} parent=11 // pred_check
          %p281 = pneg %p108
        $region22: #{tpu_custom_call.1} parent=11 // pred_check_branch
          %283 = sbr.rel (%p281) target = $region24
        $region23: #{tpu_custom_call.1} parent=11 // pred_region
          _
        $region24: #{tpu_custom_call.1} parent=11 // pred_fallthru
          _
        // Predicated region
        $region25: #{tpu_custom_call.1} parent=11 // pred_check
          %p284 = pneg %p129
        $region26: #{tpu_custom_call.1} parent=11 // pred_check_branch
          %286 = sbr.rel (%p284) target = $region28
        $region27: #{tpu_custom_call.1} parent=11 // pred_region
          _
        $region28: #{tpu_custom_call.1} parent=11 // pred_fallthru
          _
        // Predicated region
        $region29: #{tpu_custom_call.1} parent=11 // pred_check
          %p287 = pneg %p150
        $region30: #{tpu_custom_call.1} parent=11 // pred_check_branch
          %289 = sbr.rel (%p287) target = $region32
        $region31: #{tpu_custom_call.1} parent=11 // pred_region
          _
        $region32: #{tpu_custom_call.1} parent=11 // pred_fallthru
          _
        // Predicated region
        $region33: #{tpu_custom_call.1} parent=11 // pred_check
          %p290 = pneg %p171
        $region34: #{tpu_custom_call.1} parent=11 // pred_check_branch
          %292 = sbr.rel (%p290) target = $region36
        $region35: #{tpu_custom_call.1} parent=11 // pred_region
          _
        $region36: #{tpu_custom_call.1} parent=11 // pred_fallthru
          _
        // Predicated region
        $region37: #{tpu_custom_call.1} parent=11 // pred_check
          %p293 = pneg %p192
        $region38: #{tpu_custom_call.1} parent=11 // pred_check_branch
          %295 = sbr.rel (%p293) target = $region40
        $region39: #{tpu_custom_call.1} parent=11 // pred_region
          _
        $region40: #{tpu_custom_call.1} parent=11 // pred_fallthru
          _
        // Predicated region
        $region41: #{tpu_custom_call.1} parent=11 // pred_check
          %p296 = pneg %p213
        $region42: #{tpu_custom_call.1} parent=11 // pred_check_branch
          %298 = sbr.rel (%p296) target = $region44
        $region43: #{tpu_custom_call.1} parent=11 // pred_region
          _
        $region44: #{tpu_custom_call.1} parent=11 // pred_fallthru
          _
        // Predicated region
        $region45: #{tpu_custom_call.1} parent=11 // pred_check
          %p299 = pneg %p234
        $region46: #{tpu_custom_call.1} parent=11 // pred_check_branch
          %301 = sbr.rel (%p299) target = $region48
        $region47: #{tpu_custom_call.1} parent=11 // pred_region
          _
        $region48: #{tpu_custom_call.1} parent=11 // pred_fallthru
          _
      $region12: #{tpu_custom_call.1} parent=5 // pred_fallthru
        _
      %p302 = scmp.lt.s32.totalorder %s19, 2
      // Predicated region
      $region49: #{tpu_custom_call.1} parent=5 // pred_check
        %p303 = pneg %p302
      $region50: #{tpu_custom_call.1} parent=5 // pred_check_branch
        %305 = sbr.rel (%p303) target = $region52
      $region51: #{tpu_custom_call.1} parent=5 // pred_region
        // Predicated region
        $region53: #{tpu_custom_call.1} parent=51 // pred_check
          %p306 = pneg %p39
        $region54: #{tpu_custom_call.1} parent=51 // pred_check_branch
          %308 = sbr.rel (%p306) target = $region56
        $region55: #{tpu_custom_call.1} parent=51 // pred_region
          %p309 = scmp.lt.s32.totalorder %s19, 1
          %s310 = scalar_select %p309, %s19, 1
          %s311 = smul.addr %s310, 8
          %s312 = smul.addr %s311, 4
          %s313 = scalar_lea.vmem %s0, %s312
        $region56: #{tpu_custom_call.1} parent=51 // pred_fallthru
          _
      $region52: #{tpu_custom_call.1} parent=5 // pred_fallthru
        _
      %p314 = scmp.le.s32.totalorder 1, %s19
      %p315 = scmp.lt.s32.totalorder %s19, 3
      %p316 = pnand %p314, %p315
      %p317 = pneg %p316
      // Predicated region
      $region57: #{tpu_custom_call.1} parent=5 // pred_check
        _
      $region58: #{tpu_custom_call.1} parent=5 // pred_check_branch
        %319 = sbr.rel (%p316) target = $region60
      $region59: #{tpu_custom_call.1} parent=5 // pred_region
        %s320 = ssub.s32 %s19, 1
        %p321 = scmp.lt.s32.totalorder %s24, 1
        %s322 = scalar_select %p321, %s24, 1
        %s323 = smul.addr %s322, 8
        %s324 = smul.addr %s323, 4
        %s325 = scalar_lea.vmem %s0, %s324
        %p326 = pneg %p45
        %p327 = pneg %p42
        %p328 = pneg %p66
        %p329 = pneg %p63
        %p330 = pneg %p87
        %p331 = pneg %p84
        %p332 = pneg %p108
        %p333 = pneg %p105
        %p334 = pneg %p129
        %p335 = pneg %p126
        %p336 = pneg %p150
        %p337 = pneg %p147
        %p338 = pneg %p171
        %p339 = pneg %p168
        %p340 = pneg %p192
        %p341 = pneg %p189
        %p342 = pneg %p213
        %p343 = pneg %p210
        %p344 = pneg %p234
        %p345 = pneg %p231
        %p346 = pneg %p260
        %p347 = pneg %p257
        %s348 = sand.u32 %s247, 1
        %s349 = scalar_lea.sflag [#allocation4], %s348
        %s350 = sand.u32 %s247, 1
        %s351 = smul.addr %s350, 32
        %s352 = scalar_lea.vmem [#allocation3], %s351
        %p353 = scmp.lt.s32.totalorder %s24, 1
        %s354 = scalar_select %p353, %s24, 1
        %s355 = smul.addr %s354, 8
        %s356 = smul.addr %s355, 4
        %s357 = scalar_lea.vmem %s0, %s356
        %v359 = vld [vmem:[%s357] sm:$0xff]
        %v360 = vld [vmem:[%s357 + $0x8] sm:$0xff]
        %v361 = vld [vmem:[%s357 + $0x10] sm:$0xff]
        %v362 = vld [vmem:[%s357 + $0x18] sm:$0xff]
        %v363 = vunpack.c.l.bf16 %v359
        %v364 = vunpack.c.h.bf16 %v359
        %v365 = vunpack.c.l.bf16 %v360
        %v366 = vunpack.c.h.bf16 %v360
        %v367 = vunpack.c.l.bf16 %v361
        %v368 = vunpack.c.h.bf16 %v361
        %v369 = vunpack.c.l.bf16 %v362
        %v370 = vunpack.c.h.bf16 %v362
        %v371 = vld [vmem:[%s3] sm:$0xf]
        %v372 = vld [vmem:[%s1] sm:$0xff]
        %v373 = vld [vmem:[%s1 + $0x8] sm:$0xff]
        %v374 = vld [vmem:[%s5] sm:$0xff]
        %v375 = vld [vmem:[%s5 + $0x8] sm:$0xff]
        %v376 = vld [vmem:[%s5 + $0x10] sm:$0xff]
        %v377 = vld [vmem:[%s5 + $0x18] sm:$0xff]
        %v378 = vld [vmem:[%s5 + $0x20] sm:$0xff]
        %v379 = vld [vmem:[%s5 + $0x28] sm:$0xff]
        %v380 = vld [vmem:[%s8] sm:$0xff]
        %v381 = vld [vmem:[%s8 + $0x8] sm:$0xff]
        %v382 = vld [vmem:[%s8 + $0x10] sm:$0xff]
        %v383 = vld [vmem:[%s8 + $0x18] sm:$0xff]
        %v384 = vld [vmem:[%s8 + $0x20] sm:$0xff]
        %v385 = vld [vmem:[%s8 + $0x28] sm:$0xff]
        %v386 = vld [vmem:[%s8 + $0x30] sm:$0xff]
        %v387 = vld [vmem:[%s8 + $0x38] sm:$0xff]
        %v388 = vadd.f32 %v363, %v367
        %v389 = vrot.slane %v388, 4
        %v390 = vadd.f32 %v388, %v389
        %v391 = vrot.slane %v390, 2
        %v392 = vadd.f32 %v390, %v391
        %v393 = vrot.slane %v392, 1
        %v394 = vadd.f32 %v392, %v393
        %v395 = vadd.f32 %v364, %v368
        %v396 = vrot.slane %v395, 4
        %v397 = vadd.f32 %v395, %v396
        %v398 = vrot.slane %v397, 2
        %v399 = vadd.f32 %v397, %v398
        %v400 = vrot.slane %v399, 1
        %v401 = vadd.f32 %v399, %v400
        %v402 = vadd.f32 %v365, %v369
        %v403 = vrot.slane %v402, 4
        %v404 = vadd.f32 %v402, %v403
        %v405 = vrot.slane %v404, 2
        %v406 = vadd.f32 %v404, %v405
        %v407 = vrot.slane %v406, 1
        %v408 = vadd.f32 %v406, %v407
        %v409 = vadd.f32 %v366, %v370
        %v410 = vrot.slane %v409, 4
        %v411 = vadd.f32 %v409, %v410
        %v412 = vrot.slane %v411, 2
        %v413 = vadd.f32 %v411, %v412
        %v414 = vrot.slane %v413, 1
        %v415 = vadd.f32 %v413, %v414
        %v416 = vrcp.pop 16.0
        %v417 = vmul.f32 %v394, %v416
        %v418 = vmul.f32 %v401, %v416
        %v419 = vmul.f32 %v408, %v416
        %v420 = vmul.f32 %v415, %v416
        %v421 = vsub.f32 %v363, %v417
        %v422 = vsub.f32 %v364, %v418
        %v423 = vsub.f32 %v365, %v419
        %v424 = vsub.f32 %v366, %v420
        %v425 = vsub.f32 %v367, %v417
        %v426 = vsub.f32 %v368, %v418
        %v427 = vsub.f32 %v369, %v419
        %v428 = vsub.f32 %v370, %v420
        %v429 = vmul.f32 %v421, %v421
        %v430 = vmul.f32 %v422, %v422
        %v431 = vmul.f32 %v423, %v423
        %v432 = vmul.f32 %v424, %v424
        %v433 = vmul.f32 %v425, %v425
        %v434 = vmul.f32 %v426, %v426
        %v435 = vmul.f32 %v427, %v427
        %v436 = vmul.f32 %v428, %v428
        %v437 = vadd.f32 %v429, %v433
        %v438 = vrot.slane %v437, 4
        %v439 = vadd.f32 %v437, %v438
        %v440 = vrot.slane %v439, 2
        %v441 = vadd.f32 %v439, %v440
        %v442 = vrot.slane %v441, 1
        %v443 = vadd.f32 %v441, %v442
        %v444 = vadd.f32 %v430, %v434
        %v445 = vrot.slane %v444, 4
        %v446 = vadd.f32 %v444, %v445
        %v447 = vrot.slane %v446, 2
        %v448 = vadd.f32 %v446, %v447
        %v449 = vrot.slane %v448, 1
        %v450 = vadd.f32 %v448, %v449
        %v451 = vadd.f32 %v431, %v435
        %v452 = vrot.slane %v451, 4
        %v453 = vadd.f32 %v451, %v452
        %v454 = vrot.slane %v453, 2
        %v455 = vadd.f32 %v453, %v454
        %v456 = vrot.slane %v455, 1
        %v457 = vadd.f32 %v455, %v456
        %v458 = vadd.f32 %v432, %v436
        %v459 = vrot.slane %v458, 4
        %v460 = vadd.f32 %v458, %v459
        %v461 = vrot.slane %v460, 2
        %v462 = vadd.f32 %v460, %v461
        %v463 = vrot.slane %v462, 1
        %v464 = vadd.f32 %v462, %v463
        %v465 = vmul.f32 %v443, %v416
        %v466 = vmul.f32 %v450, %v416
        %v467 = vmul.f32 %v457, %v416
        %v468 = vmul.f32 %v464, %v416
        %v469 = vadd.f32 %v465, 1e-05
        %v470 = vadd.f32 %v466, 1e-05
        %v471 = vadd.f32 %v467, 1e-05
        %v472 = vadd.f32 %v468, 1e-05
        %v473 = vrsqrt.pop %v469
        %v474 = vrsqrt.pop %v470
        %v475 = vrsqrt.pop %v471
        %v476 = vrsqrt.pop %v472
        %v477 = vmul.f32 %v421, %v473
        %v478 = vmul.f32 %v422, %v474
        %v479 = vmul.f32 %v423, %v475
        %v480 = vmul.f32 %v424, %v476
        %v481 = vmul.f32 %v425, %v473
        %v482 = vmul.f32 %v426, %v474
        %v483 = vmul.f32 %v427, %v475
        %v484 = vmul.f32 %v428, %v476
        %486 = vset.pattern.permute.xlu0 0
        %487 = vperm.xlu0 %486, %v372
        %v488 = vpop.permute.xlu0 %487
        %491 = vset.pattern.permute.xlu0 0
        %492 = vperm.xlu0 %491, %v373
        %v493 = vpop.permute.xlu0 %492
        %v495 = vmul.f32 %v477, %v488
        %v496 = vmul.f32 %v478, %v488
        %v497 = vmul.f32 %v479, %v488
        %v498 = vmul.f32 %v480, %v488
        %v499 = vmul.f32 %v481, %v493
        %v500 = vmul.f32 %v482, %v493
        %v501 = vmul.f32 %v483, %v493
        %v502 = vmul.f32 %v484, %v493
        %503 = vset.pattern.permute.xlu0 1
        %504 = vperm.xlu0 %503, %v372
        %v505 = vpop.permute.xlu0 %504
        %507 = vset.pattern.permute.xlu0 1
        %508 = vperm.xlu0 %507, %v373
        %v509 = vpop.permute.xlu0 %508
        %v511 = vadd.f32 %v495, %v505
        %v512 = vadd.f32 %v496, %v505
        %v513 = vadd.f32 %v497, %v505
        %v514 = vadd.f32 %v498, %v505
        %v515 = vadd.f32 %v499, %v509
        %v516 = vadd.f32 %v500, %v509
        %v517 = vadd.f32 %v501, %v509
        %v518 = vadd.f32 %v502, %v509
        %v519 = vld [vmem:[%s4] sm:$0xf]
        %v520 = vld [vmem:[%s4 + $0x4] sm:$0xf]
        %v521 = vld [vmem:[%s4 + $0x8] sm:$0xf]
        %v522 = vld [vmem:[%s4 + $0xc] sm:$0xf]
        %v523 = vld [vmem:[%s4 + $0x10] sm:$0xf]
        %v524 = vld [vmem:[%s4 + $0x14] sm:$0xf]
        %v525 = vpack.c.bf16 %v515, %v511
        %v526 = vpack.c.bf16 %v516, %v512
        %v527 = vpack.c.bf16 %v517, %v513
        %v528 = vpack.c.bf16 %v518, %v514
        %530 = vset.pattern.permute.xlu0 0
        %531 = vperm.xlu0 %530, %v374
        %v532 = vpop.permute.xlu0 %531
        %535 = vset.pattern.permute.xlu0 0
        %536 = vperm.xlu0 %535, %v375
        %v537 = vpop.permute.xlu0 %536
        %540 = vset.pattern.permute.xlu0 0
        %541 = vperm.xlu0 %540, %v376
        %v542 = vpop.permute.xlu0 %541
        %545 = vset.pattern.permute.xlu0 0
        %546 = vperm.xlu0 %545, %v377
        %v547 = vpop.permute.xlu0 %546
        %550 = vset.pattern.permute.xlu0 0
        %551 = vperm.xlu0 %550, %v378
        %v552 = vpop.permute.xlu0 %551
        %555 = vset.pattern.permute.xlu0 0
        %556 = vperm.xlu0 %555, %v379
        %v557 = vpop.permute.xlu0 %556
        %v565 = vunpack.c.l.b16 %v519
        %v566 = vunpack.c.l.b16 %v520
        %v567 = vunpack.c.l.b16 %v521
        %v568 = vunpack.c.l.b16 %v522
        %v569 = vunpack.c.l.b16 %v523
        %v570 = vunpack.c.l.b16 %v524
        %v571 = vpack.c.b16 %v566, %v565
        %v572 = vpack.c.b16 %v568, %v567
        %v573 = vpack.c.b16 %v570, %v569
        %vm574 = vcmask 130048
        %v576 = vsel %vm574, %v571, 0
        %v579 = vsel %vm574, %v572, 0
        %v582 = vsel %vm574, %v573, 0
        %584 = vmatprep.subr.bf16.mxu0 %v526
        %585 = vmatpush1.bf16.msra.mxu0 %v525
        %586 = vmatprep.subr.bf16.mxu0 0
        %587 = vmatpush1.bf16.msra.mxu0 0
        %588 = vmatprep.subr.bf16.mxu0 0
        %589 = vmatpush1.bf16.msra.mxu0 0
        %590 = vmatprep.subr.bf16.mxu0 0
        %591 = vmatpush1.bf16.msra.mxu0 0
        %592 = vmatprep.subr.bf16.mxu0 0
        %593 = vmatpush1.bf16.msra.mxu0 0
        %594 = vmatprep.subr.bf16.mxu0 0
        %595 = vmatpush1.bf16.msra.mxu0 0
        %596 = vmatprep.subr.bf16.mxu0 0
        %597 = vmatpush1.bf16.msra.mxu0 0
        %598 = vmatprep.subr.bf16.mxu0 0
        %599 = vmatpush1.bf16.msra.mxu0 0
        %600 = vmatprep.subr.bf16.mxu0 0
        %601 = vmatpush1.bf16.msra.mxu0 0
        %602 = vmatprep.subr.bf16.mxu0 0
        %603 = vmatpush1.bf16.msra.mxu0 0
        %604 = vmatprep.subr.bf16.mxu0 0
        %605 = vmatpush1.bf16.msra.mxu0 0
        %606 = vmatprep.subr.bf16.mxu0 0
        %607 = vmatpush1.bf16.msra.mxu0 0
        %608 = vmatprep.subr.bf16.mxu0 0
        %609 = vmatpush1.bf16.msra.mxu0 0
        %610 = vmatprep.subr.bf16.mxu0 0
        %611 = vmatpush1.bf16.msra.mxu0 0
        %612 = vmatprep.subr.bf16.mxu0 0
        %613 = vmatpush1.bf16.msra.mxu0 0
        %614 = vmatprep.subr.bf16.mxu0 0
        %615 = vmatpush1.bf16.msra.mxu0 0
        %616 = vmatprep.mubr.bf16.mxu0 0
        %617 = vmatmul.mubr.bf16.gmra.mrb[0].mxu0 %v576
        %v618 = vpop.f32.mrb[0].mxu0
        %v619 = vadd.f32 %v532, %v618
        %v620 = vpop.f32.mrb[0].mxu0
        %v621 = vadd.f32 %v532, %v620
        %v622 = vpop.f32.mrb[0].mxu0
        %v623 = vadd.f32 %v537, %v622
        %v624 = vpop.f32.mrb[0].mxu0
        %v625 = vadd.f32 %v537, %v624
        %626 = vmatprep.mubr.bf16.mxu0 0
        %627 = vmatmul.mubr.bf16.gmra.mrb[0].mxu0 %v579
        %v628 = vpop.f32.mrb[0].mxu0
        %v629 = vadd.f32 %v542, %v628
        %v630 = vpop.f32.mrb[0].mxu0
        %v631 = vadd.f32 %v542, %v630
        %v632 = vpop.f32.mrb[0].mxu0
        %v633 = vadd.f32 %v547, %v632
        %v634 = vpop.f32.mrb[0].mxu0
        %v635 = vadd.f32 %v547, %v634
        %636 = vmatprep.mubr.bf16.mxu0 0
        %637 = vmatmul.mubr.bf16.gmra.mrb[0].mxu0 %v582
        %v638 = vpop.f32.mrb[0].mxu0
        %v639 = vadd.f32 %v552, %v638
        %v640 = vpop.f32.mrb[0].mxu0
        %v641 = vadd.f32 %v552, %v640
        %v642 = vpop.f32.mrb[0].mxu0
        %v643 = vadd.f32 %v557, %v642
        %v644 = vpop.f32.mrb[0].mxu0
        %v645 = vadd.f32 %v557, %v644
        %646 = vdwg.mxu0
        %647 = vmatprep.subr.bf16.mxu0 %v528
        %648 = vmatpush1.bf16.msra.mxu0 %v527
        %649 = vmatprep.subr.bf16.mxu0 0
        %650 = vmatpush1.bf16.msra.mxu0 0
        %651 = vmatprep.subr.bf16.mxu0 0
        %652 = vmatpush1.bf16.msra.mxu0 0
        %653 = vmatprep.subr.bf16.mxu0 0
        %654 = vmatpush1.bf16.msra.mxu0 0
        %655 = vmatprep.subr.bf16.mxu0 0
        %656 = vmatpush1.bf16.msra.mxu0 0
        %657 = vmatprep.subr.bf16.mxu0 0
        %658 = vmatpush1.bf16.msra.mxu0 0
        %659 = vmatprep.subr.bf16.mxu0 0
        %660 = vmatpush1.bf16.msra.mxu0 0
        %661 = vmatprep.subr.bf16.mxu0 0
        %662 = vmatpush1.bf16.msra.mxu0 0
        %663 = vmatprep.subr.bf16.mxu0 0
        %664 = vmatpush1.bf16.msra.mxu0 0
        %665 = vmatprep.subr.bf16.mxu0 0
        %666 = vmatpush1.bf16.msra.mxu0 0
        %667 = vmatprep.subr.bf16.mxu0 0
        %668 = vmatpush1.bf16.msra.mxu0 0
        %669 = vmatprep.subr.bf16.mxu0 0
        %670 = vmatpush1.bf16.msra.mxu0 0
        %671 = vmatprep.subr.bf16.mxu0 0
        %672 = vmatpush1.bf16.msra.mxu0 0
        %673 = vmatprep.subr.bf16.mxu0 0
        %674 = vmatpush1.bf16.msra.mxu0 0
        %675 = vmatprep.subr.bf16.mxu0 0
        %676 = vmatpush1.bf16.msra.mxu0 0
        %677 = vmatprep.subr.bf16.mxu0 0
        %678 = vmatpush1.bf16.msra.mxu0 0
        %679 = vmatprep.mubr.bf16.mxu0 0
        %680 = vmatmul.mubr.bf16.gmra.mrb[0].mxu0 %v576
        %v681 = vpop.f32.mrb[0].mxu0
        %v682 = vadd.f32 %v532, %v681
        %v683 = vpop.f32.mrb[0].mxu0
        %v684 = vadd.f32 %v532, %v683
        %v685 = vpop.f32.mrb[0].mxu0
        %v686 = vadd.f32 %v537, %v685
        %v687 = vpop.f32.mrb[0].mxu0
        %v688 = vadd.f32 %v537, %v687
        %689 = vmatprep.mubr.bf16.mxu0 0
        %690 = vmatmul.mubr.bf16.gmra.mrb[0].mxu0 %v579
        %v691 = vpop.f32.mrb[0].mxu0
        %v692 = vadd.f32 %v542, %v691
        %v693 = vpop.f32.mrb[0].mxu0
        %v694 = vadd.f32 %v542, %v693
        %v695 = vpop.f32.mrb[0].mxu0
        %v696 = vadd.f32 %v547, %v695
        %v697 = vpop.f32.mrb[0].mxu0
        %v698 = vadd.f32 %v547, %v697
        %699 = vmatprep.mubr.bf16.mxu0 0
        %700 = vmatmul.mubr.bf16.gmra.mrb[0].mxu0 %v582
        %v701 = vpop.f32.mrb[0].mxu0
        %v702 = vadd.f32 %v552, %v701
        %v703 = vpop.f32.mrb[0].mxu0
        %v704 = vadd.f32 %v552, %v703
        %v705 = vpop.f32.mrb[0].mxu0
        %v706 = vadd.f32 %v557, %v705
        %v707 = vpop.f32.mrb[0].mxu0
        %v708 = vadd.f32 %v557, %v707
        %709 = vdwg.mxu0
        %v711 = vlaneseq
        %v712 = vshrl.u32 %v711, 7
        %v713 = vsub.s32 0, %v712
        %v714 = vrot.slane %v371, %v713
        %v715 = vlaneseq
        %v716 = vshrl.u32 %v715, 7
        %v717 = vsub.s32 1, %v716
        %v718 = vrot.slane %v371, %v717
        %v719 = vlaneseq
        %v720 = vshrl.u32 %v719, 7
        %v721 = vsub.s32 2, %v720
        %v722 = vrot.slane %v371, %v721
        %v723 = vlaneseq
        %v724 = vshrl.u32 %v723, 7
        %v725 = vsub.s32 3, %v724
        %v726 = vrot.slane %v371, %v725
        %v731 = vmul.f32 %v619, %v714
        %v732 = vmul.f32 %v621, %v718
        %v733 = vmul.f32 %v682, %v722
        %v734 = vmul.f32 %v684, %v726
        %v735 = vmul.f32 %v623, %v714
        %v736 = vmul.f32 %v625, %v718
        %v737 = vmul.f32 %v686, %v722
        %v738 = vmul.f32 %v688, %v726
        %v739 = vmul.f32 %v629, %v714
        %v740 = vmul.f32 %v631, %v718
        %v741 = vmul.f32 %v692, %v722
        %v742 = vmul.f32 %v694, %v726
        %v743 = vmul.f32 %v633, %v714
        %v744 = vmul.f32 %v635, %v718
        %v745 = vmul.f32 %v696, %v722
        %v746 = vmul.f32 %v698, %v726
        %v747 = vmul.f32 %v639, %v714
        %v748 = vmul.f32 %v641, %v718
        %v749 = vmul.f32 %v702, %v722
        %v750 = vmul.f32 %v704, %v726
        %v751 = vmul.f32 %v643, %v714
        %v752 = vmul.f32 %v645, %v718
        %v753 = vmul.f32 %v706, %v722
        %v754 = vmul.f32 %v708, %v726
        %755 = vrot.lane.b32.xlu0 %v731, 11
        %v756 = vpop.permute.xlu0 %755
        %757 = vrot.lane.b32.xlu0 %v735, 11
        %v758 = vpop.permute.xlu0 %757
        %759 = vrot.lane.b32.xlu0 %v739, 11
        %v760 = vpop.permute.xlu0 %759
        %761 = vrot.lane.b32.xlu0 %v743, 11
        %v762 = vpop.permute.xlu0 %761
        %763 = vrot.lane.b32.xlu0 %v747, 11
        %v764 = vpop.permute.xlu0 %763
        %765 = vrot.lane.b32.xlu0 %v751, 11
        %v766 = vpop.permute.xlu0 %765
        %767 = vrot.lane.b32.xlu0 %v732, 11
        %v768 = vpop.permute.xlu0 %767
        %769 = vrot.lane.b32.xlu0 %v736, 11
        %v770 = vpop.permute.xlu0 %769
        %771 = vrot.lane.b32.xlu0 %v740, 11
        %v772 = vpop.permute.xlu0 %771
        %773 = vrot.lane.b32.xlu0 %v744, 11
        %v774 = vpop.permute.xlu0 %773
        %775 = vrot.lane.b32.xlu0 %v748, 11
        %v776 = vpop.permute.xlu0 %775
        %777 = vrot.lane.b32.xlu0 %v752, 11
        %v778 = vpop.permute.xlu0 %777
        %779 = vrot.lane.b32.xlu0 %v733, 11
        %v780 = vpop.permute.xlu0 %779
        %781 = vrot.lane.b32.xlu0 %v737, 11
        %v782 = vpop.permute.xlu0 %781
        %783 = vrot.lane.b32.xlu0 %v741, 11
        %v784 = vpop.permute.xlu0 %783
        %785 = vrot.lane.b32.xlu0 %v745, 11
        %v786 = vpop.permute.xlu0 %785
        %787 = vrot.lane.b32.xlu0 %v749, 11
        %v788 = vpop.permute.xlu0 %787
        %789 = vrot.lane.b32.xlu0 %v753, 11
        %v790 = vpop.permute.xlu0 %789
        %791 = vrot.lane.b32.xlu0 %v734, 11
        %v792 = vpop.permute.xlu0 %791
        %793 = vrot.lane.b32.xlu0 %v738, 11
        %v794 = vpop.permute.xlu0 %793
        %795 = vrot.lane.b32.xlu0 %v742, 11
        %v796 = vpop.permute.xlu0 %795
        %797 = vrot.lane.b32.xlu0 %v746, 11
        %v798 = vpop.permute.xlu0 %797
        %799 = vrot.lane.b32.xlu0 %v750, 11
        %v800 = vpop.permute.xlu0 %799
        %801 = vrot.lane.b32.xlu0 %v754, 11
        %v802 = vpop.permute.xlu0 %801
        %v803 = vlaneseq
        %v804 = vand.u32 %v803, 127
        %vm805 = vcmp.lt.s32.totalorder %v804, 11
        %v806 = vsel %vm805, %v780, %v792
        %v807 = vsel %vm805, %v782, %v794
        %v808 = vsel %vm805, %v784, %v796
        %v809 = vsel %vm805, %v786, %v798
        %v810 = vsel %vm805, %v788, %v800
        %v811 = vsel %vm805, %v790, %v802
        %v812 = vsel %vm805, %v768, %v780
        %v813 = vsel %vm805, %v770, %v782
        %v814 = vsel %vm805, %v772, %v784
        %v815 = vsel %vm805, %v774, %v786
        %v816 = vsel %vm805, %v776, %v788
        %v817 = vsel %vm805, %v778, %v790
        %v818 = vsel %vm805, %v756, %v768
        %v819 = vsel %vm805, %v758, %v770
        %v820 = vsel %vm805, %v760, %v772
        %v821 = vsel %vm805, %v762, %v774
        %v822 = vsel %vm805, %v764, %v776
        %v823 = vsel %vm805, %v766, %v778
        %v824 = vsel %vm805, %v792, %v756
        %v825 = vsel %vm805, %v794, %v758
        %v826 = vsel %vm805, %v796, %v760
        %v827 = vsel %vm805, %v798, %v762
        %v828 = vsel %vm805, %v800, %v764
        %v829 = vsel %vm805, %v802, %v766
        %830 = vset.pattern.permute.xlu0 1
        %831 = vperm.xlu0 %830, %v374
        %v832 = vpop.permute.xlu0 %831
        %834 = vset.pattern.permute.xlu0 1
        %835 = vperm.xlu0 %834, %v375
        %v836 = vpop.permute.xlu0 %835
        %838 = vset.pattern.permute.xlu0 1
        %839 = vperm.xlu0 %838, %v376
        %v840 = vpop.permute.xlu0 %839
        %842 = vset.pattern.permute.xlu0 1
        %843 = vperm.xlu0 %842, %v377
        %v844 = vpop.permute.xlu0 %843
        %846 = vset.pattern.permute.xlu0 1
        %847 = vperm.xlu0 %846, %v378
        %v848 = vpop.permute.xlu0 %847
        %850 = vset.pattern.permute.xlu0 1
        %851 = vperm.xlu0 %850, %v379
        %v852 = vpop.permute.xlu0 %851
        %v854 = vmul.f32 %v832, %v824
        %v855 = vmul.f32 %v832, %v818
        %v856 = vmul.f32 %v832, %v812
        %v857 = vmul.f32 %v832, %v806
        %v858 = vmul.f32 %v836, %v825
        %v859 = vmul.f32 %v836, %v819
        %v860 = vmul.f32 %v836, %v813
        %v861 = vmul.f32 %v836, %v807
        %v862 = vmul.f32 %v840, %v826
        %v863 = vmul.f32 %v840, %v820
        %v864 = vmul.f32 %v840, %v814
        %v865 = vmul.f32 %v840, %v808
        %v866 = vmul.f32 %v844, %v827
        %v867 = vmul.f32 %v844, %v821
        %v868 = vmul.f32 %v844, %v815
        %v869 = vmul.f32 %v844, %v809
        %v870 = vmul.f32 %v848, %v828
        %v871 = vmul.f32 %v848, %v822
        %v872 = vmul.f32 %v848, %v816
        %v873 = vmul.f32 %v848, %v810
        %v874 = vmul.f32 %v852, %v829
        %v875 = vmul.f32 %v852, %v823
        %v876 = vmul.f32 %v852, %v817
        %v877 = vmul.f32 %v852, %v811
        %878 = vrot.lane.b32.xlu0 %v731, 10
        %v879 = vpop.permute.xlu0 %878
        %880 = vrot.lane.b32.xlu0 %v735, 10
        %v881 = vpop.permute.xlu0 %880
        %882 = vrot.lane.b32.xlu0 %v739, 10
        %v883 = vpop.permute.xlu0 %882
        %884 = vrot.lane.b32.xlu0 %v743, 10
        %v885 = vpop.permute.xlu0 %884
        %886 = vrot.lane.b32.xlu0 %v747, 10
        %v887 = vpop.permute.xlu0 %886
        %888 = vrot.lane.b32.xlu0 %v751, 10
        %v889 = vpop.permute.xlu0 %888
        %890 = vrot.lane.b32.xlu0 %v732, 10
        %v891 = vpop.permute.xlu0 %890
        %892 = vrot.lane.b32.xlu0 %v736, 10
        %v893 = vpop.permute.xlu0 %892
        %894 = vrot.lane.b32.xlu0 %v740, 10
        %v895 = vpop.permute.xlu0 %894
        %896 = vrot.lane.b32.xlu0 %v744, 10
        %v897 = vpop.permute.xlu0 %896
        %898 = vrot.lane.b32.xlu0 %v748, 10
        %v899 = vpop.permute.xlu0 %898
        %900 = vrot.lane.b32.xlu0 %v752, 10
        %v901 = vpop.permute.xlu0 %900
        %902 = vrot.lane.b32.xlu0 %v733, 10
        %v903 = vpop.permute.xlu0 %902
        %904 = vrot.lane.b32.xlu0 %v737, 10
        %v905 = vpop.permute.xlu0 %904
        %906 = vrot.lane.b32.xlu0 %v741, 10
        %v907 = vpop.permute.xlu0 %906
        %908 = vrot.lane.b32.xlu0 %v745, 10
        %v909 = vpop.permute.xlu0 %908
        %910 = vrot.lane.b32.xlu0 %v749, 10
        %v911 = vpop.permute.xlu0 %910
        %912 = vrot.lane.b32.xlu0 %v753, 10
        %v913 = vpop.permute.xlu0 %912
        %914 = vrot.lane.b32.xlu0 %v734, 10
        %v915 = vpop.permute.xlu0 %914
        %916 = vrot.lane.b32.xlu0 %v738, 10
        %v917 = vpop.permute.xlu0 %916
        %918 = vrot.lane.b32.xlu0 %v742, 10
        %v919 = vpop.permute.xlu0 %918
        %920 = vrot.lane.b32.xlu0 %v746, 10
        %v921 = vpop.permute.xlu0 %920
        %922 = vrot.lane.b32.xlu0 %v750, 10
        %v923 = vpop.permute.xlu0 %922
        %924 = vrot.lane.b32.xlu0 %v754, 10
        %v925 = vpop.permute.xlu0 %924
        %vm926 = vcmp.lt.s32.totalorder %v804, 10
        %v927 = vsel %vm926, %v903, %v915
        %v928 = vsel %vm926, %v905, %v917
        %v929 = vsel %vm926, %v907, %v919
        %v930 = vsel %vm926, %v909, %v921
        %v931 = vsel %vm926, %v911, %v923
        %v932 = vsel %vm926, %v913, %v925
        %v933 = vsel %vm926, %v891, %v903
        %v934 = vsel %vm926, %v893, %v905
        %v935 = vsel %vm926, %v895, %v907
        %v936 = vsel %vm926, %v897, %v909
        %v937 = vsel %vm926, %v899, %v911
        %v938 = vsel %vm926, %v901, %v913
        %v939 = vsel %vm926, %v879, %v891
        %v940 = vsel %vm926, %v881, %v893
        %v941 = vsel %vm926, %v883, %v895
        %v942 = vsel %vm926, %v885, %v897
        %v943 = vsel %vm926, %v887, %v899
        %v944 = vsel %vm926, %v889, %v901
        %v945 = vsel %vm926, %v915, %v879
        %v946 = vsel %vm926, %v917, %v881
        %v947 = vsel %vm926, %v919, %v883
        %v948 = vsel %vm926, %v921, %v885
        %v949 = vsel %vm926, %v923, %v887
        %v950 = vsel %vm926, %v925, %v889
        %951 = vset.pattern.permute.xlu0 2
        %952 = vperm.xlu0 %951, %v374
        %v953 = vpop.permute.xlu0 %952
        %955 = vset.pattern.permute.xlu0 2
        %956 = vperm.xlu0 %955, %v375
        %v957 = vpop.permute.xlu0 %956
        %959 = vset.pattern.permute.xlu0 2
        %960 = vperm.xlu0 %959, %v376
        %v961 = vpop.permute.xlu0 %960
        %963 = vset.pattern.permute.xlu0 2
        %964 = vperm.xlu0 %963, %v377
        %v965 = vpop.permute.xlu0 %964
        %967 = vset.pattern.permute.xlu0 2
        %968 = vperm.xlu0 %967, %v378
        %v969 = vpop.permute.xlu0 %968
        %971 = vset.pattern.permute.xlu0 2
        %972 = vperm.xlu0 %971, %v379
        %v973 = vpop.permute.xlu0 %972
        %v975 = vmul.f32 %v953, %v945
        %v976 = vmul.f32 %v953, %v939
        %v977 = vmul.f32 %v953, %v933
        %v978 = vmul.f32 %v953, %v927
        %v979 = vmul.f32 %v957, %v946
        %v980 = vmul.f32 %v957, %v940
        %v981 = vmul.f32 %v957, %v934
        %v982 = vmul.f32 %v957, %v928
        %v983 = vmul.f32 %v961, %v947
        %v984 = vmul.f32 %v961, %v941
        %v985 = vmul.f32 %v961, %v935
        %v986 = vmul.f32 %v961, %v929
        %v987 = vmul.f32 %v965, %v948
        %v988 = vmul.f32 %v965, %v942
        %v989 = vmul.f32 %v965, %v936
        %v990 = vmul.f32 %v965, %v930
        %v991 = vmul.f32 %v969, %v949
        %v992 = vmul.f32 %v969, %v943
        %v993 = vmul.f32 %v969, %v937
        %v994 = vmul.f32 %v969, %v931
        %v995 = vmul.f32 %v973, %v950
        %v996 = vmul.f32 %v973, %v944
        %v997 = vmul.f32 %v973, %v938
        %v998 = vmul.f32 %v973, %v932
        %v999 = vadd.f32 %v854, %v975
        %v1000 = vadd.f32 %v855, %v976
        %v1001 = vadd.f32 %v856, %v977
        %v1002 = vadd.f32 %v857, %v978
        %v1003 = vadd.f32 %v858, %v979
        %v1004 = vadd.f32 %v859, %v980
        %v1005 = vadd.f32 %v860, %v981
        %v1006 = vadd.f32 %v861, %v982
        %v1007 = vadd.f32 %v862, %v983
        %v1008 = vadd.f32 %v863, %v984
        %v1009 = vadd.f32 %v864, %v985
        %v1010 = vadd.f32 %v865, %v986
        %v1011 = vadd.f32 %v866, %v987
        %v1012 = vadd.f32 %v867, %v988
        %v1013 = vadd.f32 %v868, %v989
        %v1014 = vadd.f32 %v869, %v990
        %v1015 = vadd.f32 %v870, %v991
        %v1016 = vadd.f32 %v871, %v992
        %v1017 = vadd.f32 %v872, %v993
        %v1018 = vadd.f32 %v873, %v994
        %v1019 = vadd.f32 %v874, %v995
        %v1020 = vadd.f32 %v875, %v996
        %v1021 = vadd.f32 %v876, %v997
        %v1022 = vadd.f32 %v877, %v998
        %1023 = vrot.lane.b32.xlu0 %v731, 9
        %v1024 = vpop.permute.xlu0 %1023
        %1025 = vrot.lane.b32.xlu0 %v735, 9
        %v1026 = vpop.permute.xlu0 %1025
        %1027 = vrot.lane.b32.xlu0 %v739, 9
        %v1028 = vpop.permute.xlu0 %1027
        %1029 = vrot.lane.b32.xlu0 %v743, 9
        %v1030 = vpop.permute.xlu0 %1029
        %1031 = vrot.lane.b32.xlu0 %v747, 9
        %v1032 = vpop.permute.xlu0 %1031
        %1033 = vrot.lane.b32.xlu0 %v751, 9
        %v1034 = vpop.permute.xlu0 %1033
        %1035 = vrot.lane.b32.xlu0 %v732, 9
        %v1036 = vpop.permute.xlu0 %1035
        %1037 = vrot.lane.b32.xlu0 %v736, 9
        %v1038 = vpop.permute.xlu0 %1037
        %1039 = vrot.lane.b32.xlu0 %v740, 9
        %v1040 = vpop.permute.xlu0 %1039
        %1041 = vrot.lane.b32.xlu0 %v744, 9
        %v1042 = vpop.permute.xlu0 %1041
        %1043 = vrot.lane.b32.xlu0 %v748, 9
        %v1044 = vpop.permute.xlu0 %1043
        %1045 = vrot.lane.b32.xlu0 %v752, 9
        %v1046 = vpop.permute.xlu0 %1045
        %1047 = vrot.lane.b32.xlu0 %v733, 9
        %v1048 = vpop.permute.xlu0 %1047
        %1049 = vrot.lane.b32.xlu0 %v737, 9
        %v1050 = vpop.permute.xlu0 %1049
        %1051 = vrot.lane.b32.xlu0 %v741, 9
        %v1052 = vpop.permute.xlu0 %1051
        %1053 = vrot.lane.b32.xlu0 %v745, 9
        %v1054 = vpop.permute.xlu0 %1053
        %1055 = vrot.lane.b32.xlu0 %v749, 9
        %v1056 = vpop.permute.xlu0 %1055
        %1057 = vrot.lane.b32.xlu0 %v753, 9
        %v1058 = vpop.permute.xlu0 %1057
        %1059 = vrot.lane.b32.xlu0 %v734, 9
        %v1060 = vpop.permute.xlu0 %1059
        %1061 = vrot.lane.b32.xlu0 %v738, 9
        %v1062 = vpop.permute.xlu0 %1061
        %1063 = vrot.lane.b32.xlu0 %v742, 9
        %v1064 = vpop.permute.xlu0 %1063
        %1065 = vrot.lane.b32.xlu0 %v746, 9
        %v1066 = vpop.permute.xlu0 %1065
        %1067 = vrot.lane.b32.xlu0 %v750, 9
        %v1068 = vpop.permute.xlu0 %1067
        %1069 = vrot.lane.b32.xlu0 %v754, 9
        %v1070 = vpop.permute.xlu0 %1069
        %vm1071 = vcmp.lt.s32.totalorder %v804, 9
        %v1072 = vsel %vm1071, %v1048, %v1060
        %v1073 = vsel %vm1071, %v1050, %v1062
        %v1074 = vsel %vm1071, %v1052, %v1064
        %v1075 = vsel %vm1071, %v1054, %v1066
        %v1076 = vsel %vm1071, %v1056, %v1068
        %v1077 = vsel %vm1071, %v1058, %v1070
        %v1078 = vsel %vm1071, %v1036, %v1048
        %v1079 = vsel %vm1071, %v1038, %v1050
        %v1080 = vsel %vm1071, %v1040, %v1052
        %v1081 = vsel %vm1071, %v1042, %v1054
        %v1082 = vsel %vm1071, %v1044, %v1056
        %v1083 = vsel %vm1071, %v1046, %v1058
        %v1084 = vsel %vm1071, %v1024, %v1036
        %v1085 = vsel %vm1071, %v1026, %v1038
        %v1086 = vsel %vm1071, %v1028, %v1040
        %v1087 = vsel %vm1071, %v1030, %v1042
        %v1088 = vsel %vm1071, %v1032, %v1044
        %v1089 = vsel %vm1071, %v1034, %v1046
        %v1090 = vsel %vm1071, %v1060, %v1024
        %v1091 = vsel %vm1071, %v1062, %v1026
        %v1092 = vsel %vm1071, %v1064, %v1028
        %v1093 = vsel %vm1071, %v1066, %v1030
        %v1094 = vsel %vm1071, %v1068, %v1032
        %v1095 = vsel %vm1071, %v1070, %v1034
        %1096 = vset.pattern.permute.xlu0 3
        %1097 = vperm.xlu0 %1096, %v374
        %v1098 = vpop.permute.xlu0 %1097
        %1100 = vset.pattern.permute.xlu0 3
        %1101 = vperm.xlu0 %1100, %v375
        %v1102 = vpop.permute.xlu0 %1101
        %1104 = vset.pattern.permute.xlu0 3
        %1105 = vperm.xlu0 %1104, %v376
        %v1106 = vpop.permute.xlu0 %1105
        %1108 = vset.pattern.permute.xlu0 3
        %1109 = vperm.xlu0 %1108, %v377
        %v1110 = vpop.permute.xlu0 %1109
        %1112 = vset.pattern.permute.xlu0 3
        %1113 = vperm.xlu0 %1112, %v378
        %v1114 = vpop.permute.xlu0 %1113
        %1116 = vset.pattern.permute.xlu0 3
        %1117 = vperm.xlu0 %1116, %v379
        %v1118 = vpop.permute.xlu0 %1117
        %v1120 = vmul.f32 %v1098, %v1090
        %v1121 = vmul.f32 %v1098, %v1084
        %v1122 = vmul.f32 %v1098, %v1078
        %v1123 = vmul.f32 %v1098, %v1072
        %v1124 = vmul.f32 %v1102, %v1091
        %v1125 = vmul.f32 %v1102, %v1085
        %v1126 = vmul.f32 %v1102, %v1079
        %v1127 = vmul.f32 %v1102, %v1073
        %v1128 = vmul.f32 %v1106, %v1092
        %v1129 = vmul.f32 %v1106, %v1086
        %v1130 = vmul.f32 %v1106, %v1080
        %v1131 = vmul.f32 %v1106, %v1074
        %v1132 = vmul.f32 %v1110, %v1093
        %v1133 = vmul.f32 %v1110, %v1087
        %v1134 = vmul.f32 %v1110, %v1081
        %v1135 = vmul.f32 %v1110, %v1075
        %v1136 = vmul.f32 %v1114, %v1094
        %v1137 = vmul.f32 %v1114, %v1088
        %v1138 = vmul.f32 %v1114, %v1082
        %v1139 = vmul.f32 %v1114, %v1076
        %v1140 = vmul.f32 %v1118, %v1095
        %v1141 = vmul.f32 %v1118, %v1089
        %v1142 = vmul.f32 %v1118, %v1083
        %v1143 = vmul.f32 %v1118, %v1077
        %v1144 = vadd.f32 %v999, %v1120
        %v1145 = vadd.f32 %v1000, %v1121
        %v1146 = vadd.f32 %v1001, %v1122
        %v1147 = vadd.f32 %v1002, %v1123
        %v1148 = vadd.f32 %v1003, %v1124
        %v1149 = vadd.f32 %v1004, %v1125
        %v1150 = vadd.f32 %v1005, %v1126
        %v1151 = vadd.f32 %v1006, %v1127
        %v1152 = vadd.f32 %v1007, %v1128
        %v1153 = vadd.f32 %v1008, %v1129
        %v1154 = vadd.f32 %v1009, %v1130
        %v1155 = vadd.f32 %v1010, %v1131
        %v1156 = vadd.f32 %v1011, %v1132
        %v1157 = vadd.f32 %v1012, %v1133
        %v1158 = vadd.f32 %v1013, %v1134
        %v1159 = vadd.f32 %v1014, %v1135
        %v1160 = vadd.f32 %v1015, %v1136
        %v1161 = vadd.f32 %v1016, %v1137
        %v1162 = vadd.f32 %v1017, %v1138
        %v1163 = vadd.f32 %v1018, %v1139
        %v1164 = vadd.f32 %v1019, %v1140
        %v1165 = vadd.f32 %v1020, %v1141
        %v1166 = vadd.f32 %v1021, %v1142
        %v1167 = vadd.f32 %v1022, %v1143
        %1168 = vrot.lane.b32.xlu0 %v731, 1
        %v1169 = vpop.permute.xlu0 %1168
        %1170 = vrot.lane.b32.xlu0 %v735, 1
        %v1171 = vpop.permute.xlu0 %1170
        %1172 = vrot.lane.b32.xlu0 %v739, 1
        %v1173 = vpop.permute.xlu0 %1172
        %1174 = vrot.lane.b32.xlu0 %v743, 1
        %v1175 = vpop.permute.xlu0 %1174
        %1176 = vrot.lane.b32.xlu0 %v747, 1
        %v1177 = vpop.permute.xlu0 %1176
        %1178 = vrot.lane.b32.xlu0 %v751, 1
        %v1179 = vpop.permute.xlu0 %1178
        %1180 = vrot.lane.b32.xlu0 %v732, 1
        %v1181 = vpop.permute.xlu0 %1180
        %1182 = vrot.lane.b32.xlu0 %v736, 1
        %v1183 = vpop.permute.xlu0 %1182
        %1184 = vrot.lane.b32.xlu0 %v740, 1
        %v1185 = vpop.permute.xlu0 %1184
        %1186 = vrot.lane.b32.xlu0 %v744, 1
        %v1187 = vpop.permute.xlu0 %1186
        %1188 = vrot.lane.b32.xlu0 %v748, 1
        %v1189 = vpop.permute.xlu0 %1188
        %1190 = vrot.lane.b32.xlu0 %v752, 1
        %v1191 = vpop.permute.xlu0 %1190
        %1192 = vrot.lane.b32.xlu0 %v733, 1
        %v1193 = vpop.permute.xlu0 %1192
        %1194 = vrot.lane.b32.xlu0 %v737, 1
        %v1195 = vpop.permute.xlu0 %1194
        %1196 = vrot.lane.b32.xlu0 %v741, 1
        %v1197 = vpop.permute.xlu0 %1196
        %1198 = vrot.lane.b32.xlu0 %v745, 1
        %v1199 = vpop.permute.xlu0 %1198
        %1200 = vrot.lane.b32.xlu0 %v749, 1
        %v1201 = vpop.permute.xlu0 %1200
        %1202 = vrot.lane.b32.xlu0 %v753, 1
        %v1203 = vpop.permute.xlu0 %1202
        %1204 = vrot.lane.b32.xlu0 %v734, 1
        %v1205 = vpop.permute.xlu0 %1204
        %1206 = vrot.lane.b32.xlu0 %v738, 1
        %v1207 = vpop.permute.xlu0 %1206
        %1208 = vrot.lane.b32.xlu0 %v742, 1
        %v1209 = vpop.permute.xlu0 %1208
        %1210 = vrot.lane.b32.xlu0 %v746, 1
        %v1211 = vpop.permute.xlu0 %1210
        %1212 = vrot.lane.b32.xlu0 %v750, 1
        %v1213 = vpop.permute.xlu0 %1212
        %1214 = vrot.lane.b32.xlu0 %v754, 1
        %v1215 = vpop.permute.xlu0 %1214
        %vm1216 = vcmp.lt.s32.totalorder %v804, 1
        %v1217 = vsel %vm1216, %v1193, %v1205
        %v1218 = vsel %vm1216, %v1195, %v1207
        %v1219 = vsel %vm1216, %v1197, %v1209
        %v1220 = vsel %vm1216, %v1199, %v1211
        %v1221 = vsel %vm1216, %v1201, %v1213
        %v1222 = vsel %vm1216, %v1203, %v1215
        %v1223 = vsel %vm1216, %v1181, %v1193
        %v1224 = vsel %vm1216, %v1183, %v1195
        %v1225 = vsel %vm1216, %v1185, %v1197
        %v1226 = vsel %vm1216, %v1187, %v1199
        %v1227 = vsel %vm1216, %v1189, %v1201
        %v1228 = vsel %vm1216, %v1191, %v1203
        %v1229 = vsel %vm1216, %v1169, %v1181
        %v1230 = vsel %vm1216, %v1171, %v1183
        %v1231 = vsel %vm1216, %v1173, %v1185
        %v1232 = vsel %vm1216, %v1175, %v1187
        %v1233 = vsel %vm1216, %v1177, %v1189
        %v1234 = vsel %vm1216, %v1179, %v1191
        %v1235 = vsel %vm1216, %v1205, %v1169
        %v1236 = vsel %vm1216, %v1207, %v1171
        %v1237 = vsel %vm1216, %v1209, %v1173
        %v1238 = vsel %vm1216, %v1211, %v1175
        %v1239 = vsel %vm1216, %v1213, %v1177
        %v1240 = vsel %vm1216, %v1215, %v1179
        %1241 = vset.pattern.permute.xlu0 4
        %1242 = vperm.xlu0 %1241, %v374
        %v1243 = vpop.permute.xlu0 %1242
        %1245 = vset.pattern.permute.xlu0 4
        %1246 = vperm.xlu0 %1245, %v375
        %v1247 = vpop.permute.xlu0 %1246
        %1249 = vset.pattern.permute.xlu0 4
        %1250 = vperm.xlu0 %1249, %v376
        %v1251 = vpop.permute.xlu0 %1250
        %1253 = vset.pattern.permute.xlu0 4
        %1254 = vperm.xlu0 %1253, %v377
        %v1255 = vpop.permute.xlu0 %1254
        %1257 = vset.pattern.permute.xlu0 4
        %1258 = vperm.xlu0 %1257, %v378
        %v1259 = vpop.permute.xlu0 %1258
        %1261 = vset.pattern.permute.xlu0 4
        %1262 = vperm.xlu0 %1261, %v379
        %v1263 = vpop.permute.xlu0 %1262
        %v1265 = vmul.f32 %v1243, %v1235
        %v1266 = vmul.f32 %v1243, %v1229
        %v1267 = vmul.f32 %v1243, %v1223
        %v1268 = vmul.f32 %v1243, %v1217
        %v1269 = vmul.f32 %v1247, %v1236
        %v1270 = vmul.f32 %v1247, %v1230
        %v1271 = vmul.f32 %v1247, %v1224
        %v1272 = vmul.f32 %v1247, %v1218
        %v1273 = vmul.f32 %v1251, %v1237
        %v1274 = vmul.f32 %v1251, %v1231
        %v1275 = vmul.f32 %v1251, %v1225
        %v1276 = vmul.f32 %v1251, %v1219
        %v1277 = vmul.f32 %v1255, %v1238
        %v1278 = vmul.f32 %v1255, %v1232
        %v1279 = vmul.f32 %v1255, %v1226
        %v1280 = vmul.f32 %v1255, %v1220
        %v1281 = vmul.f32 %v1259, %v1239
        %v1282 = vmul.f32 %v1259, %v1233
        %v1283 = vmul.f32 %v1259, %v1227
        %v1284 = vmul.f32 %v1259, %v1221
        %v1285 = vmul.f32 %v1263, %v1240
        %v1286 = vmul.f32 %v1263, %v1234
        %v1287 = vmul.f32 %v1263, %v1228
        %v1288 = vmul.f32 %v1263, %v1222
        %v1289 = vadd.f32 %v1144, %v1265
        %v1290 = vadd.f32 %v1145, %v1266
        %v1291 = vadd.f32 %v1146, %v1267
        %v1292 = vadd.f32 %v1147, %v1268
        %v1293 = vadd.f32 %v1148, %v1269
        %v1294 = vadd.f32 %v1149, %v1270
        %v1295 = vadd.f32 %v1150, %v1271
        %v1296 = vadd.f32 %v1151, %v1272
        %v1297 = vadd.f32 %v1152, %v1273
        %v1298 = vadd.f32 %v1153, %v1274
        %v1299 = vadd.f32 %v1154, %v1275
        %v1300 = vadd.f32 %v1155, %v1276
        %v1301 = vadd.f32 %v1156, %v1277
        %v1302 = vadd.f32 %v1157, %v1278
        %v1303 = vadd.f32 %v1158, %v1279
        %v1304 = vadd.f32 %v1159, %v1280
        %v1305 = vadd.f32 %v1160, %v1281
        %v1306 = vadd.f32 %v1161, %v1282
        %v1307 = vadd.f32 %v1162, %v1283
        %v1308 = vadd.f32 %v1163, %v1284
        %v1309 = vadd.f32 %v1164, %v1285
        %v1310 = vadd.f32 %v1165, %v1286
        %v1311 = vadd.f32 %v1166, %v1287
        %v1312 = vadd.f32 %v1167, %v1288
        %1313 = vset.pattern.permute.xlu0 5
        %1314 = vperm.xlu0 %1313, %v374
        %v1315 = vpop.permute.xlu0 %1314
        %1317 = vset.pattern.permute.xlu0 5
        %1318 = vperm.xlu0 %1317, %v375
        %v1319 = vpop.permute.xlu0 %1318
        %1321 = vset.pattern.permute.xlu0 5
        %1322 = vperm.xlu0 %1321, %v376
        %v1323 = vpop.permute.xlu0 %1322
        %1325 = vset.pattern.permute.xlu0 5
        %1326 = vperm.xlu0 %1325, %v377
        %v1327 = vpop.permute.xlu0 %1326
        %1329 = vset.pattern.permute.xlu0 5
        %1330 = vperm.xlu0 %1329, %v378
        %v1331 = vpop.permute.xlu0 %1330
        %1333 = vset.pattern.permute.xlu0 5
        %1334 = vperm.xlu0 %1333, %v379
        %v1335 = vpop.permute.xlu0 %1334
        %v1337 = vmul.f32 %v1315, %v731
        %v1338 = vmul.f32 %v1315, %v732
        %v1339 = vmul.f32 %v1315, %v733
        %v1340 = vmul.f32 %v1315, %v734
        %v1341 = vmul.f32 %v1319, %v735
        %v1342 = vmul.f32 %v1319, %v736
        %v1343 = vmul.f32 %v1319, %v737
        %v1344 = vmul.f32 %v1319, %v738
        %v1345 = vmul.f32 %v1323, %v739
        %v1346 = vmul.f32 %v1323, %v740
        %v1347 = vmul.f32 %v1323, %v741
        %v1348 = vmul.f32 %v1323, %v742
        %v1349 = vmul.f32 %v1327, %v743
        %v1350 = vmul.f32 %v1327, %v744
        %v1351 = vmul.f32 %v1327, %v745
        %v1352 = vmul.f32 %v1327, %v746
        %v1353 = vmul.f32 %v1331, %v747
        %v1354 = vmul.f32 %v1331, %v748
        %v1355 = vmul.f32 %v1331, %v749
        %v1356 = vmul.f32 %v1331, %v750
        %v1357 = vmul.f32 %v1335, %v751
        %v1358 = vmul.f32 %v1335, %v752
        %v1359 = vmul.f32 %v1335, %v753
        %v1360 = vmul.f32 %v1335, %v754
        %v1361 = vadd.f32 %v1289, %v1337
        %v1362 = vadd.f32 %v1290, %v1338
        %v1363 = vadd.f32 %v1291, %v1339
        %v1364 = vadd.f32 %v1292, %v1340
        %v1365 = vadd.f32 %v1293, %v1341
        %v1366 = vadd.f32 %v1294, %v1342
        %v1367 = vadd.f32 %v1295, %v1343
        %v1368 = vadd.f32 %v1296, %v1344
        %v1369 = vadd.f32 %v1297, %v1345
        %v1370 = vadd.f32 %v1298, %v1346
        %v1371 = vadd.f32 %v1299, %v1347
        %v1372 = vadd.f32 %v1300, %v1348
        %v1373 = vadd.f32 %v1301, %v1349
        %v1374 = vadd.f32 %v1302, %v1350
        %v1375 = vadd.f32 %v1303, %v1351
        %v1376 = vadd.f32 %v1304, %v1352
        %v1377 = vadd.f32 %v1305, %v1353
        %v1378 = vadd.f32 %v1306, %v1354
        %v1379 = vadd.f32 %v1307, %v1355
        %v1380 = vadd.f32 %v1308, %v1356
        %v1381 = vadd.f32 %v1309, %v1357
        %v1382 = vadd.f32 %v1310, %v1358
        %v1383 = vadd.f32 %v1311, %v1359
        %v1384 = vadd.f32 %v1312, %v1360
        %1385 = vrot.lane.b32.xlu0 %v731, 127
        %v1386 = vpop.permute.xlu0 %1385
        %1387 = vrot.lane.b32.xlu0 %v735, 127
        %v1388 = vpop.permute.xlu0 %1387
        %1389 = vrot.lane.b32.xlu0 %v739, 127
        %v1390 = vpop.permute.xlu0 %1389
        %1391 = vrot.lane.b32.xlu0 %v743, 127
        %v1392 = vpop.permute.xlu0 %1391
        %1393 = vrot.lane.b32.xlu0 %v747, 127
        %v1394 = vpop.permute.xlu0 %1393
        %1395 = vrot.lane.b32.xlu0 %v751, 127
        %v1396 = vpop.permute.xlu0 %1395
        %1397 = vrot.lane.b32.xlu0 %v732, 127
        %v1398 = vpop.permute.xlu0 %1397
        %1399 = vrot.lane.b32.xlu0 %v736, 127
        %v1400 = vpop.permute.xlu0 %1399
        %1401 = vrot.lane.b32.xlu0 %v740, 127
        %v1402 = vpop.permute.xlu0 %1401
        %1403 = vrot.lane.b32.xlu0 %v744, 127
        %v1404 = vpop.permute.xlu0 %1403
        %1405 = vrot.lane.b32.xlu0 %v748, 127
        %v1406 = vpop.permute.xlu0 %1405
        %1407 = vrot.lane.b32.xlu0 %v752, 127
        %v1408 = vpop.permute.xlu0 %1407
        %1409 = vrot.lane.b32.xlu0 %v733, 127
        %v1410 = vpop.permute.xlu0 %1409
        %1411 = vrot.lane.b32.xlu0 %v737, 127
        %v1412 = vpop.permute.xlu0 %1411
        %1413 = vrot.lane.b32.xlu0 %v741, 127
        %v1414 = vpop.permute.xlu0 %1413
        %1415 = vrot.lane.b32.xlu0 %v745, 127
        %v1416 = vpop.permute.xlu0 %1415
        %1417 = vrot.lane.b32.xlu0 %v749, 127
        %v1418 = vpop.permute.xlu0 %1417
        %1419 = vrot.lane.b32.xlu0 %v753, 127
        %v1420 = vpop.permute.xlu0 %1419
        %1421 = vrot.lane.b32.xlu0 %v734, 127
        %v1422 = vpop.permute.xlu0 %1421
        %1423 = vrot.lane.b32.xlu0 %v738, 127
        %v1424 = vpop.permute.xlu0 %1423
        %1425 = vrot.lane.b32.xlu0 %v742, 127
        %v1426 = vpop.permute.xlu0 %1425
        %1427 = vrot.lane.b32.xlu0 %v746, 127
        %v1428 = vpop.permute.xlu0 %1427
        %1429 = vrot.lane.b32.xlu0 %v750, 127
        %v1430 = vpop.permute.xlu0 %1429
        %1431 = vrot.lane.b32.xlu0 %v754, 127
        %v1432 = vpop.permute.xlu0 %1431
        %vm1433 = vcmp.lt.s32.totalorder %v804, 127
        %v1434 = vsel %vm1433, %v1410, %v1422
        %v1435 = vsel %vm1433, %v1412, %v1424
        %v1436 = vsel %vm1433, %v1414, %v1426
        %v1437 = vsel %vm1433, %v1416, %v1428
        %v1438 = vsel %vm1433, %v1418, %v1430
        %v1439 = vsel %vm1433, %v1420, %v1432
        %v1440 = vsel %vm1433, %v1398, %v1410
        %v1441 = vsel %vm1433, %v1400, %v1412
        %v1442 = vsel %vm1433, %v1402, %v1414
        %v1443 = vsel %vm1433, %v1404, %v1416
        %v1444 = vsel %vm1433, %v1406, %v1418
        %v1445 = vsel %vm1433, %v1408, %v1420
        %v1446 = vsel %vm1433, %v1386, %v1398
        %v1447 = vsel %vm1433, %v1388, %v1400
        %v1448 = vsel %vm1433, %v1390, %v1402
        %v1449 = vsel %vm1433, %v1392, %v1404
        %v1450 = vsel %vm1433, %v1394, %v1406
        %v1451 = vsel %vm1433, %v1396, %v1408
        %v1452 = vsel %vm1433, %v1422, %v1386
        %v1453 = vsel %vm1433, %v1424, %v1388
        %v1454 = vsel %vm1433, %v1426, %v1390
        %v1455 = vsel %vm1433, %v1428, %v1392
        %v1456 = vsel %vm1433, %v1430, %v1394
        %v1457 = vsel %vm1433, %v1432, %v1396
        %1458 = vset.pattern.permute.xlu0 6
        %1459 = vperm.xlu0 %1458, %v374
        %v1460 = vpop.permute.xlu0 %1459
        %1462 = vset.pattern.permute.xlu0 6
        %1463 = vperm.xlu0 %1462, %v375
        %v1464 = vpop.permute.xlu0 %1463
        %1466 = vset.pattern.permute.xlu0 6
        %1467 = vperm.xlu0 %1466, %v376
        %v1468 = vpop.permute.xlu0 %1467
        %1470 = vset.pattern.permute.xlu0 6
        %1471 = vperm.xlu0 %1470, %v377
        %v1472 = vpop.permute.xlu0 %1471
        %1474 = vset.pattern.permute.xlu0 6
        %1475 = vperm.xlu0 %1474, %v378
        %v1476 = vpop.permute.xlu0 %1475
        %1478 = vset.pattern.permute.xlu0 6
        %1479 = vperm.xlu0 %1478, %v379
        %v1480 = vpop.permute.xlu0 %1479
        %v1482 = vmul.f32 %v1460, %v1446
        %v1483 = vmul.f32 %v1460, %v1440
        %v1484 = vmul.f32 %v1460, %v1434
        %v1485 = vmul.f32 %v1460, %v1452
        %v1486 = vmul.f32 %v1464, %v1447
        %v1487 = vmul.f32 %v1464, %v1441
        %v1488 = vmul.f32 %v1464, %v1435
        %v1489 = vmul.f32 %v1464, %v1453
        %v1490 = vmul.f32 %v1468, %v1448
        %v1491 = vmul.f32 %v1468, %v1442
        %v1492 = vmul.f32 %v1468, %v1436
        %v1493 = vmul.f32 %v1468, %v1454
        %v1494 = vmul.f32 %v1472, %v1449
        %v1495 = vmul.f32 %v1472, %v1443
        %v1496 = vmul.f32 %v1472, %v1437
        %v1497 = vmul.f32 %v1472, %v1455
        %v1498 = vmul.f32 %v1476, %v1450
        %v1499 = vmul.f32 %v1476, %v1444
        %v1500 = vmul.f32 %v1476, %v1438
        %v1501 = vmul.f32 %v1476, %v1456
        %v1502 = vmul.f32 %v1480, %v1451
        %v1503 = vmul.f32 %v1480, %v1445
        %v1504 = vmul.f32 %v1480, %v1439
        %v1505 = vmul.f32 %v1480, %v1457
        %v1506 = vadd.f32 %v1361, %v1482
        %v1507 = vadd.f32 %v1362, %v1483
        %v1508 = vadd.f32 %v1363, %v1484
        %v1509 = vadd.f32 %v1364, %v1485
        %v1510 = vadd.f32 %v1365, %v1486
        %v1511 = vadd.f32 %v1366, %v1487
        %v1512 = vadd.f32 %v1367, %v1488
        %v1513 = vadd.f32 %v1368, %v1489
        %v1514 = vadd.f32 %v1369, %v1490
        %v1515 = vadd.f32 %v1370, %v1491
        %v1516 = vadd.f32 %v1371, %v1492
        %v1517 = vadd.f32 %v1372, %v1493
        %v1518 = vadd.f32 %v1373, %v1494
        %v1519 = vadd.f32 %v1374, %v1495
        %v1520 = vadd.f32 %v1375, %v1496
        %v1521 = vadd.f32 %v1376, %v1497
        %v1522 = vadd.f32 %v1377, %v1498
        %v1523 = vadd.f32 %v1378, %v1499
        %v1524 = vadd.f32 %v1379, %v1500
        %v1525 = vadd.f32 %v1380, %v1501
        %v1526 = vadd.f32 %v1381, %v1502
        %v1527 = vadd.f32 %v1382, %v1503
        %v1528 = vadd.f32 %v1383, %v1504
        %v1529 = vadd.f32 %v1384, %v1505
        %1530 = vrot.lane.b32.xlu0 %v731, 119
        %v1531 = vpop.permute.xlu0 %1530
        %1532 = vrot.lane.b32.xlu0 %v735, 119
        %v1533 = vpop.permute.xlu0 %1532
        %1534 = vrot.lane.b32.xlu0 %v739, 119
        %v1535 = vpop.permute.xlu0 %1534
        %1536 = vrot.lane.b32.xlu0 %v743, 119
        %v1537 = vpop.permute.xlu0 %1536
        %1538 = vrot.lane.b32.xlu0 %v747, 119
        %v1539 = vpop.permute.xlu0 %1538
        %1540 = vrot.lane.b32.xlu0 %v751, 119
        %v1541 = vpop.permute.xlu0 %1540
        %1542 = vrot.lane.b32.xlu0 %v732, 119
        %v1543 = vpop.permute.xlu0 %1542
        %1544 = vrot.lane.b32.xlu0 %v736, 119
        %v1545 = vpop.permute.xlu0 %1544
        %1546 = vrot.lane.b32.xlu0 %v740, 119
        %v1547 = vpop.permute.xlu0 %1546
        %1548 = vrot.lane.b32.xlu0 %v744, 119
        %v1549 = vpop.permute.xlu0 %1548
        %1550 = vrot.lane.b32.xlu0 %v748, 119
        %v1551 = vpop.permute.xlu0 %1550
        %1552 = vrot.lane.b32.xlu0 %v752, 119
        %v1553 = vpop.permute.xlu0 %1552
        %1554 = vrot.lane.b32.xlu0 %v733, 119
        %v1555 = vpop.permute.xlu0 %1554
        %1556 = vrot.lane.b32.xlu0 %v737, 119
        %v1557 = vpop.permute.xlu0 %1556
        %1558 = vrot.lane.b32.xlu0 %v741, 119
        %v1559 = vpop.permute.xlu0 %1558
        %1560 = vrot.lane.b32.xlu0 %v745, 119
        %v1561 = vpop.permute.xlu0 %1560
        %1562 = vrot.lane.b32.xlu0 %v749, 119
        %v1563 = vpop.permute.xlu0 %1562
        %1564 = vrot.lane.b32.xlu0 %v753, 119
        %v1565 = vpop.permute.xlu0 %1564
        %1566 = vrot.lane.b32.xlu0 %v734, 119
        %v1567 = vpop.permute.xlu0 %1566
        %1568 = vrot.lane.b32.xlu0 %v738, 119
        %v1569 = vpop.permute.xlu0 %1568
        %1570 = vrot.lane.b32.xlu0 %v742, 119
        %v1571 = vpop.permute.xlu0 %1570
        %1572 = vrot.lane.b32.xlu0 %v746, 119
        %v1573 = vpop.permute.xlu0 %1572
        %1574 = vrot.lane.b32.xlu0 %v750, 119
        %v1575 = vpop.permute.xlu0 %1574
        %1576 = vrot.lane.b32.xlu0 %v754, 119
        %v1577 = vpop.permute.xlu0 %1576
        %vm1578 = vcmp.lt.s32.totalorder %v804, 119
        %v1579 = vsel %vm1578, %v1555, %v1567
        %v1580 = vsel %vm1578, %v1557, %v1569
        %v1581 = vsel %vm1578, %v1559, %v1571
        %v1582 = vsel %vm1578, %v1561, %v1573
        %v1583 = vsel %vm1578, %v1563, %v1575
        %v1584 = vsel %vm1578, %v1565, %v1577
        %v1585 = vsel %vm1578, %v1543, %v1555
        %v1586 = vsel %vm1578, %v1545, %v1557
        %v1587 = vsel %vm1578, %v1547, %v1559
        %v1588 = vsel %vm1578, %v1549, %v1561
        %v1589 = vsel %vm1578, %v1551, %v1563
        %v1590 = vsel %vm1578, %v1553, %v1565
        %v1591 = vsel %vm1578, %v1531, %v1543
        %v1592 = vsel %vm1578, %v1533, %v1545
        %v1593 = vsel %vm1578, %v1535, %v1547
        %v1594 = vsel %vm1578, %v1537, %v1549
        %v1595 = vsel %vm1578, %v1539, %v1551
        %v1596 = vsel %vm1578, %v1541, %v1553
        %v1597 = vsel %vm1578, %v1567, %v1531
        %v1598 = vsel %vm1578, %v1569, %v1533
        %v1599 = vsel %vm1578, %v1571, %v1535
        %v1600 = vsel %vm1578, %v1573, %v1537
        %v1601 = vsel %vm1578, %v1575, %v1539
        %v1602 = vsel %vm1578, %v1577, %v1541
        %1603 = vset.pattern.permute.xlu0 7
        %1604 = vperm.xlu0 %1603, %v374
        %v1605 = vpop.permute.xlu0 %1604
        %1607 = vset.pattern.permute.xlu0 7
        %1608 = vperm.xlu0 %1607, %v375
        %v1609 = vpop.permute.xlu0 %1608
        %1611 = vset.pattern.permute.xlu0 7
        %1612 = vperm.xlu0 %1611, %v376
        %v1613 = vpop.permute.xlu0 %1612
        %1615 = vset.pattern.permute.xlu0 7
        %1616 = vperm.xlu0 %1615, %v377
        %v1617 = vpop.permute.xlu0 %1616
        %1619 = vset.pattern.permute.xlu0 7
        %1620 = vperm.xlu0 %1619, %v378
        %v1621 = vpop.permute.xlu0 %1620
        %1623 = vset.pattern.permute.xlu0 7
        %1624 = vperm.xlu0 %1623, %v379
        %v1625 = vpop.permute.xlu0 %1624
        %v1627 = vmul.f32 %v1605, %v1591
        %v1628 = vmul.f32 %v1605, %v1585
        %v1629 = vmul.f32 %v1605, %v1579
        %v1630 = vmul.f32 %v1605, %v1597
        %v1631 = vmul.f32 %v1609, %v1592
        %v1632 = vmul.f32 %v1609, %v1586
        %v1633 = vmul.f32 %v1609, %v1580
        %v1634 = vmul.f32 %v1609, %v1598
        %v1635 = vmul.f32 %v1613, %v1593
        %v1636 = vmul.f32 %v1613, %v1587
        %v1637 = vmul.f32 %v1613, %v1581
        %v1638 = vmul.f32 %v1613, %v1599
        %v1639 = vmul.f32 %v1617, %v1594
        %v1640 = vmul.f32 %v1617, %v1588
        %v1641 = vmul.f32 %v1617, %v1582
        %v1642 = vmul.f32 %v1617, %v1600
        %v1643 = vmul.f32 %v1621, %v1595
        %v1644 = vmul.f32 %v1621, %v1589
        %v1645 = vmul.f32 %v1621, %v1583
        %v1646 = vmul.f32 %v1621, %v1601
        %v1647 = vmul.f32 %v1625, %v1596
        %v1648 = vmul.f32 %v1625, %v1590
        %v1649 = vmul.f32 %v1625, %v1584
        %v1650 = vmul.f32 %v1625, %v1602
        %v1651 = vadd.f32 %v1506, %v1627
        %v1652 = vadd.f32 %v1507, %v1628
        %v1653 = vadd.f32 %v1508, %v1629
        %v1654 = vadd.f32 %v1509, %v1630
        %v1655 = vadd.f32 %v1510, %v1631
        %v1656 = vadd.f32 %v1511, %v1632
        %v1657 = vadd.f32 %v1512, %v1633
        %v1658 = vadd.f32 %v1513, %v1634
        %v1659 = vadd.f32 %v1514, %v1635
        %v1660 = vadd.f32 %v1515, %v1636
        %v1661 = vadd.f32 %v1516, %v1637
        %v1662 = vadd.f32 %v1517, %v1638
        %v1663 = vadd.f32 %v1518, %v1639
        %v1664 = vadd.f32 %v1519, %v1640
        %v1665 = vadd.f32 %v1520, %v1641
        %v1666 = vadd.f32 %v1521, %v1642
        %v1667 = vadd.f32 %v1522, %v1643
        %v1668 = vadd.f32 %v1523, %v1644
        %v1669 = vadd.f32 %v1524, %v1645
        %v1670 = vadd.f32 %v1525, %v1646
        %v1671 = vadd.f32 %v1526, %v1647
        %v1672 = vadd.f32 %v1527, %v1648
        %v1673 = vadd.f32 %v1528, %v1649
        %v1674 = vadd.f32 %v1529, %v1650
        %1675 = vrot.lane.b32.xlu0 %v731, 118
        %v1676 = vpop.permute.xlu0 %1675
        %1677 = vrot.lane.b32.xlu0 %v735, 118
        %v1678 = vpop.permute.xlu0 %1677
        %1679 = vrot.lane.b32.xlu0 %v739, 118
        %v1680 = vpop.permute.xlu0 %1679
        %1681 = vrot.lane.b32.xlu0 %v743, 118
        %v1682 = vpop.permute.xlu0 %1681
        %1683 = vrot.lane.b32.xlu0 %v747, 118
        %v1684 = vpop.permute.xlu0 %1683
        %1685 = vrot.lane.b32.xlu0 %v751, 118
        %v1686 = vpop.permute.xlu0 %1685
        %1687 = vrot.lane.b32.xlu0 %v732, 118
        %v1688 = vpop.permute.xlu0 %1687
        %1689 = vrot.lane.b32.xlu0 %v736, 118
        %v1690 = vpop.permute.xlu0 %1689
        %1691 = vrot.lane.b32.xlu0 %v740, 118
        %v1692 = vpop.permute.xlu0 %1691
        %1693 = vrot.lane.b32.xlu0 %v744, 118
        %v1694 = vpop.permute.xlu0 %1693
        %1695 = vrot.lane.b32.xlu0 %v748, 118
        %v1696 = vpop.permute.xlu0 %1695
        %1697 = vrot.lane.b32.xlu0 %v752, 118
        %v1698 = vpop.permute.xlu0 %1697
        %1699 = vrot.lane.b32.xlu0 %v733, 118
        %v1700 = vpop.permute.xlu0 %1699
        %1701 = vrot.lane.b32.xlu0 %v737, 118
        %v1702 = vpop.permute.xlu0 %1701
        %1703 = vrot.lane.b32.xlu0 %v741, 118
        %v1704 = vpop.permute.xlu0 %1703
        %1705 = vrot.lane.b32.xlu0 %v745, 118
        %v1706 = vpop.permute.xlu0 %1705
        %1707 = vrot.lane.b32.xlu0 %v749, 118
        %v1708 = vpop.permute.xlu0 %1707
        %1709 = vrot.lane.b32.xlu0 %v753, 118
        %v1710 = vpop.permute.xlu0 %1709
        %1711 = vrot.lane.b32.xlu0 %v734, 118
        %v1712 = vpop.permute.xlu0 %1711
        %1713 = vrot.lane.b32.xlu0 %v738, 118
        %v1714 = vpop.permute.xlu0 %1713
        %1715 = vrot.lane.b32.xlu0 %v742, 118
        %v1716 = vpop.permute.xlu0 %1715
        %1717 = vrot.lane.b32.xlu0 %v746, 118
        %v1718 = vpop.permute.xlu0 %1717
        %1719 = vrot.lane.b32.xlu0 %v750, 118
        %v1720 = vpop.permute.xlu0 %1719
        %1721 = vrot.lane.b32.xlu0 %v754, 118
        %v1722 = vpop.permute.xlu0 %1721
        %vm1723 = vcmp.lt.s32.totalorder %v804, 118
        %v1724 = vsel %vm1723, %v1700, %v1712
        %v1725 = vsel %vm1723, %v1702, %v1714
        %v1726 = vsel %vm1723, %v1704, %v1716
        %v1727 = vsel %vm1723, %v1706, %v1718
        %v1728 = vsel %vm1723, %v1708, %v1720
        %v1729 = vsel %vm1723, %v1710, %v1722
        %v1730 = vsel %vm1723, %v1688, %v1700
        %v1731 = vsel %vm1723, %v1690, %v1702
        %v1732 = vsel %vm1723, %v1692, %v1704
        %v1733 = vsel %vm1723, %v1694, %v1706
        %v1734 = vsel %vm1723, %v1696, %v1708
        %v1735 = vsel %vm1723, %v1698, %v1710
        %v1736 = vsel %vm1723, %v1676, %v1688
        %v1737 = vsel %vm1723, %v1678, %v1690
        %v1738 = vsel %vm1723, %v1680, %v1692
        %v1739 = vsel %vm1723, %v1682, %v1694
        %v1740 = vsel %vm1723, %v1684, %v1696
        %v1741 = vsel %vm1723, %v1686, %v1698
        %v1742 = vsel %vm1723, %v1712, %v1676
        %v1743 = vsel %vm1723, %v1714, %v1678
        %v1744 = vsel %vm1723, %v1716, %v1680
        %v1745 = vsel %vm1723, %v1718, %v1682
        %v1746 = vsel %vm1723, %v1720, %v1684
        %v1747 = vsel %vm1723, %v1722, %v1686
        %1748 = vset.pattern.permute.xlu0 8
        %1749 = vperm.xlu0 %1748, %v374
        %v1750 = vpop.permute.xlu0 %1749
        %1752 = vset.pattern.permute.xlu0 8
        %1753 = vperm.xlu0 %1752, %v375
        %v1754 = vpop.permute.xlu0 %1753
        %1756 = vset.pattern.permute.xlu0 8
        %1757 = vperm.xlu0 %1756, %v376
        %v1758 = vpop.permute.xlu0 %1757
        %1760 = vset.pattern.permute.xlu0 8
        %1761 = vperm.xlu0 %1760, %v377
        %v1762 = vpop.permute.xlu0 %1761
        %1764 = vset.pattern.permute.xlu0 8
        %1765 = vperm.xlu0 %1764, %v378
        %v1766 = vpop.permute.xlu0 %1765
        %1768 = vset.pattern.permute.xlu0 8
        %1769 = vperm.xlu0 %1768, %v379
        %v1770 = vpop.permute.xlu0 %1769
        %v1772 = vmul.f32 %v1750, %v1736
        %v1773 = vmul.f32 %v1750, %v1730
        %v1774 = vmul.f32 %v1750, %v1724
        %v1775 = vmul.f32 %v1750, %v1742
        %v1776 = vmul.f32 %v1754, %v1737
        %v1777 = vmul.f32 %v1754, %v1731
        %v1778 = vmul.f32 %v1754, %v1725
        %v1779 = vmul.f32 %v1754, %v1743
        %v1780 = vmul.f32 %v1758, %v1738
        %v1781 = vmul.f32 %v1758, %v1732
        %v1782 = vmul.f32 %v1758, %v1726
        %v1783 = vmul.f32 %v1758, %v1744
        %v1784 = vmul.f32 %v1762, %v1739
        %v1785 = vmul.f32 %v1762, %v1733
        %v1786 = vmul.f32 %v1762, %v1727
        %v1787 = vmul.f32 %v1762, %v1745
        %v1788 = vmul.f32 %v1766, %v1740
        %v1789 = vmul.f32 %v1766, %v1734
        %v1790 = vmul.f32 %v1766, %v1728
        %v1791 = vmul.f32 %v1766, %v1746
        %v1792 = vmul.f32 %v1770, %v1741
        %v1793 = vmul.f32 %v1770, %v1735
        %v1794 = vmul.f32 %v1770, %v1729
        %v1795 = vmul.f32 %v1770, %v1747
        %v1796 = vadd.f32 %v1651, %v1772
        %v1797 = vadd.f32 %v1652, %v1773
        %v1798 = vadd.f32 %v1653, %v1774
        %v1799 = vadd.f32 %v1654, %v1775
        %v1800 = vadd.f32 %v1655, %v1776
        %v1801 = vadd.f32 %v1656, %v1777
        %v1802 = vadd.f32 %v1657, %v1778
        %v1803 = vadd.f32 %v1658, %v1779
        %v1804 = vadd.f32 %v1659, %v1780
        %v1805 = vadd.f32 %v1660, %v1781
        %v1806 = vadd.f32 %v1661, %v1782
        %v1807 = vadd.f32 %v1662, %v1783
        %v1808 = vadd.f32 %v1663, %v1784
        %v1809 = vadd.f32 %v1664, %v1785
        %v1810 = vadd.f32 %v1665, %v1786
        %v1811 = vadd.f32 %v1666, %v1787
        %v1812 = vadd.f32 %v1667, %v1788
        %v1813 = vadd.f32 %v1668, %v1789
        %v1814 = vadd.f32 %v1669, %v1790
        %v1815 = vadd.f32 %v1670, %v1791
        %v1816 = vadd.f32 %v1671, %v1792
        %v1817 = vadd.f32 %v1672, %v1793
        %v1818 = vadd.f32 %v1673, %v1794
        %v1819 = vadd.f32 %v1674, %v1795
        %1820 = vrot.lane.b32.xlu0 %v731, 117
        %v1821 = vpop.permute.xlu0 %1820
        %1822 = vrot.lane.b32.xlu0 %v735, 117
        %v1823 = vpop.permute.xlu0 %1822
        %1824 = vrot.lane.b32.xlu0 %v739, 117
        %v1825 = vpop.permute.xlu0 %1824
        %1826 = vrot.lane.b32.xlu0 %v743, 117
        %v1827 = vpop.permute.xlu0 %1826
        %1828 = vrot.lane.b32.xlu0 %v747, 117
        %v1829 = vpop.permute.xlu0 %1828
        %1830 = vrot.lane.b32.xlu0 %v751, 117
        %v1831 = vpop.permute.xlu0 %1830
        %1832 = vrot.lane.b32.xlu0 %v732, 117
        %v1833 = vpop.permute.xlu0 %1832
        %1834 = vrot.lane.b32.xlu0 %v736, 117
        %v1835 = vpop.permute.xlu0 %1834
        %1836 = vrot.lane.b32.xlu0 %v740, 117
        %v1837 = vpop.permute.xlu0 %1836
        %1838 = vrot.lane.b32.xlu0 %v744, 117
        %v1839 = vpop.permute.xlu0 %1838
        %1840 = vrot.lane.b32.xlu0 %v748, 117
        %v1841 = vpop.permute.xlu0 %1840
        %1842 = vrot.lane.b32.xlu0 %v752, 117
        %v1843 = vpop.permute.xlu0 %1842
        %1844 = vrot.lane.b32.xlu0 %v733, 117
        %v1845 = vpop.permute.xlu0 %1844
        %1846 = vrot.lane.b32.xlu0 %v737, 117
        %v1847 = vpop.permute.xlu0 %1846
        %1848 = vrot.lane.b32.xlu0 %v741, 117
        %v1849 = vpop.permute.xlu0 %1848
        %1850 = vrot.lane.b32.xlu0 %v745, 117
        %v1851 = vpop.permute.xlu0 %1850
        %1852 = vrot.lane.b32.xlu0 %v749, 117
        %v1853 = vpop.permute.xlu0 %1852
        %1854 = vrot.lane.b32.xlu0 %v753, 117
        %v1855 = vpop.permute.xlu0 %1854
        %1856 = vrot.lane.b32.xlu0 %v734, 117
        %v1857 = vpop.permute.xlu0 %1856
        %1858 = vrot.lane.b32.xlu0 %v738, 117
        %v1859 = vpop.permute.xlu0 %1858
        %1860 = vrot.lane.b32.xlu0 %v742, 117
        %v1861 = vpop.permute.xlu0 %1860
        %1862 = vrot.lane.b32.xlu0 %v746, 117
        %v1863 = vpop.permute.xlu0 %1862
        %1864 = vrot.lane.b32.xlu0 %v750, 117
        %v1865 = vpop.permute.xlu0 %1864
        %1866 = vrot.lane.b32.xlu0 %v754, 117
        %v1867 = vpop.permute.xlu0 %1866
        %vm1868 = vcmp.lt.s32.totalorder %v804, 117
        %v1869 = vsel %vm1868, %v1845, %v1857
        %v1870 = vsel %vm1868, %v1847, %v1859
        %v1871 = vsel %vm1868, %v1849, %v1861
        %v1872 = vsel %vm1868, %v1851, %v1863
        %v1873 = vsel %vm1868, %v1853, %v1865
        %v1874 = vsel %vm1868, %v1855, %v1867
        %v1875 = vsel %vm1868, %v1833, %v1845
        %v1876 = vsel %vm1868, %v1835, %v1847
        %v1877 = vsel %vm1868, %v1837, %v1849
        %v1878 = vsel %vm1868, %v1839, %v1851
        %v1879 = vsel %vm1868, %v1841, %v1853
        %v1880 = vsel %vm1868, %v1843, %v1855
        %v1881 = vsel %vm1868, %v1821, %v1833
        %v1882 = vsel %vm1868, %v1823, %v1835
        %v1883 = vsel %vm1868, %v1825, %v1837
        %v1884 = vsel %vm1868, %v1827, %v1839
        %v1885 = vsel %vm1868, %v1829, %v1841
        %v1886 = vsel %vm1868, %v1831, %v1843
        %v1887 = vsel %vm1868, %v1857, %v1821
        %v1888 = vsel %vm1868, %v1859, %v1823
        %v1889 = vsel %vm1868, %v1861, %v1825
        %v1890 = vsel %vm1868, %v1863, %v1827
        %v1891 = vsel %vm1868, %v1865, %v1829
        %v1892 = vsel %vm1868, %v1867, %v1831
        %1893 = vset.pattern.permute.xlu0 9
        %1894 = vperm.xlu0 %1893, %v374
        %v1895 = vpop.permute.xlu0 %1894
        %1897 = vset.pattern.permute.xlu0 9
        %1898 = vperm.xlu0 %1897, %v375
        %v1899 = vpop.permute.xlu0 %1898
        %1901 = vset.pattern.permute.xlu0 9
        %1902 = vperm.xlu0 %1901, %v376
        %v1903 = vpop.permute.xlu0 %1902
        %1905 = vset.pattern.permute.xlu0 9
        %1906 = vperm.xlu0 %1905, %v377
        %v1907 = vpop.permute.xlu0 %1906
        %1909 = vset.pattern.permute.xlu0 9
        %1910 = vperm.xlu0 %1909, %v378
        %v1911 = vpop.permute.xlu0 %1910
        %1913 = vset.pattern.permute.xlu0 9
        %1914 = vperm.xlu0 %1913, %v379
        %v1915 = vpop.permute.xlu0 %1914
        %v1917 = vmul.f32 %v1895, %v1881
        %v1918 = vmul.f32 %v1895, %v1875
        %v1919 = vmul.f32 %v1895, %v1869
        %v1920 = vmul.f32 %v1895, %v1887
        %v1921 = vmul.f32 %v1899, %v1882
        %v1922 = vmul.f32 %v1899, %v1876
        %v1923 = vmul.f32 %v1899, %v1870
        %v1924 = vmul.f32 %v1899, %v1888
        %v1925 = vmul.f32 %v1903, %v1883
        %v1926 = vmul.f32 %v1903, %v1877
        %v1927 = vmul.f32 %v1903, %v1871
        %v1928 = vmul.f32 %v1903, %v1889
        %v1929 = vmul.f32 %v1907, %v1884
        %v1930 = vmul.f32 %v1907, %v1878
        %v1931 = vmul.f32 %v1907, %v1872
        %v1932 = vmul.f32 %v1907, %v1890
        %v1933 = vmul.f32 %v1911, %v1885
        %v1934 = vmul.f32 %v1911, %v1879
        %v1935 = vmul.f32 %v1911, %v1873
        %v1936 = vmul.f32 %v1911, %v1891
        %v1937 = vmul.f32 %v1915, %v1886
        %v1938 = vmul.f32 %v1915, %v1880
        %v1939 = vmul.f32 %v1915, %v1874
        %v1940 = vmul.f32 %v1915, %v1892
        %v1941 = vadd.f32 %v1796, %v1917
        %v1942 = vadd.f32 %v1797, %v1918
        %v1943 = vadd.f32 %v1798, %v1919
        %v1944 = vadd.f32 %v1799, %v1920
        %v1945 = vadd.f32 %v1800, %v1921
        %v1946 = vadd.f32 %v1801, %v1922
        %v1947 = vadd.f32 %v1802, %v1923
        %v1948 = vadd.f32 %v1803, %v1924
        %v1949 = vadd.f32 %v1804, %v1925
        %v1950 = vadd.f32 %v1805, %v1926
        %v1951 = vadd.f32 %v1806, %v1927
        %v1952 = vadd.f32 %v1807, %v1928
        %v1953 = vadd.f32 %v1808, %v1929
        %v1954 = vadd.f32 %v1809, %v1930
        %v1955 = vadd.f32 %v1810, %v1931
        %v1956 = vadd.f32 %v1811, %v1932
        %v1957 = vadd.f32 %v1812, %v1933
        %v1958 = vadd.f32 %v1813, %v1934
        %v1959 = vadd.f32 %v1814, %v1935
        %v1960 = vadd.f32 %v1815, %v1936
        %v1961 = vadd.f32 %v1816, %v1937
        %v1962 = vadd.f32 %v1817, %v1938
        %v1963 = vadd.f32 %v1818, %v1939
        %v1964 = vadd.f32 %v1819, %v1940
        %1965 = vset.pattern.permute.xlu0 10
        %1966 = vperm.xlu0 %1965, %v374
        %v1967 = vpop.permute.xlu0 %1966
        %1969 = vset.pattern.permute.xlu0 10
        %1970 = vperm.xlu0 %1969, %v375
        %v1971 = vpop.permute.xlu0 %1970
        %1973 = vset.pattern.permute.xlu0 10
        %1974 = vperm.xlu0 %1973, %v376
        %v1975 = vpop.permute.xlu0 %1974
        %1977 = vset.pattern.permute.xlu0 10
        %1978 = vperm.xlu0 %1977, %v377
        %v1979 = vpop.permute.xlu0 %1978
        %1981 = vset.pattern.permute.xlu0 10
        %1982 = vperm.xlu0 %1981, %v378
        %v1983 = vpop.permute.xlu0 %1982
        %1985 = vset.pattern.permute.xlu0 10
        %1986 = vperm.xlu0 %1985, %v379
        %v1987 = vpop.permute.xlu0 %1986
        %v1989 = vadd.f32 %v1941, %v1967
        %v1990 = vadd.f32 %v1942, %v1967
        %v1991 = vadd.f32 %v1943, %v1967
        %v1992 = vadd.f32 %v1944, %v1967
        %v1993 = vadd.f32 %v1945, %v1971
        %v1994 = vadd.f32 %v1946, %v1971
        %v1995 = vadd.f32 %v1947, %v1971
        %v1996 = vadd.f32 %v1948, %v1971
        %v1997 = vadd.f32 %v1949, %v1975
        %v1998 = vadd.f32 %v1950, %v1975
        %v1999 = vadd.f32 %v1951, %v1975
        %v2000 = vadd.f32 %v1952, %v1975
        %v2001 = vadd.f32 %v1953, %v1979
        %v2002 = vadd.f32 %v1954, %v1979
        %v2003 = vadd.f32 %v1955, %v1979
        %v2004 = vadd.f32 %v1956, %v1979
        %v2005 = vadd.f32 %v1957, %v1983
        %v2006 = vadd.f32 %v1958, %v1983
        %v2007 = vadd.f32 %v1959, %v1983
        %v2008 = vadd.f32 %v1960, %v1983
        %v2009 = vadd.f32 %v1961, %v1987
        %v2010 = vadd.f32 %v1962, %v1987
        %v2011 = vadd.f32 %v1963, %v1987
        %v2012 = vadd.f32 %v1964, %v1987
        %v2013 = vmul.f32 %v1989, %v714
        %v2014 = vmul.f32 %v1990, %v718
        %v2015 = vmul.f32 %v1991, %v722
        %v2016 = vmul.f32 %v1992, %v726
        %v2017 = vmul.f32 %v1993, %v714
        %v2018 = vmul.f32 %v1994, %v718
        %v2019 = vmul.f32 %v1995, %v722
        %v2020 = vmul.f32 %v1996, %v726
        %v2021 = vmul.f32 %v1997, %v714
        %v2022 = vmul.f32 %v1998, %v718
        %v2023 = vmul.f32 %v1999, %v722
        %v2024 = vmul.f32 %v2000, %v726
        %v2025 = vmul.f32 %v2001, %v714
        %v2026 = vmul.f32 %v2002, %v718
        %v2027 = vmul.f32 %v2003, %v722
        %v2028 = vmul.f32 %v2004, %v726
        %v2029 = vmul.f32 %v2013, %v2013
        %v2030 = vmul.f32 %v2017, %v2017
        %2031 = vadd.xlane.f32.xlu0 %v2029
        %v2032 = vpop.xlane.xlu0 %2031
        %2033 = vadd.xlane.f32.xlu0 %v2030
        %v2034 = vpop.xlane.xlu0 %2033
        %v2035 = vmax.f32 %v2032, 1e-24
        %v2036 = vmax.f32 %v2034, 1e-24
        %v2037 = vrsqrt.pop %v2035
        %v2038 = vrsqrt.pop %v2036
        %v2039 = vmul.f32 %v2013, %v2037
        %v2040 = vmul.f32 %v2017, %v2038
        %v2041 = vmul.f32 %v2021, %v2021
        %v2042 = vmul.f32 %v2025, %v2025
        %2043 = vadd.xlane.f32.xlu0 %v2041
        %v2044 = vpop.xlane.xlu0 %2043
        %2045 = vadd.xlane.f32.xlu0 %v2042
        %v2046 = vpop.xlane.xlu0 %2045
        %v2047 = vmax.f32 %v2044, 1e-24
        %v2048 = vmax.f32 %v2046, 1e-24
        %v2049 = vrsqrt.pop %v2047
        %v2050 = vrsqrt.pop %v2048
        %v2051 = vmul.f32 %v2021, %v2049
        %v2052 = vmul.f32 %v2025, %v2050
        %v2053 = vpack.c.bf16 %v2040, %v2039
        %v2054 = vpack.c.bf16 %v2052, %v2051
        %2055 = vmatprep.subr.bf16.mxu0 0
        %2056 = vmatpush1.bf16.xpose.msra.mxu0 %v2054
        %2057 = vmatprep.subr.bf16.mxu0 0
        %2058 = vmatpush1.bf16.xpose.msra.mxu0 0
        %2059 = vmatprep.subr.bf16.mxu0 0
        %2060 = vmatpush1.bf16.xpose.msra.mxu0 0
        %2061 = vmatprep.subr.bf16.mxu0 0
        %2062 = vmatpush1.bf16.xpose.msra.mxu0 0
        %2063 = vmatprep.subr.bf16.mxu0 0
        %2064 = vmatpush1.bf16.xpose.msra.mxu0 0
        %2065 = vmatprep.subr.bf16.mxu0 0
        %2066 = vmatpush1.bf16.xpose.msra.mxu0 0
        %2067 = vmatprep.subr.bf16.mxu0 0
        %2068 = vmatpush1.bf16.xpose.msra.mxu0 0
        %2069 = vmatprep.subr.bf16.mxu0 0
        %2070 = vmatpush1.bf16.xpose.msra.mxu0 0
        %2071 = vmatprep.subr.bf16.mxu0 0
        %2072 = vmatpush1.bf16.xpose.msra.mxu0 0
        %2073 = vmatprep.subr.bf16.mxu0 0
        %2074 = vmatpush1.bf16.xpose.msra.mxu0 0
        %2075 = vmatprep.subr.bf16.mxu0 0
        %2076 = vmatpush1.bf16.xpose.msra.mxu0 0
        %2077 = vmatprep.subr.bf16.mxu0 0
        %2078 = vmatpush1.bf16.xpose.msra.mxu0 0
        %2079 = vmatprep.subr.bf16.mxu0 0
        %2080 = vmatpush1.bf16.xpose.msra.mxu0 0
        %2081 = vmatprep.subr.bf16.mxu0 0
        %2082 = vmatpush1.bf16.xpose.msra.mxu0 0
        %2083 = vmatprep.subr.bf16.mxu0 0
        %2084 = vmatpush1.bf16.xpose.msra.mxu0 0
        %2085 = vmatprep.subr.bf16.mxu0 0
        %2086 = vmatpush1.bf16.xpose.msra.mxu0 0
        %2087 = vmatprep.mubr.bf16.mxu0 0
        %2088 = vmatmul.mubr.bf16.gmra.mrb[0].mxu0 %v2053
        %v2089 = vpop.f32.mrb[0].mxu0
        %v2090 = vadd.f32 0.0, %v2089
        %v2091 = vpop.f32.mrb[0].mxu0
        %v2092 = vpop.f32.mrb[0].mxu0
        %v2093 = vadd.f32 0.0, %v2092
        %v2094 = vpop.f32.mrb[0].mxu0
        %2095 = vdwg.mxu0
        %2096 = vset.pattern.permute.xlu0 6
        %2097 = vperm.xlu0 %2096, %v372
        %v2098 = vpop.permute.xlu0 %2097
        %2100 = vset.pattern.permute.xlu0 6
        %2101 = vperm.xlu0 %2100, %v373
        %v2102 = vpop.permute.xlu0 %2101
        %v2104 = vmul.f32 %v2090, %v2098
        %v2105 = vmul.f32 %v2093, %v2102
        %v2106 = vld [vmem:[%s2] sm:$0xff]
        %v2107 = vld [vmem:[%s2 + $0x8] sm:$0xff]
        %v2108 = vadd.f32 %v2104, %v2106
        %v2109 = vadd.f32 %v2105, %v2107
        %v2110 = vmul.f32 %v2108, 1.442695
        %v2111 = vpow.pop %v2110
        %v2112 = vmul.f32 %v2109, 1.442695
        %v2113 = vpow.pop %v2112
        %v2114 = vsel %vm574, %v2111, 0.0
        %2115 = vadd.xlane.f32.xlu0 %v2114
        %v2116 = vpop.xlane.xlu0 %2115
        %v2117 = vsel %vm574, %v2113, 0.0
        %2118 = vadd.xlane.f32.xlu0 %v2117
        %v2119 = vpop.xlane.xlu0 %2118
        %v2120 = vrcp.pop %v2116
        %v2121 = vrcp.pop %v2119
        %v2122 = vmul.f32 %v2111, %v2120
        %v2123 = vmul.f32 %v2113, %v2121
        %v2124 = vpack.c.bf16 %v2123, %v2122
        %v2125 = vpack.c.bf16 %v2009, %v2005
        %v2127 = vsel %vm574, %v2124, 0
        %2129 = vmatprep.subr.bf16.mxu0 0
        %2130 = vmatpush1.bf16.msra.mxu0 %v2125
        %2131 = vmatprep.subr.bf16.mxu0 0
        %2132 = vmatpush1.bf16.msra.mxu0 0
        %2133 = vmatprep.subr.bf16.mxu0 0
        %2134 = vmatpush1.bf16.msra.mxu0 0
        %2135 = vmatprep.subr.bf16.mxu0 0
        %2136 = vmatpush1.bf16.msra.mxu0 0
        %2137 = vmatprep.subr.bf16.mxu0 0
        %2138 = vmatpush1.bf16.msra.mxu0 0
        %2139 = vmatprep.subr.bf16.mxu0 0
        %2140 = vmatpush1.bf16.msra.mxu0 0
        %2141 = vmatprep.subr.bf16.mxu0 0
        %2142 = vmatpush1.bf16.msra.mxu0 0
        %2143 = vmatprep.subr.bf16.mxu0 0
        %2144 = vmatpush1.bf16.msra.mxu0 0
        %2145 = vmatprep.subr.bf16.mxu0 0
        %2146 = vmatpush1.bf16.msra.mxu0 0
        %2147 = vmatprep.subr.bf16.mxu0 0
        %2148 = vmatpush1.bf16.msra.mxu0 0
        %2149 = vmatprep.subr.bf16.mxu0 0
        %2150 = vmatpush1.bf16.msra.mxu0 0
        %2151 = vmatprep.subr.bf16.mxu0 0
        %2152 = vmatpush1.bf16.msra.mxu0 0
        %2153 = vmatprep.subr.bf16.mxu0 0
        %2154 = vmatpush1.bf16.msra.mxu0 0
        %2155 = vmatprep.subr.bf16.mxu0 0
        %2156 = vmatpush1.bf16.msra.mxu0 0
        %2157 = vmatprep.subr.bf16.mxu0 0
        %2158 = vmatpush1.bf16.msra.mxu0 0
        %2159 = vmatprep.subr.bf16.mxu0 0
        %2160 = vmatpush1.bf16.msra.mxu0 0
        %2161 = vmatprep.mubr.bf16.mxu0 0
        %2162 = vmatmul.mubr.bf16.gmra.mrb[0].mxu0 %v2127
        %v2163 = vpop.f32.mrb[0].mxu0
        %v2164 = vadd.f32 0.0, %v2163
        %v2165 = vpop.f32.mrb[0].mxu0
        %v2166 = vpop.f32.mrb[0].mxu0
        %v2167 = vadd.f32 0.0, %v2166
        %v2168 = vpop.f32.mrb[0].mxu0
        %2169 = vdwg.mxu0
        %2170 = vst [vmem:[#allocation2] sm:$0xff] %v2164
        %2171 = vst [vmem:[#allocation2 + $0x20] sm:$0xff] %v2167
        %v2172 = vmul.f32 %v2014, %v2014
        %v2173 = vmul.f32 %v2018, %v2018
        %2174 = vadd.xlane.f32.xlu0 %v2172
        %v2175 = vpop.xlane.xlu0 %2174
        %2176 = vadd.xlane.f32.xlu0 %v2173
        %v2177 = vpop.xlane.xlu0 %2176
        %v2178 = vmax.f32 %v2175, 1e-24
        %v2179 = vmax.f32 %v2177, 1e-24
        %v2180 = vrsqrt.pop %v2178
        %v2181 = vrsqrt.pop %v2179
        %v2182 = vmul.f32 %v2014, %v2180
        %v2183 = vmul.f32 %v2018, %v2181
        %v2184 = vmul.f32 %v2022, %v2022
        %v2185 = vmul.f32 %v2026, %v2026
        %2186 = vadd.xlane.f32.xlu0 %v2184
        %v2187 = vpop.xlane.xlu0 %2186
        %2188 = vadd.xlane.f32.xlu0 %v2185
        %v2189 = vpop.xlane.xlu0 %2188
        %v2190 = vmax.f32 %v2187, 1e-24
        %v2191 = vmax.f32 %v2189, 1e-24
        %v2192 = vrsqrt.pop %v2190
        %v2193 = vrsqrt.pop %v2191
        %v2194 = vmul.f32 %v2022, %v2192
        %v2195 = vmul.f32 %v2026, %v2193
        %v2196 = vpack.c.bf16 %v2183, %v2182
        %v2197 = vpack.c.bf16 %v2195, %v2194
        %2198 = vmatprep.subr.bf16.mxu0 0
        %2199 = vmatpush1.bf16.xpose.msra.mxu0 %v2197
        %2200 = vmatprep.subr.bf16.mxu0 0
        %2201 = vmatpush1.bf16.xpose.msra.mxu0 0
        %2202 = vmatprep.subr.bf16.mxu0 0
        %2203 = vmatpush1.bf16.xpose.msra.mxu0 0
        %2204 = vmatprep.subr.bf16.mxu0 0
        %2205 = vmatpush1.bf16.xpose.msra.mxu0 0
        %2206 = vmatprep.subr.bf16.mxu0 0
        %2207 = vmatpush1.bf16.xpose.msra.mxu0 0
        %2208 = vmatprep.subr.bf16.mxu0 0
        %2209 = vmatpush1.bf16.xpose.msra.mxu0 0
        %2210 = vmatprep.subr.bf16.mxu0 0
        %2211 = vmatpush1.bf16.xpose.msra.mxu0 0
        %2212 = vmatprep.subr.bf16.mxu0 0
        %2213 = vmatpush1.bf16.xpose.msra.mxu0 0
        %2214 = vmatprep.subr.bf16.mxu0 0
        %2215 = vmatpush1.bf16.xpose.msra.mxu0 0
        %2216 = vmatprep.subr.bf16.mxu0 0
        %2217 = vmatpush1.bf16.xpose.msra.mxu0 0
        %2218 = vmatprep.subr.bf16.mxu0 0
        %2219 = vmatpush1.bf16.xpose.msra.mxu0 0
        %2220 = vmatprep.subr.bf16.mxu0 0
        %2221 = vmatpush1.bf16.xpose.msra.mxu0 0
        %2222 = vmatprep.subr.bf16.mxu0 0
        %2223 = vmatpush1.bf16.xpose.msra.mxu0 0
        %2224 = vmatprep.subr.bf16.mxu0 0
        %2225 = vmatpush1.bf16.xpose.msra.mxu0 0
        %2226 = vmatprep.subr.bf16.mxu0 0
        %2227 = vmatpush1.bf16.xpose.msra.mxu0 0
        %2228 = vmatprep.subr.bf16.mxu0 0
        %2229 = vmatpush1.bf16.xpose.msra.mxu0 0
        %2230 = vmatprep.mubr.bf16.mxu0 0
        %2231 = vmatmul.mubr.bf16.gmra.mrb[0].mxu0 %v2196
        %v2232 = vpop.f32.mrb[0].mxu0
        %v2233 = vadd.f32 0.0, %v2232
        %v2234 = vpop.f32.mrb[0].mxu0
        %v2235 = vpop.f32.mrb[0].mxu0
        %v2236 = vadd.f32 0.0, %v2235
        %v2237 = vpop.f32.mrb[0].mxu0
        %2238 = vdwg.mxu0
        %v2239 = vmul.f32 %v2233, %v2098
        %v2240 = vmul.f32 %v2236, %v2102
        %v2241 = vld [vmem:[%s2] sm:$0xff]
        %v2242 = vld [vmem:[%s2 + $0x8] sm:$0xff]
        %v2243 = vadd.f32 %v2239, %v2241
        %v2244 = vadd.f32 %v2240, %v2242
        %v2245 = vmul.f32 %v2243, 1.442695
        %v2246 = vpow.pop %v2245
        %v2247 = vmul.f32 %v2244, 1.442695
        %v2248 = vpow.pop %v2247
        %v2249 = vsel %vm574, %v2246, 0.0
        %2250 = vadd.xlane.f32.xlu0 %v2249
        %v2251 = vpop.xlane.xlu0 %2250
        %v2252 = vsel %vm574, %v2248, 0.0
        %2253 = vadd.xlane.f32.xlu0 %v2252
        %v2254 = vpop.xlane.xlu0 %2253
        %v2255 = vrcp.pop %v2251
        %v2256 = vrcp.pop %v2254
        %v2257 = vmul.f32 %v2246, %v2255
        %v2258 = vmul.f32 %v2248, %v2256
        %v2259 = vpack.c.bf16 %v2258, %v2257
        %v2260 = vpack.c.bf16 %v2010, %v2006
        %v2262 = vsel %vm574, %v2259, 0
        %2264 = vmatprep.subr.bf16.mxu0 0
        %2265 = vmatpush1.bf16.msra.mxu0 %v2260
        %2266 = vmatprep.subr.bf16.mxu0 0
        %2267 = vmatpush1.bf16.msra.mxu0 0
        %2268 = vmatprep.subr.bf16.mxu0 0
        %2269 = vmatpush1.bf16.msra.mxu0 0
        %2270 = vmatprep.subr.bf16.mxu0 0
        %2271 = vmatpush1.bf16.msra.mxu0 0
        %2272 = vmatprep.subr.bf16.mxu0 0
        %2273 = vmatpush1.bf16.msra.mxu0 0
        %2274 = vmatprep.subr.bf16.mxu0 0
        %2275 = vmatpush1.bf16.msra.mxu0 0
        %2276 = vmatprep.subr.bf16.mxu0 0
        %2277 = vmatpush1.bf16.msra.mxu0 0
        %2278 = vmatprep.subr.bf16.mxu0 0
        %2279 = vmatpush1.bf16.msra.mxu0 0
        %2280 = vmatprep.subr.bf16.mxu0 0
        %2281 = vmatpush1.bf16.msra.mxu0 0
        %2282 = vmatprep.subr.bf16.mxu0 0
        %2283 = vmatpush1.bf16.msra.mxu0 0
        %2284 = vmatprep.subr.bf16.mxu0 0
        %2285 = vmatpush1.bf16.msra.mxu0 0
        %2286 = vmatprep.subr.bf16.mxu0 0
        %2287 = vmatpush1.bf16.msra.mxu0 0
        %2288 = vmatprep.subr.bf16.mxu0 0
        %2289 = vmatpush1.bf16.msra.mxu0 0
        %2290 = vmatprep.subr.bf16.mxu0 0
        %2291 = vmatpush1.bf16.msra.mxu0 0
        %2292 = vmatprep.subr.bf16.mxu0 0
        %2293 = vmatpush1.bf16.msra.mxu0 0
        %2294 = vmatprep.subr.bf16.mxu0 0
        %2295 = vmatpush1.bf16.msra.mxu0 0
        %2296 = vmatprep.mubr.bf16.mxu0 0
        %2297 = vmatmul.mubr.bf16.gmra.mrb[0].mxu0 %v2262
        %v2298 = vpop.f32.mrb[0].mxu0
        %v2299 = vadd.f32 0.0, %v2298
        %v2300 = vpop.f32.mrb[0].mxu0
        %v2301 = vpop.f32.mrb[0].mxu0
        %v2302 = vadd.f32 0.0, %v2301
        %v2303 = vpop.f32.mrb[0].mxu0
        %2304 = vdwg.mxu0
        %2305 = vst [vmem:[#allocation2 + $0x8] sm:$0xff] %v2299
        %2306 = vst [vmem:[#allocation2 + $0x28] sm:$0xff] %v2302
        %v2307 = vmul.f32 %v2015, %v2015
        %v2308 = vmul.f32 %v2019, %v2019
        %2309 = vadd.xlane.f32.xlu0 %v2307
        %v2310 = vpop.xlane.xlu0 %2309
        %2311 = vadd.xlane.f32.xlu0 %v2308
        %v2312 = vpop.xlane.xlu0 %2311
        %v2313 = vmax.f32 %v2310, 1e-24
        %v2314 = vmax.f32 %v2312, 1e-24
        %v2315 = vrsqrt.pop %v2313
        %v2316 = vrsqrt.pop %v2314
        %v2317 = vmul.f32 %v2015, %v2315
        %v2318 = vmul.f32 %v2019, %v2316
        %v2319 = vmul.f32 %v2023, %v2023
        %v2320 = vmul.f32 %v2027, %v2027
        %2321 = vadd.xlane.f32.xlu0 %v2319
        %v2322 = vpop.xlane.xlu0 %2321
        %2323 = vadd.xlane.f32.xlu0 %v2320
        %v2324 = vpop.xlane.xlu0 %2323
        %v2325 = vmax.f32 %v2322, 1e-24
        %v2326 = vmax.f32 %v2324, 1e-24
        %v2327 = vrsqrt.pop %v2325
        %v2328 = vrsqrt.pop %v2326
        %v2329 = vmul.f32 %v2023, %v2327
        %v2330 = vmul.f32 %v2027, %v2328
        %v2331 = vpack.c.bf16 %v2318, %v2317
        %v2332 = vpack.c.bf16 %v2330, %v2329
        %2333 = vmatprep.subr.bf16.mxu0 0
        %2334 = vmatpush1.bf16.xpose.msra.mxu0 %v2332
        %2335 = vmatprep.subr.bf16.mxu0 0
        %2336 = vmatpush1.bf16.xpose.msra.mxu0 0
        %2337 = vmatprep.subr.bf16.mxu0 0
        %2338 = vmatpush1.bf16.xpose.msra.mxu0 0
        %2339 = vmatprep.subr.bf16.mxu0 0
        %2340 = vmatpush1.bf16.xpose.msra.mxu0 0
        %2341 = vmatprep.subr.bf16.mxu0 0
        %2342 = vmatpush1.bf16.xpose.msra.mxu0 0
        %2343 = vmatprep.subr.bf16.mxu0 0
        %2344 = vmatpush1.bf16.xpose.msra.mxu0 0
        %2345 = vmatprep.subr.bf16.mxu0 0
        %2346 = vmatpush1.bf16.xpose.msra.mxu0 0
        %2347 = vmatprep.subr.bf16.mxu0 0
        %2348 = vmatpush1.bf16.xpose.msra.mxu0 0
        %2349 = vmatprep.subr.bf16.mxu0 0
        %2350 = vmatpush1.bf16.xpose.msra.mxu0 0
        %2351 = vmatprep.subr.bf16.mxu0 0
        %2352 = vmatpush1.bf16.xpose.msra.mxu0 0
        %2353 = vmatprep.subr.bf16.mxu0 0
        %2354 = vmatpush1.bf16.xpose.msra.mxu0 0
        %2355 = vmatprep.subr.bf16.mxu0 0
        %2356 = vmatpush1.bf16.xpose.msra.mxu0 0
        %2357 = vmatprep.subr.bf16.mxu0 0
        %2358 = vmatpush1.bf16.xpose.msra.mxu0 0
        %2359 = vmatprep.subr.bf16.mxu0 0
        %2360 = vmatpush1.bf16.xpose.msra.mxu0 0
        %2361 = vmatprep.subr.bf16.mxu0 0
        %2362 = vmatpush1.bf16.xpose.msra.mxu0 0
        %2363 = vmatprep.subr.bf16.mxu0 0
        %2364 = vmatpush1.bf16.xpose.msra.mxu0 0
        %2365 = vmatprep.mubr.bf16.mxu0 0
        %2366 = vmatmul.mubr.bf16.gmra.mrb[0].mxu0 %v2331
        %v2367 = vpop.f32.mrb[0].mxu0
        %v2368 = vadd.f32 0.0, %v2367
        %v2369 = vpop.f32.mrb[0].mxu0
        %v2370 = vpop.f32.mrb[0].mxu0
        %v2371 = vadd.f32 0.0, %v2370
        %v2372 = vpop.f32.mrb[0].mxu0
        %2373 = vdwg.mxu0
        %v2374 = vmul.f32 %v2368, %v2098
        %v2375 = vmul.f32 %v2371, %v2102
        %v2376 = vld [vmem:[%s2] sm:$0xff]
        %v2377 = vld [vmem:[%s2 + $0x8] sm:$0xff]
        %v2378 = vadd.f32 %v2374, %v2376
        %v2379 = vadd.f32 %v2375, %v2377
        %v2380 = vmul.f32 %v2378, 1.442695
        %v2381 = vpow.pop %v2380
        %v2382 = vmul.f32 %v2379, 1.442695
        %v2383 = vpow.pop %v2382
        %v2384 = vsel %vm574, %v2381, 0.0
        %2385 = vadd.xlane.f32.xlu0 %v2384
        %v2386 = vpop.xlane.xlu0 %2385
        %v2387 = vsel %vm574, %v2383, 0.0
        %2388 = vadd.xlane.f32.xlu0 %v2387
        %v2389 = vpop.xlane.xlu0 %2388
        %v2390 = vrcp.pop %v2386
        %v2391 = vrcp.pop %v2389
        %v2392 = vmul.f32 %v2381, %v2390
        %v2393 = vmul.f32 %v2383, %v2391
        %v2394 = vpack.c.bf16 %v2393, %v2392
        %v2395 = vpack.c.bf16 %v2011, %v2007
        %v2397 = vsel %vm574, %v2394, 0
        %2399 = vmatprep.subr.bf16.mxu0 0
        %2400 = vmatpush1.bf16.msra.mxu0 %v2395
        %2401 = vmatprep.subr.bf16.mxu0 0
        %2402 = vmatpush1.bf16.msra.mxu0 0
        %2403 = vmatprep.subr.bf16.mxu0 0
        %2404 = vmatpush1.bf16.msra.mxu0 0
        %2405 = vmatprep.subr.bf16.mxu0 0
        %2406 = vmatpush1.bf16.msra.mxu0 0
        %2407 = vmatprep.subr.bf16.mxu0 0
        %2408 = vmatpush1.bf16.msra.mxu0 0
        %2409 = vmatprep.subr.bf16.mxu0 0
        %2410 = vmatpush1.bf16.msra.mxu0 0
        %2411 = vmatprep.subr.bf16.mxu0 0
        %2412 = vmatpush1.bf16.msra.mxu0 0
        %2413 = vmatprep.subr.bf16.mxu0 0
        %2414 = vmatpush1.bf16.msra.mxu0 0
        %2415 = vmatprep.subr.bf16.mxu0 0
        %2416 = vmatpush1.bf16.msra.mxu0 0
        %2417 = vmatprep.subr.bf16.mxu0 0
        %2418 = vmatpush1.bf16.msra.mxu0 0
        %2419 = vmatprep.subr.bf16.mxu0 0
        %2420 = vmatpush1.bf16.msra.mxu0 0
        %2421 = vmatprep.subr.bf16.mxu0 0
        %2422 = vmatpush1.bf16.msra.mxu0 0
        %2423 = vmatprep.subr.bf16.mxu0 0
        %2424 = vmatpush1.bf16.msra.mxu0 0
        %2425 = vmatprep.subr.bf16.mxu0 0
        %2426 = vmatpush1.bf16.msra.mxu0 0
        %2427 = vmatprep.subr.bf16.mxu0 0
        %2428 = vmatpush1.bf16.msra.mxu0 0
        %2429 = vmatprep.subr.bf16.mxu0 0
        %2430 = vmatpush1.bf16.msra.mxu0 0
        %2431 = vmatprep.mubr.bf16.mxu0 0
        %2432 = vmatmul.mubr.bf16.gmra.mrb[0].mxu0 %v2397
        %v2433 = vpop.f32.mrb[0].mxu0
        %v2434 = vadd.f32 0.0, %v2433
        %v2435 = vpop.f32.mrb[0].mxu0
        %v2436 = vpop.f32.mrb[0].mxu0
        %v2437 = vadd.f32 0.0, %v2436
        %v2438 = vpop.f32.mrb[0].mxu0
        %2439 = vdwg.mxu0
        %2440 = vst [vmem:[#allocation2 + $0x10] sm:$0xff] %v2434
        %2441 = vst [vmem:[#allocation2 + $0x30] sm:$0xff] %v2437
        %v2442 = vmul.f32 %v2016, %v2016
        %v2443 = vmul.f32 %v2020, %v2020
        %2444 = vadd.xlane.f32.xlu0 %v2442
        %v2445 = vpop.xlane.xlu0 %2444
        %2446 = vadd.xlane.f32.xlu0 %v2443
        %v2447 = vpop.xlane.xlu0 %2446
        %v2448 = vmax.f32 %v2445, 1e-24
        %v2449 = vmax.f32 %v2447, 1e-24
        %v2450 = vrsqrt.pop %v2448
        %v2451 = vrsqrt.pop %v2449
        %v2452 = vmul.f32 %v2016, %v2450
        %v2453 = vmul.f32 %v2020, %v2451
        %v2454 = vmul.f32 %v2024, %v2024
        %v2455 = vmul.f32 %v2028, %v2028
        %2456 = vadd.xlane.f32.xlu0 %v2454
        %v2457 = vpop.xlane.xlu0 %2456
        %2458 = vadd.xlane.f32.xlu0 %v2455
        %v2459 = vpop.xlane.xlu0 %2458
        %v2460 = vmax.f32 %v2457, 1e-24
        %v2461 = vmax.f32 %v2459, 1e-24
        %v2462 = vrsqrt.pop %v2460
        %v2463 = vrsqrt.pop %v2461
        %v2464 = vmul.f32 %v2024, %v2462
        %v2465 = vmul.f32 %v2028, %v2463
        %v2466 = vpack.c.bf16 %v2453, %v2452
        %v2467 = vpack.c.bf16 %v2465, %v2464
        %2468 = vmatprep.subr.bf16.mxu0 0
        %2469 = vmatpush1.bf16.xpose.msra.mxu0 %v2467
        %2470 = vmatprep.subr.bf16.mxu0 0
        %2471 = vmatpush1.bf16.xpose.msra.mxu0 0
        %2472 = vmatprep.subr.bf16.mxu0 0
        %2473 = vmatpush1.bf16.xpose.msra.mxu0 0
        %2474 = vmatprep.subr.bf16.mxu0 0
        %2475 = vmatpush1.bf16.xpose.msra.mxu0 0
        %2476 = vmatprep.subr.bf16.mxu0 0
        %2477 = vmatpush1.bf16.xpose.msra.mxu0 0
        %2478 = vmatprep.subr.bf16.mxu0 0
        %2479 = vmatpush1.bf16.xpose.msra.mxu0 0
        %2480 = vmatprep.subr.bf16.mxu0 0
        %2481 = vmatpush1.bf16.xpose.msra.mxu0 0
        %2482 = vmatprep.subr.bf16.mxu0 0
        %2483 = vmatpush1.bf16.xpose.msra.mxu0 0
        %2484 = vmatprep.subr.bf16.mxu0 0
        %2485 = vmatpush1.bf16.xpose.msra.mxu0 0
        %2486 = vmatprep.subr.bf16.mxu0 0
        %2487 = vmatpush1.bf16.xpose.msra.mxu0 0
        %2488 = vmatprep.subr.bf16.mxu0 0
        %2489 = vmatpush1.bf16.xpose.msra.mxu0 0
        %2490 = vmatprep.subr.bf16.mxu0 0
        %2491 = vmatpush1.bf16.xpose.msra.mxu0 0
        %2492 = vmatprep.subr.bf16.mxu0 0
        %2493 = vmatpush1.bf16.xpose.msra.mxu0 0
        %2494 = vmatprep.subr.bf16.mxu0 0
        %2495 = vmatpush1.bf16.xpose.msra.mxu0 0
        %2496 = vmatprep.subr.bf16.mxu0 0
        %2497 = vmatpush1.bf16.xpose.msra.mxu0 0
        %2498 = vmatprep.subr.bf16.mxu0 0
        %2499 = vmatpush1.bf16.xpose.msra.mxu0 0
        %2500 = vmatprep.mubr.bf16.mxu0 0
        %2501 = vmatmul.mubr.bf16.gmra.mrb[0].mxu0 %v2466
        %v2502 = vpop.f32.mrb[0].mxu0
        %v2503 = vadd.f32 0.0, %v2502
        %v2504 = vpop.f32.mrb[0].mxu0
        %v2505 = vpop.f32.mrb[0].mxu0
        %v2506 = vadd.f32 0.0, %v2505
        %v2507 = vpop.f32.mrb[0].mxu0
        %2508 = vdwg.mxu0
        %v2509 = vmul.f32 %v2503, %v2098
        %v2510 = vmul.f32 %v2506, %v2102
        %v2511 = vld [vmem:[%s2] sm:$0xff]
        %v2512 = vld [vmem:[%s2 + $0x8] sm:$0xff]
        %v2513 = vadd.f32 %v2509, %v2511
        %v2514 = vadd.f32 %v2510, %v2512
        %v2515 = vmul.f32 %v2513, 1.442695
        %v2516 = vpow.pop %v2515
        %v2517 = vmul.f32 %v2514, 1.442695
        %v2518 = vpow.pop %v2517
        %v2519 = vsel %vm574, %v2516, 0.0
        %2520 = vadd.xlane.f32.xlu0 %v2519
        %v2521 = vpop.xlane.xlu0 %2520
        %v2522 = vsel %vm574, %v2518, 0.0
        %2523 = vadd.xlane.f32.xlu0 %v2522
        %v2524 = vpop.xlane.xlu0 %2523
        %v2525 = vrcp.pop %v2521
        %v2526 = vrcp.pop %v2524
        %v2527 = vmul.f32 %v2516, %v2525
        %v2528 = vmul.f32 %v2518, %v2526
        %v2529 = vpack.c.bf16 %v2528, %v2527
        %v2530 = vpack.c.bf16 %v2012, %v2008
        %v2532 = vsel %vm574, %v2529, 0
        %2534 = vmatprep.subr.bf16.mxu0 0
        %2535 = vmatpush1.bf16.msra.mxu0 %v2530
        %2536 = vmatprep.subr.bf16.mxu0 0
        %2537 = vmatpush1.bf16.msra.mxu0 0
        %2538 = vmatprep.subr.bf16.mxu0 0
        %2539 = vmatpush1.bf16.msra.mxu0 0
        %2540 = vmatprep.subr.bf16.mxu0 0
        %2541 = vmatpush1.bf16.msra.mxu0 0
        %2542 = vmatprep.subr.bf16.mxu0 0
        %2543 = vmatpush1.bf16.msra.mxu0 0
        %2544 = vmatprep.subr.bf16.mxu0 0
        %2545 = vmatpush1.bf16.msra.mxu0 0
        %2546 = vmatprep.subr.bf16.mxu0 0
        %2547 = vmatpush1.bf16.msra.mxu0 0
        %2548 = vmatprep.subr.bf16.mxu0 0
        %2549 = vmatpush1.bf16.msra.mxu0 0
        %2550 = vmatprep.subr.bf16.mxu0 0
        %2551 = vmatpush1.bf16.msra.mxu0 0
        %2552 = vmatprep.subr.bf16.mxu0 0
        %2553 = vmatpush1.bf16.msra.mxu0 0
        %2554 = vmatprep.subr.bf16.mxu0 0
        %2555 = vmatpush1.bf16.msra.mxu0 0
        %2556 = vmatprep.subr.bf16.mxu0 0
        %2557 = vmatpush1.bf16.msra.mxu0 0
        %2558 = vmatprep.subr.bf16.mxu0 0
        %2559 = vmatpush1.bf16.msra.mxu0 0
        %2560 = vmatprep.subr.bf16.mxu0 0
        %2561 = vmatpush1.bf16.msra.mxu0 0
        %2562 = vmatprep.subr.bf16.mxu0 0
        %2563 = vmatpush1.bf16.msra.mxu0 0
        %2564 = vmatprep.subr.bf16.mxu0 0
        %2565 = vmatpush1.bf16.msra.mxu0 0
        %2566 = vmatprep.mubr.bf16.mxu0 0
        %2567 = vmatmul.mubr.bf16.gmra.mrb[0].mxu0 %v2532
        %v2568 = vpop.f32.mrb[0].mxu0
        %v2569 = vadd.f32 0.0, %v2568
        %v2570 = vpop.f32.mrb[0].mxu0
        %v2571 = vpop.f32.mrb[0].mxu0
        %v2572 = vadd.f32 0.0, %v2571
        %v2573 = vpop.f32.mrb[0].mxu0
        %2574 = vdwg.mxu0
        %2575 = vst [vmem:[#allocation2 + $0x18] sm:$0xff] %v2569
        %2576 = vst [vmem:[#allocation2 + $0x38] sm:$0xff] %v2572
        %v2577 = vld [vmem:[%s6] sm:$0xf]
        %v2578 = vld [vmem:[%s6 + $0x4] sm:$0xf]
        %v2579 = vld [vmem:[#allocation2] sm:$0xff]
        %v2580 = vld [vmem:[#allocation2 + $0x8] sm:$0xff]
        %v2581 = vld [vmem:[#allocation2 + $0x10] sm:$0xff]
        %v2582 = vld [vmem:[#allocation2 + $0x18] sm:$0xff]
        %v2583 = vld [vmem:[#allocation2 + $0x20] sm:$0xff]
        %v2584 = vld [vmem:[#allocation2 + $0x28] sm:$0xff]
        %v2585 = vld [vmem:[#allocation2 + $0x30] sm:$0xff]
        %v2586 = vld [vmem:[#allocation2 + $0x38] sm:$0xff]
        %v2587 = vpack.c.bf16 %v2583, %v2579
        %v2588 = vpack.c.bf16 %v2584, %v2580
        %v2589 = vpack.c.bf16 %v2585, %v2581
        %v2590 = vpack.c.bf16 %v2586, %v2582
        %2591 = vset.pattern.permute.xlu0 4
        %2592 = vperm.xlu0 %2591, %v372
        %v2593 = vpop.permute.xlu0 %2592
        %2595 = vset.pattern.permute.xlu0 4
        %2596 = vperm.xlu0 %2595, %v373
        %v2597 = vpop.permute.xlu0 %2596
        %v2601 = vunpack.c.l.b16 %v2577
        %v2602 = vunpack.c.l.b16 %v2578
        %v2603 = vpack.c.b16 %v2602, %v2601
        %v2605 = vsel %vm574, %v2603, 0
        %2607 = vmatprep.subr.bf16.mxu0 %v2588
        %2608 = vmatpush1.bf16.msra.mxu0 %v2587
        %2609 = vmatprep.subr.bf16.mxu0 0
        %2610 = vmatpush1.bf16.msra.mxu0 0
        %2611 = vmatprep.subr.bf16.mxu0 0
        %2612 = vmatpush1.bf16.msra.mxu0 0
        %2613 = vmatprep.subr.bf16.mxu0 0
        %2614 = vmatpush1.bf16.msra.mxu0 0
        %2615 = vmatprep.subr.bf16.mxu0 0
        %2616 = vmatpush1.bf16.msra.mxu0 0
        %2617 = vmatprep.subr.bf16.mxu0 0
        %2618 = vmatpush1.bf16.msra.mxu0 0
        %2619 = vmatprep.subr.bf16.mxu0 0
        %2620 = vmatpush1.bf16.msra.mxu0 0
        %2621 = vmatprep.subr.bf16.mxu0 0
        %2622 = vmatpush1.bf16.msra.mxu0 0
        %2623 = vmatprep.subr.bf16.mxu0 0
        %2624 = vmatpush1.bf16.msra.mxu0 0
        %2625 = vmatprep.subr.bf16.mxu0 0
        %2626 = vmatpush1.bf16.msra.mxu0 0
        %2627 = vmatprep.subr.bf16.mxu0 0
        %2628 = vmatpush1.bf16.msra.mxu0 0
        %2629 = vmatprep.subr.bf16.mxu0 0
        %2630 = vmatpush1.bf16.msra.mxu0 0
        %2631 = vmatprep.subr.bf16.mxu0 0
        %2632 = vmatpush1.bf16.msra.mxu0 0
        %2633 = vmatprep.subr.bf16.mxu0 0
        %2634 = vmatpush1.bf16.msra.mxu0 0
        %2635 = vmatprep.subr.bf16.mxu0 0
        %2636 = vmatpush1.bf16.msra.mxu0 0
        %2637 = vmatprep.subr.bf16.mxu0 0
        %2638 = vmatpush1.bf16.msra.mxu0 0
        %2639 = vmatprep.mubr.bf16.mxu0 0
        %2640 = vmatmul.mubr.bf16.gmra.mrb[0].mxu0 %v2605
        %v2641 = vpop.f32.mrb[0].mxu0
        %v2642 = vadd.f32 %v2593, %v2641
        %v2643 = vpop.f32.mrb[0].mxu0
        %v2644 = vadd.f32 %v2593, %v2643
        %v2645 = vpop.f32.mrb[0].mxu0
        %v2646 = vadd.f32 %v2597, %v2645
        %v2647 = vpop.f32.mrb[0].mxu0
        %v2648 = vadd.f32 %v2597, %v2647
        %2649 = vdwg.mxu0
        %2650 = vmatprep.subr.bf16.mxu0 %v2590
        %2651 = vmatpush1.bf16.msra.mxu0 %v2589
        %2652 = vmatprep.subr.bf16.mxu0 0
        %2653 = vmatpush1.bf16.msra.mxu0 0
        %2654 = vmatprep.subr.bf16.mxu0 0
        %2655 = vmatpush1.bf16.msra.mxu0 0
        %2656 = vmatprep.subr.bf16.mxu0 0
        %2657 = vmatpush1.bf16.msra.mxu0 0
        %2658 = vmatprep.subr.bf16.mxu0 0
        %2659 = vmatpush1.bf16.msra.mxu0 0
        %2660 = vmatprep.subr.bf16.mxu0 0
        %2661 = vmatpush1.bf16.msra.mxu0 0
        %2662 = vmatprep.subr.bf16.mxu0 0
        %2663 = vmatpush1.bf16.msra.mxu0 0
        %2664 = vmatprep.subr.bf16.mxu0 0
        %2665 = vmatpush1.bf16.msra.mxu0 0
        %2666 = vmatprep.subr.bf16.mxu0 0
        %2667 = vmatpush1.bf16.msra.mxu0 0
        %2668 = vmatprep.subr.bf16.mxu0 0
        %2669 = vmatpush1.bf16.msra.mxu0 0
        %2670 = vmatprep.subr.bf16.mxu0 0
        %2671 = vmatpush1.bf16.msra.mxu0 0
        %2672 = vmatprep.subr.bf16.mxu0 0
        %2673 = vmatpush1.bf16.msra.mxu0 0
        %2674 = vmatprep.subr.bf16.mxu0 0
        %2675 = vmatpush1.bf16.msra.mxu0 0
        %2676 = vmatprep.subr.bf16.mxu0 0
        %2677 = vmatpush1.bf16.msra.mxu0 0
        %2678 = vmatprep.subr.bf16.mxu0 0
        %2679 = vmatpush1.bf16.msra.mxu0 0
        %2680 = vmatprep.subr.bf16.mxu0 0
        %2681 = vmatpush1.bf16.msra.mxu0 0
        %2682 = vmatprep.mubr.bf16.mxu0 0
        %2683 = vmatmul.mubr.bf16.gmra.mrb[0].mxu0 %v2605
        %v2684 = vpop.f32.mrb[0].mxu0
        %v2685 = vadd.f32 %v2593, %v2684
        %v2686 = vpop.f32.mrb[0].mxu0
        %v2687 = vadd.f32 %v2593, %v2686
        %v2688 = vpop.f32.mrb[0].mxu0
        %v2689 = vadd.f32 %v2597, %v2688
        %v2690 = vpop.f32.mrb[0].mxu0
        %v2691 = vadd.f32 %v2597, %v2690
        %2692 = vdwg.mxu0
        %v2693 = vadd.f32 %v363, %v2642
        %v2694 = vadd.f32 %v364, %v2644
        %v2695 = vadd.f32 %v365, %v2685
        %v2696 = vadd.f32 %v366, %v2687
        %v2697 = vadd.f32 %v367, %v2646
        %v2698 = vadd.f32 %v368, %v2648
        %v2699 = vadd.f32 %v369, %v2689
        %v2700 = vadd.f32 %v370, %v2691
        %v2701 = vadd.f32 %v2693, %v2697
        %v2702 = vrot.slane %v2701, 4
        %v2703 = vadd.f32 %v2701, %v2702
        %v2704 = vrot.slane %v2703, 2
        %v2705 = vadd.f32 %v2703, %v2704
        %v2706 = vrot.slane %v2705, 1
        %v2707 = vadd.f32 %v2705, %v2706
        %v2708 = vadd.f32 %v2694, %v2698
        %v2709 = vrot.slane %v2708, 4
        %v2710 = vadd.f32 %v2708, %v2709
        %v2711 = vrot.slane %v2710, 2
        %v2712 = vadd.f32 %v2710, %v2711
        %v2713 = vrot.slane %v2712, 1
        %v2714 = vadd.f32 %v2712, %v2713
        %v2715 = vadd.f32 %v2695, %v2699
        %v2716 = vrot.slane %v2715, 4
        %v2717 = vadd.f32 %v2715, %v2716
        %v2718 = vrot.slane %v2717, 2
        %v2719 = vadd.f32 %v2717, %v2718
        %v2720 = vrot.slane %v2719, 1
        %v2721 = vadd.f32 %v2719, %v2720
        %v2722 = vadd.f32 %v2696, %v2700
        %v2723 = vrot.slane %v2722, 4
        %v2724 = vadd.f32 %v2722, %v2723
        %v2725 = vrot.slane %v2724, 2
        %v2726 = vadd.f32 %v2724, %v2725
        %v2727 = vrot.slane %v2726, 1
        %v2728 = vadd.f32 %v2726, %v2727
        %v2729 = vmul.f32 %v2707, %v416
        %v2730 = vmul.f32 %v2714, %v416
        %v2731 = vmul.f32 %v2721, %v416
        %v2732 = vmul.f32 %v2728, %v416
        %v2733 = vsub.f32 %v2693, %v2729
        %v2734 = vsub.f32 %v2694, %v2730
        %v2735 = vsub.f32 %v2695, %v2731
        %v2736 = vsub.f32 %v2696, %v2732
        %v2737 = vsub.f32 %v2697, %v2729
        %v2738 = vsub.f32 %v2698, %v2730
        %v2739 = vsub.f32 %v2699, %v2731
        %v2740 = vsub.f32 %v2700, %v2732
        %v2741 = vmul.f32 %v2733, %v2733
        %v2742 = vmul.f32 %v2734, %v2734
        %v2743 = vmul.f32 %v2735, %v2735
        %v2744 = vmul.f32 %v2736, %v2736
        %v2745 = vmul.f32 %v2737, %v2737
        %v2746 = vmul.f32 %v2738, %v2738
        %v2747 = vmul.f32 %v2739, %v2739
        %v2748 = vmul.f32 %v2740, %v2740
        %v2749 = vadd.f32 %v2741, %v2745
        %v2750 = vrot.slane %v2749, 4
        %v2751 = vadd.f32 %v2749, %v2750
        %v2752 = vrot.slane %v2751, 2
        %v2753 = vadd.f32 %v2751, %v2752
        %v2754 = vrot.slane %v2753, 1
        %v2755 = vadd.f32 %v2753, %v2754
        %v2756 = vadd.f32 %v2742, %v2746
        %v2757 = vrot.slane %v2756, 4
        %v2758 = vadd.f32 %v2756, %v2757
        %v2759 = vrot.slane %v2758, 2
        %v2760 = vadd.f32 %v2758, %v2759
        %v2761 = vrot.slane %v2760, 1
        %v2762 = vadd.f32 %v2760, %v2761
        %v2763 = vadd.f32 %v2743, %v2747
        %v2764 = vrot.slane %v2763, 4
        %v2765 = vadd.f32 %v2763, %v2764
        %v2766 = vrot.slane %v2765, 2
        %v2767 = vadd.f32 %v2765, %v2766
        %v2768 = vrot.slane %v2767, 1
        %v2769 = vadd.f32 %v2767, %v2768
        %v2770 = vadd.f32 %v2744, %v2748
        %v2771 = vrot.slane %v2770, 4
        %v2772 = vadd.f32 %v2770, %v2771
        %v2773 = vrot.slane %v2772, 2
        %v2774 = vadd.f32 %v2772, %v2773
        %v2775 = vrot.slane %v2774, 1
        %v2776 = vadd.f32 %v2774, %v2775
        %v2777 = vmul.f32 %v2755, %v416
        %v2778 = vmul.f32 %v2762, %v416
        %v2779 = vmul.f32 %v2769, %v416
        %v2780 = vmul.f32 %v2776, %v416
        %v2781 = vadd.f32 %v2777, 1e-05
        %v2782 = vadd.f32 %v2778, 1e-05
        %v2783 = vadd.f32 %v2779, 1e-05
        %v2784 = vadd.f32 %v2780, 1e-05
        %v2785 = vrsqrt.pop %v2781
        %v2786 = vrsqrt.pop %v2782
        %v2787 = vrsqrt.pop %v2783
        %v2788 = vrsqrt.pop %v2784
        %v2789 = vmul.f32 %v2733, %v2785
        %v2790 = vmul.f32 %v2734, %v2786
        %v2791 = vmul.f32 %v2735, %v2787
        %v2792 = vmul.f32 %v2736, %v2788
        %v2793 = vmul.f32 %v2737, %v2785
        %v2794 = vmul.f32 %v2738, %v2786
        %v2795 = vmul.f32 %v2739, %v2787
        %v2796 = vmul.f32 %v2740, %v2788
        %2797 = vset.pattern.permute.xlu0 2
        %2798 = vperm.xlu0 %2797, %v372
        %v2799 = vpop.permute.xlu0 %2798
        %2801 = vset.pattern.permute.xlu0 2
        %2802 = vperm.xlu0 %2801, %v373
        %v2803 = vpop.permute.xlu0 %2802
        %v2805 = vmul.f32 %v2789, %v2799
        %v2806 = vmul.f32 %v2790, %v2799
        %v2807 = vmul.f32 %v2791, %v2799
        %v2808 = vmul.f32 %v2792, %v2799
        %v2809 = vmul.f32 %v2793, %v2803
        %v2810 = vmul.f32 %v2794, %v2803
        %v2811 = vmul.f32 %v2795, %v2803
        %v2812 = vmul.f32 %v2796, %v2803
        %2813 = vset.pattern.permute.xlu0 3
        %2814 = vperm.xlu0 %2813, %v372
        %v2815 = vpop.permute.xlu0 %2814
        %2817 = vset.pattern.permute.xlu0 3
        %2818 = vperm.xlu0 %2817, %v373
        %v2819 = vpop.permute.xlu0 %2818
        %v2821 = vadd.f32 %v2805, %v2815
        %v2822 = vadd.f32 %v2806, %v2815
        %v2823 = vadd.f32 %v2807, %v2815
        %v2824 = vadd.f32 %v2808, %v2815
        %v2825 = vadd.f32 %v2809, %v2819
        %v2826 = vadd.f32 %v2810, %v2819
        %v2827 = vadd.f32 %v2811, %v2819
        %v2828 = vadd.f32 %v2812, %v2819
        %v2829 = vld [vmem:[%s7] sm:$0xf]
        %v2830 = vld [vmem:[%s7 + $0x4] sm:$0xf]
        %v2831 = vld [vmem:[%s7 + $0x8] sm:$0xf]
        %v2832 = vld [vmem:[%s7 + $0xc] sm:$0xf]
        %v2833 = vld [vmem:[%s7 + $0x10] sm:$0xf]
        %v2834 = vld [vmem:[%s7 + $0x14] sm:$0xf]
        %v2835 = vld [vmem:[%s7 + $0x18] sm:$0xf]
        %v2836 = vld [vmem:[%s7 + $0x1c] sm:$0xf]
        %v2837 = vpack.c.bf16 %v2825, %v2821
        %v2838 = vpack.c.bf16 %v2826, %v2822
        %v2839 = vpack.c.bf16 %v2827, %v2823
        %v2840 = vpack.c.bf16 %v2828, %v2824
        %2842 = vset.pattern.permute.xlu0 0
        %2843 = vperm.xlu0 %2842, %v380
        %v2844 = vpop.permute.xlu0 %2843
        %2847 = vset.pattern.permute.xlu0 0
        %2848 = vperm.xlu0 %2847, %v381
        %v2849 = vpop.permute.xlu0 %2848
        %2852 = vset.pattern.permute.xlu0 0
        %2853 = vperm.xlu0 %2852, %v382
        %v2854 = vpop.permute.xlu0 %2853
        %2857 = vset.pattern.permute.xlu0 0
        %2858 = vperm.xlu0 %2857, %v383
        %v2859 = vpop.permute.xlu0 %2858
        %2862 = vset.pattern.permute.xlu0 0
        %2863 = vperm.xlu0 %2862, %v384
        %v2864 = vpop.permute.xlu0 %2863
        %2867 = vset.pattern.permute.xlu0 0
        %2868 = vperm.xlu0 %2867, %v385
        %v2869 = vpop.permute.xlu0 %2868
        %2872 = vset.pattern.permute.xlu0 0
        %2873 = vperm.xlu0 %2872, %v386
        %v2874 = vpop.permute.xlu0 %2873
        %2877 = vset.pattern.permute.xlu0 0
        %2878 = vperm.xlu0 %2877, %v387
        %v2879 = vpop.permute.xlu0 %2878
        %v2889 = vunpack.c.l.b16 %v2829
        %v2890 = vunpack.c.l.b16 %v2830
        %v2891 = vunpack.c.l.b16 %v2831
        %v2892 = vunpack.c.l.b16 %v2832
        %v2893 = vunpack.c.l.b16 %v2833
        %v2894 = vunpack.c.l.b16 %v2834
        %v2895 = vunpack.c.l.b16 %v2835
        %v2896 = vunpack.c.l.b16 %v2836
        %v2897 = vpack.c.b16 %v2890, %v2889
        %v2898 = vpack.c.b16 %v2892, %v2891
        %v2899 = vpack.c.b16 %v2894, %v2893
        %v2900 = vpack.c.b16 %v2896, %v2895
        %v2902 = vsel %vm574, %v2897, 0
        %v2905 = vsel %vm574, %v2898, 0
        %v2908 = vsel %vm574, %v2899, 0
        %v2911 = vsel %vm574, %v2900, 0
        %2913 = vmatprep.subr.bf16.mxu0 %v2838
        %2914 = vmatpush1.bf16.msra.mxu0 %v2837
        %2915 = vmatprep.subr.bf16.mxu0 0
        %2916 = vmatpush1.bf16.msra.mxu0 0
        %2917 = vmatprep.subr.bf16.mxu0 0
        %2918 = vmatpush1.bf16.msra.mxu0 0
        %2919 = vmatprep.subr.bf16.mxu0 0
        %2920 = vmatpush1.bf16.msra.mxu0 0
        %2921 = vmatprep.subr.bf16.mxu0 0
        %2922 = vmatpush1.bf16.msra.mxu0 0
        %2923 = vmatprep.subr.bf16.mxu0 0
        %2924 = vmatpush1.bf16.msra.mxu0 0
        %2925 = vmatprep.subr.bf16.mxu0 0
        %2926 = vmatpush1.bf16.msra.mxu0 0
        %2927 = vmatprep.subr.bf16.mxu0 0
        %2928 = vmatpush1.bf16.msra.mxu0 0
        %2929 = vmatprep.subr.bf16.mxu0 0
        %2930 = vmatpush1.bf16.msra.mxu0 0
        %2931 = vmatprep.subr.bf16.mxu0 0
        %2932 = vmatpush1.bf16.msra.mxu0 0
        %2933 = vmatprep.subr.bf16.mxu0 0
        %2934 = vmatpush1.bf16.msra.mxu0 0
        %2935 = vmatprep.subr.bf16.mxu0 0
        %2936 = vmatpush1.bf16.msra.mxu0 0
        %2937 = vmatprep.subr.bf16.mxu0 0
        %2938 = vmatpush1.bf16.msra.mxu0 0
        %2939 = vmatprep.subr.bf16.mxu0 0
        %2940 = vmatpush1.bf16.msra.mxu0 0
        %2941 = vmatprep.subr.bf16.mxu0 0
        %2942 = vmatpush1.bf16.msra.mxu0 0
        %2943 = vmatprep.subr.bf16.mxu0 0
        %2944 = vmatpush1.bf16.msra.mxu0 0
        %2945 = vmatprep.mubr.bf16.mxu0 0
        %2946 = vmatmul.mubr.bf16.gmra.mrb[0].mxu0 %v2902
        %v2947 = vpop.f32.mrb[0].mxu0
        %v2948 = vadd.f32 %v2844, %v2947
        %v2949 = vpop.f32.mrb[0].mxu0
        %v2950 = vadd.f32 %v2844, %v2949
        %v2951 = vpop.f32.mrb[0].mxu0
        %v2952 = vadd.f32 %v2849, %v2951
        %v2953 = vpop.f32.mrb[0].mxu0
        %v2954 = vadd.f32 %v2849, %v2953
        %2955 = vmatprep.mubr.bf16.mxu0 0
        %2956 = vmatmul.mubr.bf16.gmra.mrb[0].mxu0 %v2905
        %v2957 = vpop.f32.mrb[0].mxu0
        %v2958 = vadd.f32 %v2854, %v2957
        %v2959 = vpop.f32.mrb[0].mxu0
        %v2960 = vadd.f32 %v2854, %v2959
        %v2961 = vpop.f32.mrb[0].mxu0
        %v2962 = vadd.f32 %v2859, %v2961
        %v2963 = vpop.f32.mrb[0].mxu0
        %v2964 = vadd.f32 %v2859, %v2963
        %2965 = vmatprep.mubr.bf16.mxu0 0
        %2966 = vmatmul.mubr.bf16.gmra.mrb[0].mxu0 %v2908
        %v2967 = vpop.f32.mrb[0].mxu0
        %v2968 = vadd.f32 %v2864, %v2967
        %v2969 = vpop.f32.mrb[0].mxu0
        %v2970 = vadd.f32 %v2864, %v2969
        %v2971 = vpop.f32.mrb[0].mxu0
        %v2972 = vadd.f32 %v2869, %v2971
        %v2973 = vpop.f32.mrb[0].mxu0
        %v2974 = vadd.f32 %v2869, %v2973
        %2975 = vmatprep.mubr.bf16.mxu0 0
        %2976 = vmatmul.mubr.bf16.gmra.mrb[0].mxu0 %v2911
        %v2977 = vpop.f32.mrb[0].mxu0
        %v2978 = vadd.f32 %v2874, %v2977
        %v2979 = vpop.f32.mrb[0].mxu0
        %v2980 = vadd.f32 %v2874, %v2979
        %v2981 = vpop.f32.mrb[0].mxu0
        %v2982 = vadd.f32 %v2879, %v2981
        %v2983 = vpop.f32.mrb[0].mxu0
        %v2984 = vadd.f32 %v2879, %v2983
        %2985 = vdwg.mxu0
        %2986 = vmatprep.subr.bf16.mxu0 %v2840
        %2987 = vmatpush1.bf16.msra.mxu0 %v2839
        %2988 = vmatprep.subr.bf16.mxu0 0
        %2989 = vmatpush1.bf16.msra.mxu0 0
        %2990 = vmatprep.subr.bf16.mxu0 0
        %2991 = vmatpush1.bf16.msra.mxu0 0
        %2992 = vmatprep.subr.bf16.mxu0 0
        %2993 = vmatpush1.bf16.msra.mxu0 0
        %2994 = vmatprep.subr.bf16.mxu0 0
        %2995 = vmatpush1.bf16.msra.mxu0 0
        %2996 = vmatprep.subr.bf16.mxu0 0
        %2997 = vmatpush1.bf16.msra.mxu0 0
        %2998 = vmatprep.subr.bf16.mxu0 0
        %2999 = vmatpush1.bf16.msra.mxu0 0
        %3000 = vmatprep.subr.bf16.mxu0 0
        %3001 = vmatpush1.bf16.msra.mxu0 0
        %3002 = vmatprep.subr.bf16.mxu0 0
        %3003 = vmatpush1.bf16.msra.mxu0 0
        %3004 = vmatprep.subr.bf16.mxu0 0
        %3005 = vmatpush1.bf16.msra.mxu0 0
        %3006 = vmatprep.subr.bf16.mxu0 0
        %3007 = vmatpush1.bf16.msra.mxu0 0
        %3008 = vmatprep.subr.bf16.mxu0 0
        %3009 = vmatpush1.bf16.msra.mxu0 0
        %3010 = vmatprep.subr.bf16.mxu0 0
        %3011 = vmatpush1.bf16.msra.mxu0 0
        %3012 = vmatprep.subr.bf16.mxu0 0
        %3013 = vmatpush1.bf16.msra.mxu0 0
        %3014 = vmatprep.subr.bf16.mxu0 0
        %3015 = vmatpush1.bf16.msra.mxu0 0
        %3016 = vmatprep.subr.bf16.mxu0 0
        %3017 = vmatpush1.bf16.msra.mxu0 0
        %3018 = vmatprep.mubr.bf16.mxu0 0
        %3019 = vmatmul.mubr.bf16.gmra.mrb[0].mxu0 %v2902
        %v3020 = vpop.f32.mrb[0].mxu0
        %v3021 = vadd.f32 %v2844, %v3020
        %v3022 = vpop.f32.mrb[0].mxu0
        %v3023 = vadd.f32 %v2844, %v3022
        %v3024 = vpop.f32.mrb[0].mxu0
        %v3025 = vadd.f32 %v2849, %v3024
        %v3026 = vpop.f32.mrb[0].mxu0
        %v3027 = vadd.f32 %v2849, %v3026
        %3028 = vmatprep.mubr.bf16.mxu0 0
        %3029 = vmatmul.mubr.bf16.gmra.mrb[0].mxu0 %v2905
        %v3030 = vpop.f32.mrb[0].mxu0
        %v3031 = vadd.f32 %v2854, %v3030
        %v3032 = vpop.f32.mrb[0].mxu0
        %v3033 = vadd.f32 %v2854, %v3032
        %v3034 = vpop.f32.mrb[0].mxu0
        %v3035 = vadd.f32 %v2859, %v3034
        %v3036 = vpop.f32.mrb[0].mxu0
        %v3037 = vadd.f32 %v2859, %v3036
        %3038 = vmatprep.mubr.bf16.mxu0 0
        %3039 = vmatmul.mubr.bf16.gmra.mrb[0].mxu0 %v2908
        %v3040 = vpop.f32.mrb[0].mxu0
        %v3041 = vadd.f32 %v2864, %v3040
        %v3042 = vpop.f32.mrb[0].mxu0
        %v3043 = vadd.f32 %v2864, %v3042
        %v3044 = vpop.f32.mrb[0].mxu0
        %v3045 = vadd.f32 %v2869, %v3044
        %v3046 = vpop.f32.mrb[0].mxu0
        %v3047 = vadd.f32 %v2869, %v3046
        %3048 = vmatprep.mubr.bf16.mxu0 0
        %3049 = vmatmul.mubr.bf16.gmra.mrb[0].mxu0 %v2911
        %v3050 = vpop.f32.mrb[0].mxu0
        %v3051 = vadd.f32 %v2874, %v3050
        %v3052 = vpop.f32.mrb[0].mxu0
        %v3053 = vadd.f32 %v2874, %v3052
        %v3054 = vpop.f32.mrb[0].mxu0
        %v3055 = vadd.f32 %v2879, %v3054
        %v3056 = vpop.f32.mrb[0].mxu0
        %v3057 = vadd.f32 %v2879, %v3056
        %3058 = vdwg.mxu0
        %v3059 = vmul.f32 %v2948, %v714
        %v3060 = vmul.f32 %v2950, %v718
        %v3061 = vmul.f32 %v3021, %v722
        %v3062 = vmul.f32 %v3023, %v726
        %v3063 = vmul.f32 %v2952, %v714
        %v3064 = vmul.f32 %v2954, %v718
        %v3065 = vmul.f32 %v3025, %v722
        %v3066 = vmul.f32 %v3027, %v726
        %v3067 = vmul.f32 %v2958, %v714
        %v3068 = vmul.f32 %v2960, %v718
        %v3069 = vmul.f32 %v3031, %v722
        %v3070 = vmul.f32 %v3033, %v726
        %v3071 = vmul.f32 %v2962, %v714
        %v3072 = vmul.f32 %v2964, %v718
        %v3073 = vmul.f32 %v3035, %v722
        %v3074 = vmul.f32 %v3037, %v726
        %v3075 = vmul.f32 %v2968, %v714
        %v3076 = vmul.f32 %v2970, %v718
        %v3077 = vmul.f32 %v3041, %v722
        %v3078 = vmul.f32 %v3043, %v726
        %v3079 = vmul.f32 %v2972, %v714
        %v3080 = vmul.f32 %v2974, %v718
        %v3081 = vmul.f32 %v3045, %v722
        %v3082 = vmul.f32 %v3047, %v726
        %v3083 = vmul.f32 %v2978, %v714
        %v3084 = vmul.f32 %v2980, %v718
        %v3085 = vmul.f32 %v3051, %v722
        %v3086 = vmul.f32 %v3053, %v726
        %v3087 = vmul.f32 %v2982, %v714
        %v3088 = vmul.f32 %v2984, %v718
        %v3089 = vmul.f32 %v3055, %v722
        %v3090 = vmul.f32 %v3057, %v726
        %3091 = vrot.lane.b32.xlu0 %v3059, 11
        %v3092 = vpop.permute.xlu0 %3091
        %3093 = vrot.lane.b32.xlu0 %v3063, 11
        %v3094 = vpop.permute.xlu0 %3093
        %3095 = vrot.lane.b32.xlu0 %v3067, 11
        %v3096 = vpop.permute.xlu0 %3095
        %3097 = vrot.lane.b32.xlu0 %v3071, 11
        %v3098 = vpop.permute.xlu0 %3097
        %3099 = vrot.lane.b32.xlu0 %v3075, 11
        %v3100 = vpop.permute.xlu0 %3099
        %3101 = vrot.lane.b32.xlu0 %v3079, 11
        %v3102 = vpop.permute.xlu0 %3101
        %3103 = vrot.lane.b32.xlu0 %v3083, 11
        %v3104 = vpop.permute.xlu0 %3103
        %3105 = vrot.lane.b32.xlu0 %v3087, 11
        %v3106 = vpop.permute.xlu0 %3105
        %3107 = vrot.lane.b32.xlu0 %v3060, 11
        %v3108 = vpop.permute.xlu0 %3107
        %3109 = vrot.lane.b32.xlu0 %v3064, 11
        %v3110 = vpop.permute.xlu0 %3109
        %3111 = vrot.lane.b32.xlu0 %v3068, 11
        %v3112 = vpop.permute.xlu0 %3111
        %3113 = vrot.lane.b32.xlu0 %v3072, 11
        %v3114 = vpop.permute.xlu0 %3113
        %3115 = vrot.lane.b32.xlu0 %v3076, 11
        %v3116 = vpop.permute.xlu0 %3115
        %3117 = vrot.lane.b32.xlu0 %v3080, 11
        %v3118 = vpop.permute.xlu0 %3117
        %3119 = vrot.lane.b32.xlu0 %v3084, 11
        %v3120 = vpop.permute.xlu0 %3119
        %3121 = vrot.lane.b32.xlu0 %v3088, 11
        %v3122 = vpop.permute.xlu0 %3121
        %3123 = vrot.lane.b32.xlu0 %v3061, 11
        %v3124 = vpop.permute.xlu0 %3123
        %3125 = vrot.lane.b32.xlu0 %v3065, 11
        %v3126 = vpop.permute.xlu0 %3125
        %3127 = vrot.lane.b32.xlu0 %v3069, 11
        %v3128 = vpop.permute.xlu0 %3127
        %3129 = vrot.lane.b32.xlu0 %v3073, 11
        %v3130 = vpop.permute.xlu0 %3129
        %3131 = vrot.lane.b32.xlu0 %v3077, 11
        %v3132 = vpop.permute.xlu0 %3131
        %3133 = vrot.lane.b32.xlu0 %v3081, 11
        %v3134 = vpop.permute.xlu0 %3133
        %3135 = vrot.lane.b32.xlu0 %v3085, 11
        %v3136 = vpop.permute.xlu0 %3135
        %3137 = vrot.lane.b32.xlu0 %v3089, 11
        %v3138 = vpop.permute.xlu0 %3137
        %3139 = vrot.lane.b32.xlu0 %v3062, 11
        %v3140 = vpop.permute.xlu0 %3139
        %3141 = vrot.lane.b32.xlu0 %v3066, 11
        %v3142 = vpop.permute.xlu0 %3141
        %3143 = vrot.lane.b32.xlu0 %v3070, 11
        %v3144 = vpop.permute.xlu0 %3143
        %3145 = vrot.lane.b32.xlu0 %v3074, 11
        %v3146 = vpop.permute.xlu0 %3145
        %3147 = vrot.lane.b32.xlu0 %v3078, 11
        %v3148 = vpop.permute.xlu0 %3147
        %3149 = vrot.lane.b32.xlu0 %v3082, 11
        %v3150 = vpop.permute.xlu0 %3149
        %3151 = vrot.lane.b32.xlu0 %v3086, 11
        %v3152 = vpop.permute.xlu0 %3151
        %3153 = vrot.lane.b32.xlu0 %v3090, 11
        %v3154 = vpop.permute.xlu0 %3153
        %v3155 = vsel %vm805, %v3124, %v3140
        %v3156 = vsel %vm805, %v3126, %v3142
        %v3157 = vsel %vm805, %v3128, %v3144
        %v3158 = vsel %vm805, %v3130, %v3146
        %v3159 = vsel %vm805, %v3132, %v3148
        %v3160 = vsel %vm805, %v3134, %v3150
        %v3161 = vsel %vm805, %v3136, %v3152
        %v3162 = vsel %vm805, %v3138, %v3154
        %v3163 = vsel %vm805, %v3108, %v3124
        %v3164 = vsel %vm805, %v3110, %v3126
        %v3165 = vsel %vm805, %v3112, %v3128
        %v3166 = vsel %vm805, %v3114, %v3130
        %v3167 = vsel %vm805, %v3116, %v3132
        %v3168 = vsel %vm805, %v3118, %v3134
        %v3169 = vsel %vm805, %v3120, %v3136
        %v3170 = vsel %vm805, %v3122, %v3138
        %v3171 = vsel %vm805, %v3092, %v3108
        %v3172 = vsel %vm805, %v3094, %v3110
        %v3173 = vsel %vm805, %v3096, %v3112
        %v3174 = vsel %vm805, %v3098, %v3114
        %v3175 = vsel %vm805, %v3100, %v3116
        %v3176 = vsel %vm805, %v3102, %v3118
        %v3177 = vsel %vm805, %v3104, %v3120
        %v3178 = vsel %vm805, %v3106, %v3122
        %v3179 = vsel %vm805, %v3140, %v3092
        %v3180 = vsel %vm805, %v3142, %v3094
        %v3181 = vsel %vm805, %v3144, %v3096
        %v3182 = vsel %vm805, %v3146, %v3098
        %v3183 = vsel %vm805, %v3148, %v3100
        %v3184 = vsel %vm805, %v3150, %v3102
        %v3185 = vsel %vm805, %v3152, %v3104
        %v3186 = vsel %vm805, %v3154, %v3106
        %3187 = vset.pattern.permute.xlu0 1
        %3188 = vperm.xlu0 %3187, %v380
        %v3189 = vpop.permute.xlu0 %3188
        %3191 = vset.pattern.permute.xlu0 1
        %3192 = vperm.xlu0 %3191, %v381
        %v3193 = vpop.permute.xlu0 %3192
        %3195 = vset.pattern.permute.xlu0 1
        %3196 = vperm.xlu0 %3195, %v382
        %v3197 = vpop.permute.xlu0 %3196
        %3199 = vset.pattern.permute.xlu0 1
        %3200 = vperm.xlu0 %3199, %v383
        %v3201 = vpop.permute.xlu0 %3200
        %3203 = vset.pattern.permute.xlu0 1
        %3204 = vperm.xlu0 %3203, %v384
        %v3205 = vpop.permute.xlu0 %3204
        %3207 = vset.pattern.permute.xlu0 1
        %3208 = vperm.xlu0 %3207, %v385
        %v3209 = vpop.permute.xlu0 %3208
        %3211 = vset.pattern.permute.xlu0 1
        %3212 = vperm.xlu0 %3211, %v386
        %v3213 = vpop.permute.xlu0 %3212
        %3215 = vset.pattern.permute.xlu0 1
        %3216 = vperm.xlu0 %3215, %v387
        %v3217 = vpop.permute.xlu0 %3216
        %v3219 = vmul.f32 %v3189, %v3179
        %v3220 = vmul.f32 %v3189, %v3171
        %v3221 = vmul.f32 %v3189, %v3163
        %v3222 = vmul.f32 %v3189, %v3155
        %v3223 = vmul.f32 %v3193, %v3180
        %v3224 = vmul.f32 %v3193, %v3172
        %v3225 = vmul.f32 %v3193, %v3164
        %v3226 = vmul.f32 %v3193, %v3156
        %v3227 = vmul.f32 %v3197, %v3181
        %v3228 = vmul.f32 %v3197, %v3173
        %v3229 = vmul.f32 %v3197, %v3165
        %v3230 = vmul.f32 %v3197, %v3157
        %v3231 = vmul.f32 %v3201, %v3182
        %v3232 = vmul.f32 %v3201, %v3174
        %v3233 = vmul.f32 %v3201, %v3166
        %v3234 = vmul.f32 %v3201, %v3158
        %v3235 = vmul.f32 %v3205, %v3183
        %v3236 = vmul.f32 %v3205, %v3175
        %v3237 = vmul.f32 %v3205, %v3167
        %v3238 = vmul.f32 %v3205, %v3159
        %v3239 = vmul.f32 %v3209, %v3184
        %v3240 = vmul.f32 %v3209, %v3176
        %v3241 = vmul.f32 %v3209, %v3168
        %v3242 = vmul.f32 %v3209, %v3160
        %v3243 = vmul.f32 %v3213, %v3185
        %v3244 = vmul.f32 %v3213, %v3177
        %v3245 = vmul.f32 %v3213, %v3169
        %v3246 = vmul.f32 %v3213, %v3161
        %v3247 = vmul.f32 %v3217, %v3186
        %v3248 = vmul.f32 %v3217, %v3178
        %v3249 = vmul.f32 %v3217, %v3170
        %v3250 = vmul.f32 %v3217, %v3162
        %3251 = vrot.lane.b32.xlu0 %v3059, 10
        %v3252 = vpop.permute.xlu0 %3251
        %3253 = vrot.lane.b32.xlu0 %v3063, 10
        %v3254 = vpop.permute.xlu0 %3253
        %3255 = vrot.lane.b32.xlu0 %v3067, 10
        %v3256 = vpop.permute.xlu0 %3255
        %3257 = vrot.lane.b32.xlu0 %v3071, 10
        %v3258 = vpop.permute.xlu0 %3257
        %3259 = vrot.lane.b32.xlu0 %v3075, 10
        %v3260 = vpop.permute.xlu0 %3259
        %3261 = vrot.lane.b32.xlu0 %v3079, 10
        %v3262 = vpop.permute.xlu0 %3261
        %3263 = vrot.lane.b32.xlu0 %v3083, 10
        %v3264 = vpop.permute.xlu0 %3263
        %3265 = vrot.lane.b32.xlu0 %v3087, 10
        %v3266 = vpop.permute.xlu0 %3265
        %3267 = vrot.lane.b32.xlu0 %v3060, 10
        %v3268 = vpop.permute.xlu0 %3267
        %3269 = vrot.lane.b32.xlu0 %v3064, 10
        %v3270 = vpop.permute.xlu0 %3269
        %3271 = vrot.lane.b32.xlu0 %v3068, 10
        %v3272 = vpop.permute.xlu0 %3271
        %3273 = vrot.lane.b32.xlu0 %v3072, 10
        %v3274 = vpop.permute.xlu0 %3273
        %3275 = vrot.lane.b32.xlu0 %v3076, 10
        %v3276 = vpop.permute.xlu0 %3275
        %3277 = vrot.lane.b32.xlu0 %v3080, 10
        %v3278 = vpop.permute.xlu0 %3277
        %3279 = vrot.lane.b32.xlu0 %v3084, 10
        %v3280 = vpop.permute.xlu0 %3279
        %3281 = vrot.lane.b32.xlu0 %v3088, 10
        %v3282 = vpop.permute.xlu0 %3281
        %3283 = vrot.lane.b32.xlu0 %v3061, 10
        %v3284 = vpop.permute.xlu0 %3283
        %3285 = vrot.lane.b32.xlu0 %v3065, 10
        %v3286 = vpop.permute.xlu0 %3285
        %3287 = vrot.lane.b32.xlu0 %v3069, 10
        %v3288 = vpop.permute.xlu0 %3287
        %3289 = vrot.lane.b32.xlu0 %v3073, 10
        %v3290 = vpop.permute.xlu0 %3289
        %3291 = vrot.lane.b32.xlu0 %v3077, 10
        %v3292 = vpop.permute.xlu0 %3291
        %3293 = vrot.lane.b32.xlu0 %v3081, 10
        %v3294 = vpop.permute.xlu0 %3293
        %3295 = vrot.lane.b32.xlu0 %v3085, 10
        %v3296 = vpop.permute.xlu0 %3295
        %3297 = vrot.lane.b32.xlu0 %v3089, 10
        %v3298 = vpop.permute.xlu0 %3297
        %3299 = vrot.lane.b32.xlu0 %v3062, 10
        %v3300 = vpop.permute.xlu0 %3299
        %3301 = vrot.lane.b32.xlu0 %v3066, 10
        %v3302 = vpop.permute.xlu0 %3301
        %3303 = vrot.lane.b32.xlu0 %v3070, 10
        %v3304 = vpop.permute.xlu0 %3303
        %3305 = vrot.lane.b32.xlu0 %v3074, 10
        %v3306 = vpop.permute.xlu0 %3305
        %3307 = vrot.lane.b32.xlu0 %v3078, 10
        %v3308 = vpop.permute.xlu0 %3307
        %3309 = vrot.lane.b32.xlu0 %v3082, 10
        %v3310 = vpop.permute.xlu0 %3309
        %3311 = vrot.lane.b32.xlu0 %v3086, 10
        %v3312 = vpop.permute.xlu0 %3311
        %3313 = vrot.lane.b32.xlu0 %v3090, 10
        %v3314 = vpop.permute.xlu0 %3313
        %v3315 = vsel %vm926, %v3284, %v3300
        %v3316 = vsel %vm926, %v3286, %v3302
        %v3317 = vsel %vm926, %v3288, %v3304
        %v3318 = vsel %vm926, %v3290, %v3306
        %v3319 = vsel %vm926, %v3292, %v3308
        %v3320 = vsel %vm926, %v3294, %v3310
        %v3321 = vsel %vm926, %v3296, %v3312
        %v3322 = vsel %vm926, %v3298, %v3314
        %v3323 = vsel %vm926, %v3268, %v3284
        %v3324 = vsel %vm926, %v3270, %v3286
        %v3325 = vsel %vm926, %v3272, %v3288
        %v3326 = vsel %vm926, %v3274, %v3290
        %v3327 = vsel %vm926, %v3276, %v3292
        %v3328 = vsel %vm926, %v3278, %v3294
        %v3329 = vsel %vm926, %v3280, %v3296
        %v3330 = vsel %vm926, %v3282, %v3298
        %v3331 = vsel %vm926, %v3252, %v3268
        %v3332 = vsel %vm926, %v3254, %v3270
        %v3333 = vsel %vm926, %v3256, %v3272
        %v3334 = vsel %vm926, %v3258, %v3274
        %v3335 = vsel %vm926, %v3260, %v3276
        %v3336 = vsel %vm926, %v3262, %v3278
        %v3337 = vsel %vm926, %v3264, %v3280
        %v3338 = vsel %vm926, %v3266, %v3282
        %v3339 = vsel %vm926, %v3300, %v3252
        %v3340 = vsel %vm926, %v3302, %v3254
        %v3341 = vsel %vm926, %v3304, %v3256
        %v3342 = vsel %vm926, %v3306, %v3258
        %v3343 = vsel %vm926, %v3308, %v3260
        %v3344 = vsel %vm926, %v3310, %v3262
        %v3345 = vsel %vm926, %v3312, %v3264
        %v3346 = vsel %vm926, %v3314, %v3266
        %3347 = vset.pattern.permute.xlu0 2
        %3348 = vperm.xlu0 %3347, %v380
        %v3349 = vpop.permute.xlu0 %3348
        %3351 = vset.pattern.permute.xlu0 2
        %3352 = vperm.xlu0 %3351, %v381
        %v3353 = vpop.permute.xlu0 %3352
        %3355 = vset.pattern.permute.xlu0 2
        %3356 = vperm.xlu0 %3355, %v382
        %v3357 = vpop.permute.xlu0 %3356
        %3359 = vset.pattern.permute.xlu0 2
        %3360 = vperm.xlu0 %3359, %v383
        %v3361 = vpop.permute.xlu0 %3360
        %3363 = vset.pattern.permute.xlu0 2
        %3364 = vperm.xlu0 %3363, %v384
        %v3365 = vpop.permute.xlu0 %3364
        %3367 = vset.pattern.permute.xlu0 2
        %3368 = vperm.xlu0 %3367, %v385
        %v3369 = vpop.permute.xlu0 %3368
        %3371 = vset.pattern.permute.xlu0 2
        %3372 = vperm.xlu0 %3371, %v386
        %v3373 = vpop.permute.xlu0 %3372
        %3375 = vset.pattern.permute.xlu0 2
        %3376 = vperm.xlu0 %3375, %v387
        %v3377 = vpop.permute.xlu0 %3376
        %v3379 = vmul.f32 %v3349, %v3339
        %v3380 = vmul.f32 %v3349, %v3331
        %v3381 = vmul.f32 %v3349, %v3323
        %v3382 = vmul.f32 %v3349, %v3315
        %v3383 = vmul.f32 %v3353, %v3340
        %v3384 = vmul.f32 %v3353, %v3332
        %v3385 = vmul.f32 %v3353, %v3324
        %v3386 = vmul.f32 %v3353, %v3316
        %v3387 = vmul.f32 %v3357, %v3341
        %v3388 = vmul.f32 %v3357, %v3333
        %v3389 = vmul.f32 %v3357, %v3325
        %v3390 = vmul.f32 %v3357, %v3317
        %v3391 = vmul.f32 %v3361, %v3342
        %v3392 = vmul.f32 %v3361, %v3334
        %v3393 = vmul.f32 %v3361, %v3326
        %v3394 = vmul.f32 %v3361, %v3318
        %v3395 = vmul.f32 %v3365, %v3343
        %v3396 = vmul.f32 %v3365, %v3335
        %v3397 = vmul.f32 %v3365, %v3327
        %v3398 = vmul.f32 %v3365, %v3319
        %v3399 = vmul.f32 %v3369, %v3344
        %v3400 = vmul.f32 %v3369, %v3336
        %v3401 = vmul.f32 %v3369, %v3328
        %v3402 = vmul.f32 %v3369, %v3320
        %v3403 = vmul.f32 %v3373, %v3345
        %v3404 = vmul.f32 %v3373, %v3337
        %v3405 = vmul.f32 %v3373, %v3329
        %v3406 = vmul.f32 %v3373, %v3321
        %v3407 = vmul.f32 %v3377, %v3346
        %v3408 = vmul.f32 %v3377, %v3338
        %v3409 = vmul.f32 %v3377, %v3330
        %v3410 = vmul.f32 %v3377, %v3322
        %v3411 = vadd.f32 %v3219, %v3379
        %v3412 = vadd.f32 %v3220, %v3380
        %v3413 = vadd.f32 %v3221, %v3381
        %v3414 = vadd.f32 %v3222, %v3382
        %v3415 = vadd.f32 %v3223, %v3383
        %v3416 = vadd.f32 %v3224, %v3384
        %v3417 = vadd.f32 %v3225, %v3385
        %v3418 = vadd.f32 %v3226, %v3386
        %v3419 = vadd.f32 %v3227, %v3387
        %v3420 = vadd.f32 %v3228, %v3388
        %v3421 = vadd.f32 %v3229, %v3389
        %v3422 = vadd.f32 %v3230, %v3390
        %v3423 = vadd.f32 %v3231, %v3391
        %v3424 = vadd.f32 %v3232, %v3392
        %v3425 = vadd.f32 %v3233, %v3393
        %v3426 = vadd.f32 %v3234, %v3394
        %v3427 = vadd.f32 %v3235, %v3395
        %v3428 = vadd.f32 %v3236, %v3396
        %v3429 = vadd.f32 %v3237, %v3397
        %v3430 = vadd.f32 %v3238, %v3398
        %v3431 = vadd.f32 %v3239, %v3399
        %v3432 = vadd.f32 %v3240, %v3400
        %v3433 = vadd.f32 %v3241, %v3401
        %v3434 = vadd.f32 %v3242, %v3402
        %v3435 = vadd.f32 %v3243, %v3403
        %v3436 = vadd.f32 %v3244, %v3404
        %v3437 = vadd.f32 %v3245, %v3405
        %v3438 = vadd.f32 %v3246, %v3406
        %v3439 = vadd.f32 %v3247, %v3407
        %v3440 = vadd.f32 %v3248, %v3408
        %v3441 = vadd.f32 %v3249, %v3409
        %v3442 = vadd.f32 %v3250, %v3410
        %3443 = vrot.lane.b32.xlu0 %v3059, 9
        %v3444 = vpop.permute.xlu0 %3443
        %3445 = vrot.lane.b32.xlu0 %v3063, 9
        %v3446 = vpop.permute.xlu0 %3445
        %3447 = vrot.lane.b32.xlu0 %v3067, 9
        %v3448 = vpop.permute.xlu0 %3447
        %3449 = vrot.lane.b32.xlu0 %v3071, 9
        %v3450 = vpop.permute.xlu0 %3449
        %3451 = vrot.lane.b32.xlu0 %v3075, 9
        %v3452 = vpop.permute.xlu0 %3451
        %3453 = vrot.lane.b32.xlu0 %v3079, 9
        %v3454 = vpop.permute.xlu0 %3453
        %3455 = vrot.lane.b32.xlu0 %v3083, 9
        %v3456 = vpop.permute.xlu0 %3455
        %3457 = vrot.lane.b32.xlu0 %v3087, 9
        %v3458 = vpop.permute.xlu0 %3457
        %3459 = vrot.lane.b32.xlu0 %v3060, 9
        %v3460 = vpop.permute.xlu0 %3459
        %3461 = vrot.lane.b32.xlu0 %v3064, 9
        %v3462 = vpop.permute.xlu0 %3461
        %3463 = vrot.lane.b32.xlu0 %v3068, 9
        %v3464 = vpop.permute.xlu0 %3463
        %3465 = vrot.lane.b32.xlu0 %v3072, 9
        %v3466 = vpop.permute.xlu0 %3465
        %3467 = vrot.lane.b32.xlu0 %v3076, 9
        %v3468 = vpop.permute.xlu0 %3467
        %3469 = vrot.lane.b32.xlu0 %v3080, 9
        %v3470 = vpop.permute.xlu0 %3469
        %3471 = vrot.lane.b32.xlu0 %v3084, 9
        %v3472 = vpop.permute.xlu0 %3471
        %3473 = vrot.lane.b32.xlu0 %v3088, 9
        %v3474 = vpop.permute.xlu0 %3473
        %3475 = vrot.lane.b32.xlu0 %v3061, 9
        %v3476 = vpop.permute.xlu0 %3475
        %3477 = vrot.lane.b32.xlu0 %v3065, 9
        %v3478 = vpop.permute.xlu0 %3477
        %3479 = vrot.lane.b32.xlu0 %v3069, 9
        %v3480 = vpop.permute.xlu0 %3479
        %3481 = vrot.lane.b32.xlu0 %v3073, 9
        %v3482 = vpop.permute.xlu0 %3481
        %3483 = vrot.lane.b32.xlu0 %v3077, 9
        %v3484 = vpop.permute.xlu0 %3483
        %3485 = vrot.lane.b32.xlu0 %v3081, 9
        %v3486 = vpop.permute.xlu0 %3485
        %3487 = vrot.lane.b32.xlu0 %v3085, 9
        %v3488 = vpop.permute.xlu0 %3487
        %3489 = vrot.lane.b32.xlu0 %v3089, 9
        %v3490 = vpop.permute.xlu0 %3489
        %3491 = vrot.lane.b32.xlu0 %v3062, 9
        %v3492 = vpop.permute.xlu0 %3491
        %3493 = vrot.lane.b32.xlu0 %v3066, 9
        %v3494 = vpop.permute.xlu0 %3493
        %3495 = vrot.lane.b32.xlu0 %v3070, 9
        %v3496 = vpop.permute.xlu0 %3495
        %3497 = vrot.lane.b32.xlu0 %v3074, 9
        %v3498 = vpop.permute.xlu0 %3497
        %3499 = vrot.lane.b32.xlu0 %v3078, 9
        %v3500 = vpop.permute.xlu0 %3499
        %3501 = vrot.lane.b32.xlu0 %v3082, 9
        %v3502 = vpop.permute.xlu0 %3501
        %3503 = vrot.lane.b32.xlu0 %v3086, 9
        %v3504 = vpop.permute.xlu0 %3503
        %3505 = vrot.lane.b32.xlu0 %v3090, 9
        %v3506 = vpop.permute.xlu0 %3505
        %v3507 = vsel %vm1071, %v3476, %v3492
        %v3508 = vsel %vm1071, %v3478, %v3494
        %v3509 = vsel %vm1071, %v3480, %v3496
        %v3510 = vsel %vm1071, %v3482, %v3498
        %v3511 = vsel %vm1071, %v3484, %v3500
        %v3512 = vsel %vm1071, %v3486, %v3502
        %v3513 = vsel %vm1071, %v3488, %v3504
        %v3514 = vsel %vm1071, %v3490, %v3506
        %v3515 = vsel %vm1071, %v3460, %v3476
        %v3516 = vsel %vm1071, %v3462, %v3478
        %v3517 = vsel %vm1071, %v3464, %v3480
        %v3518 = vsel %vm1071, %v3466, %v3482
        %v3519 = vsel %vm1071, %v3468, %v3484
        %v3520 = vsel %vm1071, %v3470, %v3486
        %v3521 = vsel %vm1071, %v3472, %v3488
        %v3522 = vsel %vm1071, %v3474, %v3490
        %v3523 = vsel %vm1071, %v3444, %v3460
        %v3524 = vsel %vm1071, %v3446, %v3462
        %v3525 = vsel %vm1071, %v3448, %v3464
        %v3526 = vsel %vm1071, %v3450, %v3466
        %v3527 = vsel %vm1071, %v3452, %v3468
        %v3528 = vsel %vm1071, %v3454, %v3470
        %v3529 = vsel %vm1071, %v3456, %v3472
        %v3530 = vsel %vm1071, %v3458, %v3474
        %v3531 = vsel %vm1071, %v3492, %v3444
        %v3532 = vsel %vm1071, %v3494, %v3446
        %v3533 = vsel %vm1071, %v3496, %v3448
        %v3534 = vsel %vm1071, %v3498, %v3450
        %v3535 = vsel %vm1071, %v3500, %v3452
        %v3536 = vsel %vm1071, %v3502, %v3454
        %v3537 = vsel %vm1071, %v3504, %v3456
        %v3538 = vsel %vm1071, %v3506, %v3458
        %3539 = vset.pattern.permute.xlu0 3
        %3540 = vperm.xlu0 %3539, %v380
        %v3541 = vpop.permute.xlu0 %3540
        %3543 = vset.pattern.permute.xlu0 3
        %3544 = vperm.xlu0 %3543, %v381
        %v3545 = vpop.permute.xlu0 %3544
        %3547 = vset.pattern.permute.xlu0 3
        %3548 = vperm.xlu0 %3547, %v382
        %v3549 = vpop.permute.xlu0 %3548
        %3551 = vset.pattern.permute.xlu0 3
        %3552 = vperm.xlu0 %3551, %v383
        %v3553 = vpop.permute.xlu0 %3552
        %3555 = vset.pattern.permute.xlu0 3
        %3556 = vperm.xlu0 %3555, %v384
        %v3557 = vpop.permute.xlu0 %3556
        %3559 = vset.pattern.permute.xlu0 3
        %3560 = vperm.xlu0 %3559, %v385
        %v3561 = vpop.permute.xlu0 %3560
        %3563 = vset.pattern.permute.xlu0 3
        %3564 = vperm.xlu0 %3563, %v386
        %v3565 = vpop.permute.xlu0 %3564
        %3567 = vset.pattern.permute.xlu0 3
        %3568 = vperm.xlu0 %3567, %v387
        %v3569 = vpop.permute.xlu0 %3568
        %v3571 = vmul.f32 %v3541, %v3531
        %v3572 = vmul.f32 %v3541, %v3523
        %v3573 = vmul.f32 %v3541, %v3515
        %v3574 = vmul.f32 %v3541, %v3507
        %v3575 = vmul.f32 %v3545, %v3532
        %v3576 = vmul.f32 %v3545, %v3524
        %v3577 = vmul.f32 %v3545, %v3516
        %v3578 = vmul.f32 %v3545, %v3508
        %v3579 = vmul.f32 %v3549, %v3533
        %v3580 = vmul.f32 %v3549, %v3525
        %v3581 = vmul.f32 %v3549, %v3517
        %v3582 = vmul.f32 %v3549, %v3509
        %v3583 = vmul.f32 %v3553, %v3534
        %v3584 = vmul.f32 %v3553, %v3526
        %v3585 = vmul.f32 %v3553, %v3518
        %v3586 = vmul.f32 %v3553, %v3510
        %v3587 = vmul.f32 %v3557, %v3535
        %v3588 = vmul.f32 %v3557, %v3527
        %v3589 = vmul.f32 %v3557, %v3519
        %v3590 = vmul.f32 %v3557, %v3511
        %v3591 = vmul.f32 %v3561, %v3536
        %v3592 = vmul.f32 %v3561, %v3528
        %v3593 = vmul.f32 %v3561, %v3520
        %v3594 = vmul.f32 %v3561, %v3512
        %v3595 = vmul.f32 %v3565, %v3537
        %v3596 = vmul.f32 %v3565, %v3529
        %v3597 = vmul.f32 %v3565, %v3521
        %v3598 = vmul.f32 %v3565, %v3513
        %v3599 = vmul.f32 %v3569, %v3538
        %v3600 = vmul.f32 %v3569, %v3530
        %v3601 = vmul.f32 %v3569, %v3522
        %v3602 = vmul.f32 %v3569, %v3514
        %v3603 = vadd.f32 %v3411, %v3571
        %v3604 = vadd.f32 %v3412, %v3572
        %v3605 = vadd.f32 %v3413, %v3573
        %v3606 = vadd.f32 %v3414, %v3574
        %v3607 = vadd.f32 %v3415, %v3575
        %v3608 = vadd.f32 %v3416, %v3576
        %v3609 = vadd.f32 %v3417, %v3577
        %v3610 = vadd.f32 %v3418, %v3578
        %v3611 = vadd.f32 %v3419, %v3579
        %v3612 = vadd.f32 %v3420, %v3580
        %v3613 = vadd.f32 %v3421, %v3581
        %v3614 = vadd.f32 %v3422, %v3582
        %v3615 = vadd.f32 %v3423, %v3583
        %v3616 = vadd.f32 %v3424, %v3584
        %v3617 = vadd.f32 %v3425, %v3585
        %v3618 = vadd.f32 %v3426, %v3586
        %v3619 = vadd.f32 %v3427, %v3587
        %v3620 = vadd.f32 %v3428, %v3588
        %v3621 = vadd.f32 %v3429, %v3589
        %v3622 = vadd.f32 %v3430, %v3590
        %v3623 = vadd.f32 %v3431, %v3591
        %v3624 = vadd.f32 %v3432, %v3592
        %v3625 = vadd.f32 %v3433, %v3593
        %v3626 = vadd.f32 %v3434, %v3594
        %v3627 = vadd.f32 %v3435, %v3595
        %v3628 = vadd.f32 %v3436, %v3596
        %v3629 = vadd.f32 %v3437, %v3597
        %v3630 = vadd.f32 %v3438, %v3598
        %v3631 = vadd.f32 %v3439, %v3599
        %v3632 = vadd.f32 %v3440, %v3600
        %v3633 = vadd.f32 %v3441, %v3601
        %v3634 = vadd.f32 %v3442, %v3602
        %3635 = vrot.lane.b32.xlu0 %v3059, 1
        %v3636 = vpop.permute.xlu0 %3635
        %3637 = vrot.lane.b32.xlu0 %v3063, 1
        %v3638 = vpop.permute.xlu0 %3637
        %3639 = vrot.lane.b32.xlu0 %v3067, 1
        %v3640 = vpop.permute.xlu0 %3639
        %3641 = vrot.lane.b32.xlu0 %v3071, 1
        %v3642 = vpop.permute.xlu0 %3641
        %3643 = vrot.lane.b32.xlu0 %v3075, 1
        %v3644 = vpop.permute.xlu0 %3643
        %3645 = vrot.lane.b32.xlu0 %v3079, 1
        %v3646 = vpop.permute.xlu0 %3645
        %3647 = vrot.lane.b32.xlu0 %v3083, 1
        %v3648 = vpop.permute.xlu0 %3647
        %3649 = vrot.lane.b32.xlu0 %v3087, 1
        %v3650 = vpop.permute.xlu0 %3649
        %3651 = vrot.lane.b32.xlu0 %v3060, 1
        %v3652 = vpop.permute.xlu0 %3651
        %3653 = vrot.lane.b32.xlu0 %v3064, 1
        %v3654 = vpop.permute.xlu0 %3653
        %3655 = vrot.lane.b32.xlu0 %v3068, 1
        %v3656 = vpop.permute.xlu0 %3655
        %3657 = vrot.lane.b32.xlu0 %v3072, 1
        %v3658 = vpop.permute.xlu0 %3657
        %3659 = vrot.lane.b32.xlu0 %v3076, 1
        %v3660 = vpop.permute.xlu0 %3659
        %3661 = vrot.lane.b32.xlu0 %v3080, 1
        %v3662 = vpop.permute.xlu0 %3661
        %3663 = vrot.lane.b32.xlu0 %v3084, 1
        %v3664 = vpop.permute.xlu0 %3663
        %3665 = vrot.lane.b32.xlu0 %v3088, 1
        %v3666 = vpop.permute.xlu0 %3665
        %3667 = vrot.lane.b32.xlu0 %v3061, 1
        %v3668 = vpop.permute.xlu0 %3667
        %3669 = vrot.lane.b32.xlu0 %v3065, 1
        %v3670 = vpop.permute.xlu0 %3669
        %3671 = vrot.lane.b32.xlu0 %v3069, 1
        %v3672 = vpop.permute.xlu0 %3671
        %3673 = vrot.lane.b32.xlu0 %v3073, 1
        %v3674 = vpop.permute.xlu0 %3673
        %3675 = vrot.lane.b32.xlu0 %v3077, 1
        %v3676 = vpop.permute.xlu0 %3675
        %3677 = vrot.lane.b32.xlu0 %v3081, 1
        %v3678 = vpop.permute.xlu0 %3677
        %3679 = vrot.lane.b32.xlu0 %v3085, 1
        %v3680 = vpop.permute.xlu0 %3679
        %3681 = vrot.lane.b32.xlu0 %v3089, 1
        %v3682 = vpop.permute.xlu0 %3681
        %3683 = vrot.lane.b32.xlu0 %v3062, 1
        %v3684 = vpop.permute.xlu0 %3683
        %3685 = vrot.lane.b32.xlu0 %v3066, 1
        %v3686 = vpop.permute.xlu0 %3685
        %3687 = vrot.lane.b32.xlu0 %v3070, 1
        %v3688 = vpop.permute.xlu0 %3687
        %3689 = vrot.lane.b32.xlu0 %v3074, 1
        %v3690 = vpop.permute.xlu0 %3689
        %3691 = vrot.lane.b32.xlu0 %v3078, 1
        %v3692 = vpop.permute.xlu0 %3691
        %3693 = vrot.lane.b32.xlu0 %v3082, 1
        %v3694 = vpop.permute.xlu0 %3693
        %3695 = vrot.lane.b32.xlu0 %v3086, 1
        %v3696 = vpop.permute.xlu0 %3695
        %3697 = vrot.lane.b32.xlu0 %v3090, 1
        %v3698 = vpop.permute.xlu0 %3697
        %v3699 = vsel %vm1216, %v3668, %v3684
        %v3700 = vsel %vm1216, %v3670, %v3686
        %v3701 = vsel %vm1216, %v3672, %v3688
        %v3702 = vsel %vm1216, %v3674, %v3690
        %v3703 = vsel %vm1216, %v3676, %v3692
        %v3704 = vsel %vm1216, %v3678, %v3694
        %v3705 = vsel %vm1216, %v3680, %v3696
        %v3706 = vsel %vm1216, %v3682, %v3698
        %v3707 = vsel %vm1216, %v3652, %v3668
        %v3708 = vsel %vm1216, %v3654, %v3670
        %v3709 = vsel %vm1216, %v3656, %v3672
        %v3710 = vsel %vm1216, %v3658, %v3674
        %v3711 = vsel %vm1216, %v3660, %v3676
        %v3712 = vsel %vm1216, %v3662, %v3678
        %v3713 = vsel %vm1216, %v3664, %v3680
        %v3714 = vsel %vm1216, %v3666, %v3682
        %v3715 = vsel %vm1216, %v3636, %v3652
        %v3716 = vsel %vm1216, %v3638, %v3654
        %v3717 = vsel %vm1216, %v3640, %v3656
        %v3718 = vsel %vm1216, %v3642, %v3658
        %v3719 = vsel %vm1216, %v3644, %v3660
        %v3720 = vsel %vm1216, %v3646, %v3662
        %v3721 = vsel %vm1216, %v3648, %v3664
        %v3722 = vsel %vm1216, %v3650, %v3666
        %v3723 = vsel %vm1216, %v3684, %v3636
        %v3724 = vsel %vm1216, %v3686, %v3638
        %v3725 = vsel %vm1216, %v3688, %v3640
        %v3726 = vsel %vm1216, %v3690, %v3642
        %v3727 = vsel %vm1216, %v3692, %v3644
        %v3728 = vsel %vm1216, %v3694, %v3646
        %v3729 = vsel %vm1216, %v3696, %v3648
        %v3730 = vsel %vm1216, %v3698, %v3650
        %3731 = vset.pattern.permute.xlu0 4
        %3732 = vperm.xlu0 %3731, %v380
        %v3733 = vpop.permute.xlu0 %3732
        %3735 = vset.pattern.permute.xlu0 4
        %3736 = vperm.xlu0 %3735, %v381
        %v3737 = vpop.permute.xlu0 %3736
        %3739 = vset.pattern.permute.xlu0 4
        %3740 = vperm.xlu0 %3739, %v382
        %v3741 = vpop.permute.xlu0 %3740
        %3743 = vset.pattern.permute.xlu0 4
        %3744 = vperm.xlu0 %3743, %v383
        %v3745 = vpop.permute.xlu0 %3744
        %3747 = vset.pattern.permute.xlu0 4
        %3748 = vperm.xlu0 %3747, %v384
        %v3749 = vpop.permute.xlu0 %3748
        %3751 = vset.pattern.permute.xlu0 4
        %3752 = vperm.xlu0 %3751, %v385
        %v3753 = vpop.permute.xlu0 %3752
        %3755 = vset.pattern.permute.xlu0 4
        %3756 = vperm.xlu0 %3755, %v386
        %v3757 = vpop.permute.xlu0 %3756
        %3759 = vset.pattern.permute.xlu0 4
        %3760 = vperm.xlu0 %3759, %v387
        %v3761 = vpop.permute.xlu0 %3760
        %v3763 = vmul.f32 %v3733, %v3723
        %v3764 = vmul.f32 %v3733, %v3715
        %v3765 = vmul.f32 %v3733, %v3707
        %v3766 = vmul.f32 %v3733, %v3699
        %v3767 = vmul.f32 %v3737, %v3724
        %v3768 = vmul.f32 %v3737, %v3716
        %v3769 = vmul.f32 %v3737, %v3708
        %v3770 = vmul.f32 %v3737, %v3700
        %v3771 = vmul.f32 %v3741, %v3725
        %v3772 = vmul.f32 %v3741, %v3717
        %v3773 = vmul.f32 %v3741, %v3709
        %v3774 = vmul.f32 %v3741, %v3701
        %v3775 = vmul.f32 %v3745, %v3726
        %v3776 = vmul.f32 %v3745, %v3718
        %v3777 = vmul.f32 %v3745, %v3710
        %v3778 = vmul.f32 %v3745, %v3702
        %v3779 = vmul.f32 %v3749, %v3727
        %v3780 = vmul.f32 %v3749, %v3719
        %v3781 = vmul.f32 %v3749, %v3711
        %v3782 = vmul.f32 %v3749, %v3703
        %v3783 = vmul.f32 %v3753, %v3728
        %v3784 = vmul.f32 %v3753, %v3720
        %v3785 = vmul.f32 %v3753, %v3712
        %v3786 = vmul.f32 %v3753, %v3704
        %v3787 = vmul.f32 %v3757, %v3729
        %v3788 = vmul.f32 %v3757, %v3721
        %v3789 = vmul.f32 %v3757, %v3713
        %v3790 = vmul.f32 %v3757, %v3705
        %v3791 = vmul.f32 %v3761, %v3730
        %v3792 = vmul.f32 %v3761, %v3722
        %v3793 = vmul.f32 %v3761, %v3714
        %v3794 = vmul.f32 %v3761, %v3706
        %v3795 = vadd.f32 %v3603, %v3763
        %v3796 = vadd.f32 %v3604, %v3764
        %v3797 = vadd.f32 %v3605, %v3765
        %v3798 = vadd.f32 %v3606, %v3766
        %v3799 = vadd.f32 %v3607, %v3767
        %v3800 = vadd.f32 %v3608, %v3768
        %v3801 = vadd.f32 %v3609, %v3769
        %v3802 = vadd.f32 %v3610, %v3770
        %v3803 = vadd.f32 %v3611, %v3771
        %v3804 = vadd.f32 %v3612, %v3772
        %v3805 = vadd.f32 %v3613, %v3773
        %v3806 = vadd.f32 %v3614, %v3774
        %v3807 = vadd.f32 %v3615, %v3775
        %v3808 = vadd.f32 %v3616, %v3776
        %v3809 = vadd.f32 %v3617, %v3777
        %v3810 = vadd.f32 %v3618, %v3778
        %v3811 = vadd.f32 %v3619, %v3779
        %v3812 = vadd.f32 %v3620, %v3780
        %v3813 = vadd.f32 %v3621, %v3781
        %v3814 = vadd.f32 %v3622, %v3782
        %v3815 = vadd.f32 %v3623, %v3783
        %v3816 = vadd.f32 %v3624, %v3784
        %v3817 = vadd.f32 %v3625, %v3785
        %v3818 = vadd.f32 %v3626, %v3786
        %v3819 = vadd.f32 %v3627, %v3787
        %v3820 = vadd.f32 %v3628, %v3788
        %v3821 = vadd.f32 %v3629, %v3789
        %v3822 = vadd.f32 %v3630, %v3790
        %v3823 = vadd.f32 %v3631, %v3791
        %v3824 = vadd.f32 %v3632, %v3792
        %v3825 = vadd.f32 %v3633, %v3793
        %v3826 = vadd.f32 %v3634, %v3794
        %3827 = vset.pattern.permute.xlu0 5
        %3828 = vperm.xlu0 %3827, %v380
        %v3829 = vpop.permute.xlu0 %3828
        %3831 = vset.pattern.permute.xlu0 5
        %3832 = vperm.xlu0 %3831, %v381
        %v3833 = vpop.permute.xlu0 %3832
        %3835 = vset.pattern.permute.xlu0 5
        %3836 = vperm.xlu0 %3835, %v382
        %v3837 = vpop.permute.xlu0 %3836
        %3839 = vset.pattern.permute.xlu0 5
        %3840 = vperm.xlu0 %3839, %v383
        %v3841 = vpop.permute.xlu0 %3840
        %3843 = vset.pattern.permute.xlu0 5
        %3844 = vperm.xlu0 %3843, %v384
        %v3845 = vpop.permute.xlu0 %3844
        %3847 = vset.pattern.permute.xlu0 5
        %3848 = vperm.xlu0 %3847, %v385
        %v3849 = vpop.permute.xlu0 %3848
        %3851 = vset.pattern.permute.xlu0 5
        %3852 = vperm.xlu0 %3851, %v386
        %v3853 = vpop.permute.xlu0 %3852
        %3855 = vset.pattern.permute.xlu0 5
        %3856 = vperm.xlu0 %3855, %v387
        %v3857 = vpop.permute.xlu0 %3856
        %v3859 = vmul.f32 %v3829, %v3059
        %v3860 = vmul.f32 %v3829, %v3060
        %v3861 = vmul.f32 %v3829, %v3061
        %v3862 = vmul.f32 %v3829, %v3062
        %v3863 = vmul.f32 %v3833, %v3063
        %v3864 = vmul.f32 %v3833, %v3064
        %v3865 = vmul.f32 %v3833, %v3065
        %v3866 = vmul.f32 %v3833, %v3066
        %v3867 = vmul.f32 %v3837, %v3067
        %v3868 = vmul.f32 %v3837, %v3068
        %v3869 = vmul.f32 %v3837, %v3069
        %v3870 = vmul.f32 %v3837, %v3070
        %v3871 = vmul.f32 %v3841, %v3071
        %v3872 = vmul.f32 %v3841, %v3072
        %v3873 = vmul.f32 %v3841, %v3073
        %v3874 = vmul.f32 %v3841, %v3074
        %v3875 = vmul.f32 %v3845, %v3075
        %v3876 = vmul.f32 %v3845, %v3076
        %v3877 = vmul.f32 %v3845, %v3077
        %v3878 = vmul.f32 %v3845, %v3078
        %v3879 = vmul.f32 %v3849, %v3079
        %v3880 = vmul.f32 %v3849, %v3080
        %v3881 = vmul.f32 %v3849, %v3081
        %v3882 = vmul.f32 %v3849, %v3082
        %v3883 = vmul.f32 %v3853, %v3083
        %v3884 = vmul.f32 %v3853, %v3084
        %v3885 = vmul.f32 %v3853, %v3085
        %v3886 = vmul.f32 %v3853, %v3086
        %v3887 = vmul.f32 %v3857, %v3087
        %v3888 = vmul.f32 %v3857, %v3088
        %v3889 = vmul.f32 %v3857, %v3089
        %v3890 = vmul.f32 %v3857, %v3090
        %v3891 = vadd.f32 %v3795, %v3859
        %v3892 = vadd.f32 %v3796, %v3860
        %v3893 = vadd.f32 %v3797, %v3861
        %v3894 = vadd.f32 %v3798, %v3862
        %v3895 = vadd.f32 %v3799, %v3863
        %v3896 = vadd.f32 %v3800, %v3864
        %v3897 = vadd.f32 %v3801, %v3865
        %v3898 = vadd.f32 %v3802, %v3866
        %v3899 = vadd.f32 %v3803, %v3867
        %v3900 = vadd.f32 %v3804, %v3868
        %v3901 = vadd.f32 %v3805, %v3869
        %v3902 = vadd.f32 %v3806, %v3870
        %v3903 = vadd.f32 %v3807, %v3871
        %v3904 = vadd.f32 %v3808, %v3872
        %v3905 = vadd.f32 %v3809, %v3873
        %v3906 = vadd.f32 %v3810, %v3874
        %v3907 = vadd.f32 %v3811, %v3875
        %v3908 = vadd.f32 %v3812, %v3876
        %v3909 = vadd.f32 %v3813, %v3877
        %v3910 = vadd.f32 %v3814, %v3878
        %v3911 = vadd.f32 %v3815, %v3879
        %v3912 = vadd.f32 %v3816, %v3880
        %v3913 = vadd.f32 %v3817, %v3881
        %v3914 = vadd.f32 %v3818, %v3882
        %v3915 = vadd.f32 %v3819, %v3883
        %v3916 = vadd.f32 %v3820, %v3884
        %v3917 = vadd.f32 %v3821, %v3885
        %v3918 = vadd.f32 %v3822, %v3886
        %v3919 = vadd.f32 %v3823, %v3887
        %v3920 = vadd.f32 %v3824, %v3888
        %v3921 = vadd.f32 %v3825, %v3889
        %v3922 = vadd.f32 %v3826, %v3890
        %3923 = vrot.lane.b32.xlu0 %v3059, 127
        %v3924 = vpop.permute.xlu0 %3923
        %3925 = vrot.lane.b32.xlu0 %v3063, 127
        %v3926 = vpop.permute.xlu0 %3925
        %3927 = vrot.lane.b32.xlu0 %v3067, 127
        %v3928 = vpop.permute.xlu0 %3927
        %3929 = vrot.lane.b32.xlu0 %v3071, 127
        %v3930 = vpop.permute.xlu0 %3929
        %3931 = vrot.lane.b32.xlu0 %v3075, 127
        %v3932 = vpop.permute.xlu0 %3931
        %3933 = vrot.lane.b32.xlu0 %v3079, 127
        %v3934 = vpop.permute.xlu0 %3933
        %3935 = vrot.lane.b32.xlu0 %v3083, 127
        %v3936 = vpop.permute.xlu0 %3935
        %3937 = vrot.lane.b32.xlu0 %v3087, 127
        %v3938 = vpop.permute.xlu0 %3937
        %3939 = vrot.lane.b32.xlu0 %v3060, 127
        %v3940 = vpop.permute.xlu0 %3939
        %3941 = vrot.lane.b32.xlu0 %v3064, 127
        %v3942 = vpop.permute.xlu0 %3941
        %3943 = vrot.lane.b32.xlu0 %v3068, 127
        %v3944 = vpop.permute.xlu0 %3943
        %3945 = vrot.lane.b32.xlu0 %v3072, 127
        %v3946 = vpop.permute.xlu0 %3945
        %3947 = vrot.lane.b32.xlu0 %v3076, 127
        %v3948 = vpop.permute.xlu0 %3947
        %3949 = vrot.lane.b32.xlu0 %v3080, 127
        %v3950 = vpop.permute.xlu0 %3949
        %3951 = vrot.lane.b32.xlu0 %v3084, 127
        %v3952 = vpop.permute.xlu0 %3951
        %3953 = vrot.lane.b32.xlu0 %v3088, 127
        %v3954 = vpop.permute.xlu0 %3953
        %3955 = vrot.lane.b32.xlu0 %v3061, 127
        %v3956 = vpop.permute.xlu0 %3955
        %3957 = vrot.lane.b32.xlu0 %v3065, 127
        %v3958 = vpop.permute.xlu0 %3957
        %3959 = vrot.lane.b32.xlu0 %v3069, 127
        %v3960 = vpop.permute.xlu0 %3959
        %3961 = vrot.lane.b32.xlu0 %v3073, 127
        %v3962 = vpop.permute.xlu0 %3961
        %3963 = vrot.lane.b32.xlu0 %v3077, 127
        %v3964 = vpop.permute.xlu0 %3963
        %3965 = vrot.lane.b32.xlu0 %v3081, 127
        %v3966 = vpop.permute.xlu0 %3965
        %3967 = vrot.lane.b32.xlu0 %v3085, 127
        %v3968 = vpop.permute.xlu0 %3967
        %3969 = vrot.lane.b32.xlu0 %v3089, 127
        %v3970 = vpop.permute.xlu0 %3969
        %3971 = vrot.lane.b32.xlu0 %v3062, 127
        %v3972 = vpop.permute.xlu0 %3971
        %3973 = vrot.lane.b32.xlu0 %v3066, 127
        %v3974 = vpop.permute.xlu0 %3973
        %3975 = vrot.lane.b32.xlu0 %v3070, 127
        %v3976 = vpop.permute.xlu0 %3975
        %3977 = vrot.lane.b32.xlu0 %v3074, 127
        %v3978 = vpop.permute.xlu0 %3977
        %3979 = vrot.lane.b32.xlu0 %v3078, 127
        %v3980 = vpop.permute.xlu0 %3979
        %3981 = vrot.lane.b32.xlu0 %v3082, 127
        %v3982 = vpop.permute.xlu0 %3981
        %3983 = vrot.lane.b32.xlu0 %v3086, 127
        %v3984 = vpop.permute.xlu0 %3983
        %3985 = vrot.lane.b32.xlu0 %v3090, 127
        %v3986 = vpop.permute.xlu0 %3985
        %v3987 = vsel %vm1433, %v3956, %v3972
        %v3988 = vsel %vm1433, %v3958, %v3974
        %v3989 = vsel %vm1433, %v3960, %v3976
        %v3990 = vsel %vm1433, %v3962, %v3978
        %v3991 = vsel %vm1433, %v3964, %v3980
        %v3992 = vsel %vm1433, %v3966, %v3982
        %v3993 = vsel %vm1433, %v3968, %v3984
        %v3994 = vsel %vm1433, %v3970, %v3986
        %v3995 = vsel %vm1433, %v3940, %v3956
        %v3996 = vsel %vm1433, %v3942, %v3958
        %v3997 = vsel %vm1433, %v3944, %v3960
        %v3998 = vsel %vm1433, %v3946, %v3962
        %v3999 = vsel %vm1433, %v3948, %v3964
        %v4000 = vsel %vm1433, %v3950, %v3966
        %v4001 = vsel %vm1433, %v3952, %v3968
        %v4002 = vsel %vm1433, %v3954, %v3970
        %v4003 = vsel %vm1433, %v3924, %v3940
        %v4004 = vsel %vm1433, %v3926, %v3942
        %v4005 = vsel %vm1433, %v3928, %v3944
        %v4006 = vsel %vm1433, %v3930, %v3946
        %v4007 = vsel %vm1433, %v3932, %v3948
        %v4008 = vsel %vm1433, %v3934, %v3950
        %v4009 = vsel %vm1433, %v3936, %v3952
        %v4010 = vsel %vm1433, %v3938, %v3954
        %v4011 = vsel %vm1433, %v3972, %v3924
        %v4012 = vsel %vm1433, %v3974, %v3926
        %v4013 = vsel %vm1433, %v3976, %v3928
        %v4014 = vsel %vm1433, %v3978, %v3930
        %v4015 = vsel %vm1433, %v3980, %v3932
        %v4016 = vsel %vm1433, %v3982, %v3934
        %v4017 = vsel %vm1433, %v3984, %v3936
        %v4018 = vsel %vm1433, %v3986, %v3938
        %4019 = vset.pattern.permute.xlu0 6
        %4020 = vperm.xlu0 %4019, %v380
        %v4021 = vpop.permute.xlu0 %4020
        %4023 = vset.pattern.permute.xlu0 6
        %4024 = vperm.xlu0 %4023, %v381
        %v4025 = vpop.permute.xlu0 %4024
        %4027 = vset.pattern.permute.xlu0 6
        %4028 = vperm.xlu0 %4027, %v382
        %v4029 = vpop.permute.xlu0 %4028
        %4031 = vset.pattern.permute.xlu0 6
        %4032 = vperm.xlu0 %4031, %v383
        %v4033 = vpop.permute.xlu0 %4032
        %4035 = vset.pattern.permute.xlu0 6
        %4036 = vperm.xlu0 %4035, %v384
        %v4037 = vpop.permute.xlu0 %4036
        %4039 = vset.pattern.permute.xlu0 6
        %4040 = vperm.xlu0 %4039, %v385
        %v4041 = vpop.permute.xlu0 %4040
        %4043 = vset.pattern.permute.xlu0 6
        %4044 = vperm.xlu0 %4043, %v386
        %v4045 = vpop.permute.xlu0 %4044
        %4047 = vset.pattern.permute.xlu0 6
        %4048 = vperm.xlu0 %4047, %v387
        %v4049 = vpop.permute.xlu0 %4048
        %v4051 = vmul.f32 %v4021, %v4003
        %v4052 = vmul.f32 %v4021, %v3995
        %v4053 = vmul.f32 %v4021, %v3987
        %v4054 = vmul.f32 %v4021, %v4011
        %v4055 = vmul.f32 %v4025, %v4004
        %v4056 = vmul.f32 %v4025, %v3996
        %v4057 = vmul.f32 %v4025, %v3988
        %v4058 = vmul.f32 %v4025, %v4012
        %v4059 = vmul.f32 %v4029, %v4005
        %v4060 = vmul.f32 %v4029, %v3997
        %v4061 = vmul.f32 %v4029, %v3989
        %v4062 = vmul.f32 %v4029, %v4013
        %v4063 = vmul.f32 %v4033, %v4006
        %v4064 = vmul.f32 %v4033, %v3998
        %v4065 = vmul.f32 %v4033, %v3990
        %v4066 = vmul.f32 %v4033, %v4014
        %v4067 = vmul.f32 %v4037, %v4007
        %v4068 = vmul.f32 %v4037, %v3999
        %v4069 = vmul.f32 %v4037, %v3991
        %v4070 = vmul.f32 %v4037, %v4015
        %v4071 = vmul.f32 %v4041, %v4008
        %v4072 = vmul.f32 %v4041, %v4000
        %v4073 = vmul.f32 %v4041, %v3992
        %v4074 = vmul.f32 %v4041, %v4016
        %v4075 = vmul.f32 %v4045, %v4009
        %v4076 = vmul.f32 %v4045, %v4001
        %v4077 = vmul.f32 %v4045, %v3993
        %v4078 = vmul.f32 %v4045, %v4017
        %v4079 = vmul.f32 %v4049, %v4010
        %v4080 = vmul.f32 %v4049, %v4002
        %v4081 = vmul.f32 %v4049, %v3994
        %v4082 = vmul.f32 %v4049, %v4018
        %v4083 = vadd.f32 %v3891, %v4051
        %v4084 = vadd.f32 %v3892, %v4052
        %v4085 = vadd.f32 %v3893, %v4053
        %v4086 = vadd.f32 %v3894, %v4054
        %v4087 = vadd.f32 %v3895, %v4055
        %v4088 = vadd.f32 %v3896, %v4056
        %v4089 = vadd.f32 %v3897, %v4057
        %v4090 = vadd.f32 %v3898, %v4058
        %v4091 = vadd.f32 %v3899, %v4059
        %v4092 = vadd.f32 %v3900, %v4060
        %v4093 = vadd.f32 %v3901, %v4061
        %v4094 = vadd.f32 %v3902, %v4062
        %v4095 = vadd.f32 %v3903, %v4063
        %v4096 = vadd.f32 %v3904, %v4064
        %v4097 = vadd.f32 %v3905, %v4065
        %v4098 = vadd.f32 %v3906, %v4066
        %v4099 = vadd.f32 %v3907, %v4067
        %v4100 = vadd.f32 %v3908, %v4068
        %v4101 = vadd.f32 %v3909, %v4069
        %v4102 = vadd.f32 %v3910, %v4070
        %v4103 = vadd.f32 %v3911, %v4071
        %v4104 = vadd.f32 %v3912, %v4072
        %v4105 = vadd.f32 %v3913, %v4073
        %v4106 = vadd.f32 %v3914, %v4074
        %v4107 = vadd.f32 %v3915, %v4075
        %v4108 = vadd.f32 %v3916, %v4076
        %v4109 = vadd.f32 %v3917, %v4077
        %v4110 = vadd.f32 %v3918, %v4078
        %v4111 = vadd.f32 %v3919, %v4079
        %v4112 = vadd.f32 %v3920, %v4080
        %v4113 = vadd.f32 %v3921, %v4081
        %v4114 = vadd.f32 %v3922, %v4082
        %4115 = vrot.lane.b32.xlu0 %v3059, 119
        %v4116 = vpop.permute.xlu0 %4115
        %4117 = vrot.lane.b32.xlu0 %v3063, 119
        %v4118 = vpop.permute.xlu0 %4117
        %4119 = vrot.lane.b32.xlu0 %v3067, 119
        %v4120 = vpop.permute.xlu0 %4119
        %4121 = vrot.lane.b32.xlu0 %v3071, 119
        %v4122 = vpop.permute.xlu0 %4121
        %4123 = vrot.lane.b32.xlu0 %v3075, 119
        %v4124 = vpop.permute.xlu0 %4123
        %4125 = vrot.lane.b32.xlu0 %v3079, 119
        %v4126 = vpop.permute.xlu0 %4125
        %4127 = vrot.lane.b32.xlu0 %v3083, 119
        %v4128 = vpop.permute.xlu0 %4127
        %4129 = vrot.lane.b32.xlu0 %v3087, 119
        %v4130 = vpop.permute.xlu0 %4129
        %4131 = vrot.lane.b32.xlu0 %v3060, 119
        %v4132 = vpop.permute.xlu0 %4131
        %4133 = vrot.lane.b32.xlu0 %v3064, 119
        %v4134 = vpop.permute.xlu0 %4133
        %4135 = vrot.lane.b32.xlu0 %v3068, 119
        %v4136 = vpop.permute.xlu0 %4135
        %4137 = vrot.lane.b32.xlu0 %v3072, 119
        %v4138 = vpop.permute.xlu0 %4137
        %4139 = vrot.lane.b32.xlu0 %v3076, 119
        %v4140 = vpop.permute.xlu0 %4139
        %4141 = vrot.lane.b32.xlu0 %v3080, 119
        %v4142 = vpop.permute.xlu0 %4141
        %4143 = vrot.lane.b32.xlu0 %v3084, 119
        %v4144 = vpop.permute.xlu0 %4143
        %4145 = vrot.lane.b32.xlu0 %v3088, 119
        %v4146 = vpop.permute.xlu0 %4145
        %4147 = vrot.lane.b32.xlu0 %v3061, 119
        %v4148 = vpop.permute.xlu0 %4147
        %4149 = vrot.lane.b32.xlu0 %v3065, 119
        %v4150 = vpop.permute.xlu0 %4149
        %4151 = vrot.lane.b32.xlu0 %v3069, 119
        %v4152 = vpop.permute.xlu0 %4151
        %4153 = vrot.lane.b32.xlu0 %v3073, 119
        %v4154 = vpop.permute.xlu0 %4153
        %4155 = vrot.lane.b32.xlu0 %v3077, 119
        %v4156 = vpop.permute.xlu0 %4155
        %4157 = vrot.lane.b32.xlu0 %v3081, 119
        %v4158 = vpop.permute.xlu0 %4157
        %4159 = vrot.lane.b32.xlu0 %v3085, 119
        %v4160 = vpop.permute.xlu0 %4159
        %4161 = vrot.lane.b32.xlu0 %v3089, 119
        %v4162 = vpop.permute.xlu0 %4161
        %4163 = vrot.lane.b32.xlu0 %v3062, 119
        %v4164 = vpop.permute.xlu0 %4163
        %4165 = vrot.lane.b32.xlu0 %v3066, 119
        %v4166 = vpop.permute.xlu0 %4165
        %4167 = vrot.lane.b32.xlu0 %v3070, 119
        %v4168 = vpop.permute.xlu0 %4167
        %4169 = vrot.lane.b32.xlu0 %v3074, 119
        %v4170 = vpop.permute.xlu0 %4169
        %4171 = vrot.lane.b32.xlu0 %v3078, 119
        %v4172 = vpop.permute.xlu0 %4171
        %4173 = vrot.lane.b32.xlu0 %v3082, 119
        %v4174 = vpop.permute.xlu0 %4173
        %4175 = vrot.lane.b32.xlu0 %v3086, 119
        %v4176 = vpop.permute.xlu0 %4175
        %4177 = vrot.lane.b32.xlu0 %v3090, 119
        %v4178 = vpop.permute.xlu0 %4177
        %v4179 = vsel %vm1578, %v4148, %v4164
        %v4180 = vsel %vm1578, %v4150, %v4166
        %v4181 = vsel %vm1578, %v4152, %v4168
        %v4182 = vsel %vm1578, %v4154, %v4170
        %v4183 = vsel %vm1578, %v4156, %v4172
        %v4184 = vsel %vm1578, %v4158, %v4174
        %v4185 = vsel %vm1578, %v4160, %v4176
        %v4186 = vsel %vm1578, %v4162, %v4178
        %v4187 = vsel %vm1578, %v4132, %v4148
        %v4188 = vsel %vm1578, %v4134, %v4150
        %v4189 = vsel %vm1578, %v4136, %v4152
        %v4190 = vsel %vm1578, %v4138, %v4154
        %v4191 = vsel %vm1578, %v4140, %v4156
        %v4192 = vsel %vm1578, %v4142, %v4158
        %v4193 = vsel %vm1578, %v4144, %v4160
        %v4194 = vsel %vm1578, %v4146, %v4162
        %v4195 = vsel %vm1578, %v4116, %v4132
        %v4196 = vsel %vm1578, %v4118, %v4134
        %v4197 = vsel %vm1578, %v4120, %v4136
        %v4198 = vsel %vm1578, %v4122, %v4138
        %v4199 = vsel %vm1578, %v4124, %v4140
        %v4200 = vsel %vm1578, %v4126, %v4142
        %v4201 = vsel %vm1578, %v4128, %v4144
        %v4202 = vsel %vm1578, %v4130, %v4146
        %v4203 = vsel %vm1578, %v4164, %v4116
        %v4204 = vsel %vm1578, %v4166, %v4118
        %v4205 = vsel %vm1578, %v4168, %v4120
        %v4206 = vsel %vm1578, %v4170, %v4122
        %v4207 = vsel %vm1578, %v4172, %v4124
        %v4208 = vsel %vm1578, %v4174, %v4126
        %v4209 = vsel %vm1578, %v4176, %v4128
        %v4210 = vsel %vm1578, %v4178, %v4130
        %4211 = vset.pattern.permute.xlu0 7
        %4212 = vperm.xlu0 %4211, %v380
        %v4213 = vpop.permute.xlu0 %4212
        %4215 = vset.pattern.permute.xlu0 7
        %4216 = vperm.xlu0 %4215, %v381
        %v4217 = vpop.permute.xlu0 %4216
        %4219 = vset.pattern.permute.xlu0 7
        %4220 = vperm.xlu0 %4219, %v382
        %v4221 = vpop.permute.xlu0 %4220
        %4223 = vset.pattern.permute.xlu0 7
        %4224 = vperm.xlu0 %4223, %v383
        %v4225 = vpop.permute.xlu0 %4224
        %4227 = vset.pattern.permute.xlu0 7
        %4228 = vperm.xlu0 %4227, %v384
        %v4229 = vpop.permute.xlu0 %4228
        %4231 = vset.pattern.permute.xlu0 7
        %4232 = vperm.xlu0 %4231, %v385
        %v4233 = vpop.permute.xlu0 %4232
        %4235 = vset.pattern.permute.xlu0 7
        %4236 = vperm.xlu0 %4235, %v386
        %v4237 = vpop.permute.xlu0 %4236
        %4239 = vset.pattern.permute.xlu0 7
        %4240 = vperm.xlu0 %4239, %v387
        %v4241 = vpop.permute.xlu0 %4240
        %v4243 = vmul.f32 %v4213, %v4195
        %v4244 = vmul.f32 %v4213, %v4187
        %v4245 = vmul.f32 %v4213, %v4179
        %v4246 = vmul.f32 %v4213, %v4203
        %v4247 = vmul.f32 %v4217, %v4196
        %v4248 = vmul.f32 %v4217, %v4188
        %v4249 = vmul.f32 %v4217, %v4180
        %v4250 = vmul.f32 %v4217, %v4204
        %v4251 = vmul.f32 %v4221, %v4197
        %v4252 = vmul.f32 %v4221, %v4189
        %v4253 = vmul.f32 %v4221, %v4181
        %v4254 = vmul.f32 %v4221, %v4205
        %v4255 = vmul.f32 %v4225, %v4198
        %v4256 = vmul.f32 %v4225, %v4190
        %v4257 = vmul.f32 %v4225, %v4182
        %v4258 = vmul.f32 %v4225, %v4206
        %v4259 = vmul.f32 %v4229, %v4199
        %v4260 = vmul.f32 %v4229, %v4191
        %v4261 = vmul.f32 %v4229, %v4183
        %v4262 = vmul.f32 %v4229, %v4207
        %v4263 = vmul.f32 %v4233, %v4200
        %v4264 = vmul.f32 %v4233, %v4192
        %v4265 = vmul.f32 %v4233, %v4184
        %v4266 = vmul.f32 %v4233, %v4208
        %v4267 = vmul.f32 %v4237, %v4201
        %v4268 = vmul.f32 %v4237, %v4193
        %v4269 = vmul.f32 %v4237, %v4185
        %v4270 = vmul.f32 %v4237, %v4209
        %v4271 = vmul.f32 %v4241, %v4202
        %v4272 = vmul.f32 %v4241, %v4194
        %v4273 = vmul.f32 %v4241, %v4186
        %v4274 = vmul.f32 %v4241, %v4210
        %v4275 = vadd.f32 %v4083, %v4243
        %v4276 = vadd.f32 %v4084, %v4244
        %v4277 = vadd.f32 %v4085, %v4245
        %v4278 = vadd.f32 %v4086, %v4246
        %v4279 = vadd.f32 %v4087, %v4247
        %v4280 = vadd.f32 %v4088, %v4248
        %v4281 = vadd.f32 %v4089, %v4249
        %v4282 = vadd.f32 %v4090, %v4250
        %v4283 = vadd.f32 %v4091, %v4251
        %v4284 = vadd.f32 %v4092, %v4252
        %v4285 = vadd.f32 %v4093, %v4253
        %v4286 = vadd.f32 %v4094, %v4254
        %v4287 = vadd.f32 %v4095, %v4255
        %v4288 = vadd.f32 %v4096, %v4256
        %v4289 = vadd.f32 %v4097, %v4257
        %v4290 = vadd.f32 %v4098, %v4258
        %v4291 = vadd.f32 %v4099, %v4259
        %v4292 = vadd.f32 %v4100, %v4260
        %v4293 = vadd.f32 %v4101, %v4261
        %v4294 = vadd.f32 %v4102, %v4262
        %v4295 = vadd.f32 %v4103, %v4263
        %v4296 = vadd.f32 %v4104, %v4264
        %v4297 = vadd.f32 %v4105, %v4265
        %v4298 = vadd.f32 %v4106, %v4266
        %v4299 = vadd.f32 %v4107, %v4267
        %v4300 = vadd.f32 %v4108, %v4268
        %v4301 = vadd.f32 %v4109, %v4269
        %v4302 = vadd.f32 %v4110, %v4270
        %v4303 = vadd.f32 %v4111, %v4271
        %v4304 = vadd.f32 %v4112, %v4272
        %v4305 = vadd.f32 %v4113, %v4273
        %v4306 = vadd.f32 %v4114, %v4274
        %4307 = vrot.lane.b32.xlu0 %v3059, 118
        %v4308 = vpop.permute.xlu0 %4307
        %4309 = vrot.lane.b32.xlu0 %v3063, 118
        %v4310 = vpop.permute.xlu0 %4309
        %4311 = vrot.lane.b32.xlu0 %v3067, 118
        %v4312 = vpop.permute.xlu0 %4311
        %4313 = vrot.lane.b32.xlu0 %v3071, 118
        %v4314 = vpop.permute.xlu0 %4313
        %4315 = vrot.lane.b32.xlu0 %v3075, 118
        %v4316 = vpop.permute.xlu0 %4315
        %4317 = vrot.lane.b32.xlu0 %v3079, 118
        %v4318 = vpop.permute.xlu0 %4317
        %4319 = vrot.lane.b32.xlu0 %v3083, 118
        %v4320 = vpop.permute.xlu0 %4319
        %4321 = vrot.lane.b32.xlu0 %v3087, 118
        %v4322 = vpop.permute.xlu0 %4321
        %4323 = vrot.lane.b32.xlu0 %v3060, 118
        %v4324 = vpop.permute.xlu0 %4323
        %4325 = vrot.lane.b32.xlu0 %v3064, 118
        %v4326 = vpop.permute.xlu0 %4325
        %4327 = vrot.lane.b32.xlu0 %v3068, 118
        %v4328 = vpop.permute.xlu0 %4327
        %4329 = vrot.lane.b32.xlu0 %v3072, 118
        %v4330 = vpop.permute.xlu0 %4329
        %4331 = vrot.lane.b32.xlu0 %v3076, 118
        %v4332 = vpop.permute.xlu0 %4331
        %4333 = vrot.lane.b32.xlu0 %v3080, 118
        %v4334 = vpop.permute.xlu0 %4333
        %4335 = vrot.lane.b32.xlu0 %v3084, 118
        %v4336 = vpop.permute.xlu0 %4335
        %4337 = vrot.lane.b32.xlu0 %v3088, 118
        %v4338 = vpop.permute.xlu0 %4337
        %4339 = vrot.lane.b32.xlu0 %v3061, 118
        %v4340 = vpop.permute.xlu0 %4339
        %4341 = vrot.lane.b32.xlu0 %v3065, 118
        %v4342 = vpop.permute.xlu0 %4341
        %4343 = vrot.lane.b32.xlu0 %v3069, 118
        %v4344 = vpop.permute.xlu0 %4343
        %4345 = vrot.lane.b32.xlu0 %v3073, 118
        %v4346 = vpop.permute.xlu0 %4345
        %4347 = vrot.lane.b32.xlu0 %v3077, 118
        %v4348 = vpop.permute.xlu0 %4347
        %4349 = vrot.lane.b32.xlu0 %v3081, 118
        %v4350 = vpop.permute.xlu0 %4349
        %4351 = vrot.lane.b32.xlu0 %v3085, 118
        %v4352 = vpop.permute.xlu0 %4351
        %4353 = vrot.lane.b32.xlu0 %v3089, 118
        %v4354 = vpop.permute.xlu0 %4353
        %4355 = vrot.lane.b32.xlu0 %v3062, 118
        %v4356 = vpop.permute.xlu0 %4355
        %4357 = vrot.lane.b32.xlu0 %v3066, 118
        %v4358 = vpop.permute.xlu0 %4357
        %4359 = vrot.lane.b32.xlu0 %v3070, 118
        %v4360 = vpop.permute.xlu0 %4359
        %4361 = vrot.lane.b32.xlu0 %v3074, 118
        %v4362 = vpop.permute.xlu0 %4361
        %4363 = vrot.lane.b32.xlu0 %v3078, 118
        %v4364 = vpop.permute.xlu0 %4363
        %4365 = vrot.lane.b32.xlu0 %v3082, 118
        %v4366 = vpop.permute.xlu0 %4365
        %4367 = vrot.lane.b32.xlu0 %v3086, 118
        %v4368 = vpop.permute.xlu0 %4367
        %4369 = vrot.lane.b32.xlu0 %v3090, 118
        %v4370 = vpop.permute.xlu0 %4369
        %v4371 = vsel %vm1723, %v4340, %v4356
        %v4372 = vsel %vm1723, %v4342, %v4358
        %v4373 = vsel %vm1723, %v4344, %v4360
        %v4374 = vsel %vm1723, %v4346, %v4362
        %v4375 = vsel %vm1723, %v4348, %v4364
        %v4376 = vsel %vm1723, %v4350, %v4366
        %v4377 = vsel %vm1723, %v4352, %v4368
        %v4378 = vsel %vm1723, %v4354, %v4370
        %v4379 = vsel %vm1723, %v4324, %v4340
        %v4380 = vsel %vm1723, %v4326, %v4342
        %v4381 = vsel %vm1723, %v4328, %v4344
        %v4382 = vsel %vm1723, %v4330, %v4346
        %v4383 = vsel %vm1723, %v4332, %v4348
        %v4384 = vsel %vm1723, %v4334, %v4350
        %v4385 = vsel %vm1723, %v4336, %v4352
        %v4386 = vsel %vm1723, %v4338, %v4354
        %v4387 = vsel %vm1723, %v4308, %v4324
        %v4388 = vsel %vm1723, %v4310, %v4326
        %v4389 = vsel %vm1723, %v4312, %v4328
        %v4390 = vsel %vm1723, %v4314, %v4330
        %v4391 = vsel %vm1723, %v4316, %v4332
        %v4392 = vsel %vm1723, %v4318, %v4334
        %v4393 = vsel %vm1723, %v4320, %v4336
        %v4394 = vsel %vm1723, %v4322, %v4338
        %v4395 = vsel %vm1723, %v4356, %v4308
        %v4396 = vsel %vm1723, %v4358, %v4310
        %v4397 = vsel %vm1723, %v4360, %v4312
        %v4398 = vsel %vm1723, %v4362, %v4314
        %v4399 = vsel %vm1723, %v4364, %v4316
        %v4400 = vsel %vm1723, %v4366, %v4318
        %v4401 = vsel %vm1723, %v4368, %v4320
        %v4402 = vsel %vm1723, %v4370, %v4322
        %4403 = vset.pattern.permute.xlu0 8
        %4404 = vperm.xlu0 %4403, %v380
        %v4405 = vpop.permute.xlu0 %4404
        %4407 = vset.pattern.permute.xlu0 8
        %4408 = vperm.xlu0 %4407, %v381
        %v4409 = vpop.permute.xlu0 %4408
        %4411 = vset.pattern.permute.xlu0 8
        %4412 = vperm.xlu0 %4411, %v382
        %v4413 = vpop.permute.xlu0 %4412
        %4415 = vset.pattern.permute.xlu0 8
        %4416 = vperm.xlu0 %4415, %v383
        %v4417 = vpop.permute.xlu0 %4416
        %4419 = vset.pattern.permute.xlu0 8
        %4420 = vperm.xlu0 %4419, %v384
        %v4421 = vpop.permute.xlu0 %4420
        %4423 = vset.pattern.permute.xlu0 8
        %4424 = vperm.xlu0 %4423, %v385
        %v4425 = vpop.permute.xlu0 %4424
        %4427 = vset.pattern.permute.xlu0 8
        %4428 = vperm.xlu0 %4427, %v386
        %v4429 = vpop.permute.xlu0 %4428
        %4431 = vset.pattern.permute.xlu0 8
        %4432 = vperm.xlu0 %4431, %v387
        %v4433 = vpop.permute.xlu0 %4432
        %v4435 = vmul.f32 %v4405, %v4387
        %v4436 = vmul.f32 %v4405, %v4379
        %v4437 = vmul.f32 %v4405, %v4371
        %v4438 = vmul.f32 %v4405, %v4395
        %v4439 = vmul.f32 %v4409, %v4388
        %v4440 = vmul.f32 %v4409, %v4380
        %v4441 = vmul.f32 %v4409, %v4372
        %v4442 = vmul.f32 %v4409, %v4396
        %v4443 = vmul.f32 %v4413, %v4389
        %v4444 = vmul.f32 %v4413, %v4381
        %v4445 = vmul.f32 %v4413, %v4373
        %v4446 = vmul.f32 %v4413, %v4397
        %v4447 = vmul.f32 %v4417, %v4390
        %v4448 = vmul.f32 %v4417, %v4382
        %v4449 = vmul.f32 %v4417, %v4374
        %v4450 = vmul.f32 %v4417, %v4398
        %v4451 = vmul.f32 %v4421, %v4391
        %v4452 = vmul.f32 %v4421, %v4383
        %v4453 = vmul.f32 %v4421, %v4375
        %v4454 = vmul.f32 %v4421, %v4399
        %v4455 = vmul.f32 %v4425, %v4392
        %v4456 = vmul.f32 %v4425, %v4384
        %v4457 = vmul.f32 %v4425, %v4376
        %v4458 = vmul.f32 %v4425, %v4400
        %v4459 = vmul.f32 %v4429, %v4393
        %v4460 = vmul.f32 %v4429, %v4385
        %v4461 = vmul.f32 %v4429, %v4377
        %v4462 = vmul.f32 %v4429, %v4401
        %v4463 = vmul.f32 %v4433, %v4394
        %v4464 = vmul.f32 %v4433, %v4386
        %v4465 = vmul.f32 %v4433, %v4378
        %v4466 = vmul.f32 %v4433, %v4402
        %v4467 = vadd.f32 %v4275, %v4435
        %v4468 = vadd.f32 %v4276, %v4436
        %v4469 = vadd.f32 %v4277, %v4437
        %v4470 = vadd.f32 %v4278, %v4438
        %v4471 = vadd.f32 %v4279, %v4439
        %v4472 = vadd.f32 %v4280, %v4440
        %v4473 = vadd.f32 %v4281, %v4441
        %v4474 = vadd.f32 %v4282, %v4442
        %v4475 = vadd.f32 %v4283, %v4443
        %v4476 = vadd.f32 %v4284, %v4444
        %v4477 = vadd.f32 %v4285, %v4445
        %v4478 = vadd.f32 %v4286, %v4446
        %v4479 = vadd.f32 %v4287, %v4447
        %v4480 = vadd.f32 %v4288, %v4448
        %v4481 = vadd.f32 %v4289, %v4449
        %v4482 = vadd.f32 %v4290, %v4450
        %v4483 = vadd.f32 %v4291, %v4451
        %v4484 = vadd.f32 %v4292, %v4452
        %v4485 = vadd.f32 %v4293, %v4453
        %v4486 = vadd.f32 %v4294, %v4454
        %v4487 = vadd.f32 %v4295, %v4455
        %v4488 = vadd.f32 %v4296, %v4456
        %v4489 = vadd.f32 %v4297, %v4457
        %v4490 = vadd.f32 %v4298, %v4458
        %v4491 = vadd.f32 %v4299, %v4459
        %v4492 = vadd.f32 %v4300, %v4460
        %v4493 = vadd.f32 %v4301, %v4461
        %v4494 = vadd.f32 %v4302, %v4462
        %v4495 = vadd.f32 %v4303, %v4463
        %v4496 = vadd.f32 %v4304, %v4464
        %v4497 = vadd.f32 %v4305, %v4465
        %v4498 = vadd.f32 %v4306, %v4466
        %4499 = vrot.lane.b32.xlu0 %v3059, 117
        %v4500 = vpop.permute.xlu0 %4499
        %4501 = vrot.lane.b32.xlu0 %v3063, 117
        %v4502 = vpop.permute.xlu0 %4501
        %4503 = vrot.lane.b32.xlu0 %v3067, 117
        %v4504 = vpop.permute.xlu0 %4503
        %4505 = vrot.lane.b32.xlu0 %v3071, 117
        %v4506 = vpop.permute.xlu0 %4505
        %4507 = vrot.lane.b32.xlu0 %v3075, 117
        %v4508 = vpop.permute.xlu0 %4507
        %4509 = vrot.lane.b32.xlu0 %v3079, 117
        %v4510 = vpop.permute.xlu0 %4509
        %4511 = vrot.lane.b32.xlu0 %v3083, 117
        %v4512 = vpop.permute.xlu0 %4511
        %4513 = vrot.lane.b32.xlu0 %v3087, 117
        %v4514 = vpop.permute.xlu0 %4513
        %4515 = vrot.lane.b32.xlu0 %v3060, 117
        %v4516 = vpop.permute.xlu0 %4515
        %4517 = vrot.lane.b32.xlu0 %v3064, 117
        %v4518 = vpop.permute.xlu0 %4517
        %4519 = vrot.lane.b32.xlu0 %v3068, 117
        %v4520 = vpop.permute.xlu0 %4519
        %4521 = vrot.lane.b32.xlu0 %v3072, 117
        %v4522 = vpop.permute.xlu0 %4521
        %4523 = vrot.lane.b32.xlu0 %v3076, 117
        %v4524 = vpop.permute.xlu0 %4523
        %4525 = vrot.lane.b32.xlu0 %v3080, 117
        %v4526 = vpop.permute.xlu0 %4525
        %4527 = vrot.lane.b32.xlu0 %v3084, 117
        %v4528 = vpop.permute.xlu0 %4527
        %4529 = vrot.lane.b32.xlu0 %v3088, 117
        %v4530 = vpop.permute.xlu0 %4529
        %4531 = vrot.lane.b32.xlu0 %v3061, 117
        %v4532 = vpop.permute.xlu0 %4531
        %4533 = vrot.lane.b32.xlu0 %v3065, 117
        %v4534 = vpop.permute.xlu0 %4533
        %4535 = vrot.lane.b32.xlu0 %v3069, 117
        %v4536 = vpop.permute.xlu0 %4535
        %4537 = vrot.lane.b32.xlu0 %v3073, 117
        %v4538 = vpop.permute.xlu0 %4537
        %4539 = vrot.lane.b32.xlu0 %v3077, 117
        %v4540 = vpop.permute.xlu0 %4539
        %4541 = vrot.lane.b32.xlu0 %v3081, 117
        %v4542 = vpop.permute.xlu0 %4541
        %4543 = vrot.lane.b32.xlu0 %v3085, 117
        %v4544 = vpop.permute.xlu0 %4543
        %4545 = vrot.lane.b32.xlu0 %v3089, 117
        %v4546 = vpop.permute.xlu0 %4545
        %4547 = vrot.lane.b32.xlu0 %v3062, 117
        %v4548 = vpop.permute.xlu0 %4547
        %4549 = vrot.lane.b32.xlu0 %v3066, 117
        %v4550 = vpop.permute.xlu0 %4549
        %4551 = vrot.lane.b32.xlu0 %v3070, 117
        %v4552 = vpop.permute.xlu0 %4551
        %4553 = vrot.lane.b32.xlu0 %v3074, 117
        %v4554 = vpop.permute.xlu0 %4553
        %4555 = vrot.lane.b32.xlu0 %v3078, 117
        %v4556 = vpop.permute.xlu0 %4555
        %4557 = vrot.lane.b32.xlu0 %v3082, 117
        %v4558 = vpop.permute.xlu0 %4557
        %4559 = vrot.lane.b32.xlu0 %v3086, 117
        %v4560 = vpop.permute.xlu0 %4559
        %4561 = vrot.lane.b32.xlu0 %v3090, 117
        %v4562 = vpop.permute.xlu0 %4561
        %v4563 = vsel %vm1868, %v4532, %v4548
        %v4564 = vsel %vm1868, %v4534, %v4550
        %v4565 = vsel %vm1868, %v4536, %v4552
        %v4566 = vsel %vm1868, %v4538, %v4554
        %v4567 = vsel %vm1868, %v4540, %v4556
        %v4568 = vsel %vm1868, %v4542, %v4558
        %v4569 = vsel %vm1868, %v4544, %v4560
        %v4570 = vsel %vm1868, %v4546, %v4562
        %v4571 = vsel %vm1868, %v4516, %v4532
        %v4572 = vsel %vm1868, %v4518, %v4534
        %v4573 = vsel %vm1868, %v4520, %v4536
        %v4574 = vsel %vm1868, %v4522, %v4538
        %v4575 = vsel %vm1868, %v4524, %v4540
        %v4576 = vsel %vm1868, %v4526, %v4542
        %v4577 = vsel %vm1868, %v4528, %v4544
        %v4578 = vsel %vm1868, %v4530, %v4546
        %v4579 = vsel %vm1868, %v4500, %v4516
        %v4580 = vsel %vm1868, %v4502, %v4518
        %v4581 = vsel %vm1868, %v4504, %v4520
        %v4582 = vsel %vm1868, %v4506, %v4522
        %v4583 = vsel %vm1868, %v4508, %v4524
        %v4584 = vsel %vm1868, %v4510, %v4526
        %v4585 = vsel %vm1868, %v4512, %v4528
        %v4586 = vsel %vm1868, %v4514, %v4530
        %v4587 = vsel %vm1868, %v4548, %v4500
        %v4588 = vsel %vm1868, %v4550, %v4502
        %v4589 = vsel %vm1868, %v4552, %v4504
        %v4590 = vsel %vm1868, %v4554, %v4506
        %v4591 = vsel %vm1868, %v4556, %v4508
        %v4592 = vsel %vm1868, %v4558, %v4510
        %v4593 = vsel %vm1868, %v4560, %v4512
        %v4594 = vsel %vm1868, %v4562, %v4514
        %4595 = vset.pattern.permute.xlu0 9
        %4596 = vperm.xlu0 %4595, %v380
        %v4597 = vpop.permute.xlu0 %4596
        %4599 = vset.pattern.permute.xlu0 9
        %4600 = vperm.xlu0 %4599, %v381
        %v4601 = vpop.permute.xlu0 %4600
        %4603 = vset.pattern.permute.xlu0 9
        %4604 = vperm.xlu0 %4603, %v382
        %v4605 = vpop.permute.xlu0 %4604
        %4607 = vset.pattern.permute.xlu0 9
        %4608 = vperm.xlu0 %4607, %v383
        %v4609 = vpop.permute.xlu0 %4608
        %4611 = vset.pattern.permute.xlu0 9
        %4612 = vperm.xlu0 %4611, %v384
        %v4613 = vpop.permute.xlu0 %4612
        %4615 = vset.pattern.permute.xlu0 9
        %4616 = vperm.xlu0 %4615, %v385
        %v4617 = vpop.permute.xlu0 %4616
        %4619 = vset.pattern.permute.xlu0 9
        %4620 = vperm.xlu0 %4619, %v386
        %v4621 = vpop.permute.xlu0 %4620
        %4623 = vset.pattern.permute.xlu0 9
        %4624 = vperm.xlu0 %4623, %v387
        %v4625 = vpop.permute.xlu0 %4624
        %v4627 = vmul.f32 %v4597, %v4579
        %v4628 = vmul.f32 %v4597, %v4571
        %v4629 = vmul.f32 %v4597, %v4563
        %v4630 = vmul.f32 %v4597, %v4587
        %v4631 = vmul.f32 %v4601, %v4580
        %v4632 = vmul.f32 %v4601, %v4572
        %v4633 = vmul.f32 %v4601, %v4564
        %v4634 = vmul.f32 %v4601, %v4588
        %v4635 = vmul.f32 %v4605, %v4581
        %v4636 = vmul.f32 %v4605, %v4573
        %v4637 = vmul.f32 %v4605, %v4565
        %v4638 = vmul.f32 %v4605, %v4589
        %v4639 = vmul.f32 %v4609, %v4582
        %v4640 = vmul.f32 %v4609, %v4574
        %v4641 = vmul.f32 %v4609, %v4566
        %v4642 = vmul.f32 %v4609, %v4590
        %v4643 = vmul.f32 %v4613, %v4583
        %v4644 = vmul.f32 %v4613, %v4575
        %v4645 = vmul.f32 %v4613, %v4567
        %v4646 = vmul.f32 %v4613, %v4591
        %v4647 = vmul.f32 %v4617, %v4584
        %v4648 = vmul.f32 %v4617, %v4576
        %v4649 = vmul.f32 %v4617, %v4568
        %v4650 = vmul.f32 %v4617, %v4592
        %v4651 = vmul.f32 %v4621, %v4585
        %v4652 = vmul.f32 %v4621, %v4577
        %v4653 = vmul.f32 %v4621, %v4569
        %v4654 = vmul.f32 %v4621, %v4593
        %v4655 = vmul.f32 %v4625, %v4586
        %v4656 = vmul.f32 %v4625, %v4578
        %v4657 = vmul.f32 %v4625, %v4570
        %v4658 = vmul.f32 %v4625, %v4594
        %v4659 = vadd.f32 %v4467, %v4627
        %v4660 = vadd.f32 %v4468, %v4628
        %v4661 = vadd.f32 %v4469, %v4629
        %v4662 = vadd.f32 %v4470, %v4630
        %v4663 = vadd.f32 %v4471, %v4631
        %v4664 = vadd.f32 %v4472, %v4632
        %v4665 = vadd.f32 %v4473, %v4633
        %v4666 = vadd.f32 %v4474, %v4634
        %v4667 = vadd.f32 %v4475, %v4635
        %v4668 = vadd.f32 %v4476, %v4636
        %v4669 = vadd.f32 %v4477, %v4637
        %v4670 = vadd.f32 %v4478, %v4638
        %v4671 = vadd.f32 %v4479, %v4639
        %v4672 = vadd.f32 %v4480, %v4640
        %v4673 = vadd.f32 %v4481, %v4641
        %v4674 = vadd.f32 %v4482, %v4642
        %v4675 = vadd.f32 %v4483, %v4643
        %v4676 = vadd.f32 %v4484, %v4644
        %v4677 = vadd.f32 %v4485, %v4645
        %v4678 = vadd.f32 %v4486, %v4646
        %v4679 = vadd.f32 %v4487, %v4647
        %v4680 = vadd.f32 %v4488, %v4648
        %v4681 = vadd.f32 %v4489, %v4649
        %v4682 = vadd.f32 %v4490, %v4650
        %v4683 = vadd.f32 %v4491, %v4651
        %v4684 = vadd.f32 %v4492, %v4652
        %v4685 = vadd.f32 %v4493, %v4653
        %v4686 = vadd.f32 %v4494, %v4654
        %v4687 = vadd.f32 %v4495, %v4655
        %v4688 = vadd.f32 %v4496, %v4656
        %v4689 = vadd.f32 %v4497, %v4657
        %v4690 = vadd.f32 %v4498, %v4658
        %4691 = vset.pattern.permute.xlu0 10
        %4692 = vperm.xlu0 %4691, %v380
        %v4693 = vpop.permute.xlu0 %4692
        %4695 = vset.pattern.permute.xlu0 10
        %4696 = vperm.xlu0 %4695, %v381
        %v4697 = vpop.permute.xlu0 %4696
        %4699 = vset.pattern.permute.xlu0 10
        %4700 = vperm.xlu0 %4699, %v382
        %v4701 = vpop.permute.xlu0 %4700
        %4703 = vset.pattern.permute.xlu0 10
        %4704 = vperm.xlu0 %4703, %v383
        %v4705 = vpop.permute.xlu0 %4704
        %4707 = vset.pattern.permute.xlu0 10
        %4708 = vperm.xlu0 %4707, %v384
        %v4709 = vpop.permute.xlu0 %4708
        %4711 = vset.pattern.permute.xlu0 10
        %4712 = vperm.xlu0 %4711, %v385
        %v4713 = vpop.permute.xlu0 %4712
        %4715 = vset.pattern.permute.xlu0 10
        %4716 = vperm.xlu0 %4715, %v386
        %v4717 = vpop.permute.xlu0 %4716
        %4719 = vset.pattern.permute.xlu0 10
        %4720 = vperm.xlu0 %4719, %v387
        %v4721 = vpop.permute.xlu0 %4720
        %v4723 = vadd.f32 %v4659, %v4693
        %v4724 = vadd.f32 %v4660, %v4693
        %v4725 = vadd.f32 %v4661, %v4693
        %v4726 = vadd.f32 %v4662, %v4693
        %v4727 = vadd.f32 %v4663, %v4697
        %v4728 = vadd.f32 %v4664, %v4697
        %v4729 = vadd.f32 %v4665, %v4697
        %v4730 = vadd.f32 %v4666, %v4697
        %v4731 = vadd.f32 %v4667, %v4701
        %v4732 = vadd.f32 %v4668, %v4701
        %v4733 = vadd.f32 %v4669, %v4701
        %v4734 = vadd.f32 %v4670, %v4701
        %v4735 = vadd.f32 %v4671, %v4705
        %v4736 = vadd.f32 %v4672, %v4705
        %v4737 = vadd.f32 %v4673, %v4705
        %v4738 = vadd.f32 %v4674, %v4705
        %v4739 = vadd.f32 %v4675, %v4709
        %v4740 = vadd.f32 %v4676, %v4709
        %v4741 = vadd.f32 %v4677, %v4709
        %v4742 = vadd.f32 %v4678, %v4709
        %v4743 = vadd.f32 %v4679, %v4713
        %v4744 = vadd.f32 %v4680, %v4713
        %v4745 = vadd.f32 %v4681, %v4713
        %v4746 = vadd.f32 %v4682, %v4713
        %v4747 = vadd.f32 %v4683, %v4717
        %v4748 = vadd.f32 %v4684, %v4717
        %v4749 = vadd.f32 %v4685, %v4717
        %v4750 = vadd.f32 %v4686, %v4717
        %v4751 = vadd.f32 %v4687, %v4721
        %v4752 = vadd.f32 %v4688, %v4721
        %v4753 = vadd.f32 %v4689, %v4721
        %v4754 = vadd.f32 %v4690, %v4721
        %v4755 = vmul.f32 %v4723, 0.5
        %v4756 = vmul.f32 %v4724, 0.5
        %v4757 = vmul.f32 %v4725, 0.5
        %v4758 = vmul.f32 %v4726, 0.5
        %v4759 = vmul.f32 %v4727, 0.5
        %v4760 = vmul.f32 %v4728, 0.5
        %v4761 = vmul.f32 %v4729, 0.5
        %v4762 = vmul.f32 %v4730, 0.5
        %v4763 = vmul.f32 %v4731, 0.5
        %v4764 = vmul.f32 %v4732, 0.5
        %v4765 = vmul.f32 %v4733, 0.5
        %v4766 = vmul.f32 %v4734, 0.5
        %v4767 = vmul.f32 %v4735, 0.5
        %v4768 = vmul.f32 %v4736, 0.5
        %v4769 = vmul.f32 %v4737, 0.5
        %v4770 = vmul.f32 %v4738, 0.5
        %v4771 = vmul.f32 %v4723, 0.044715
        %v4772 = vmul.f32 %v4724, 0.044715
        %v4773 = vmul.f32 %v4725, 0.044715
        %v4774 = vmul.f32 %v4726, 0.044715
        %v4775 = vmul.f32 %v4727, 0.044715
        %v4776 = vmul.f32 %v4728, 0.044715
        %v4777 = vmul.f32 %v4729, 0.044715
        %v4778 = vmul.f32 %v4730, 0.044715
        %v4779 = vmul.f32 %v4731, 0.044715
        %v4780 = vmul.f32 %v4732, 0.044715
        %v4781 = vmul.f32 %v4733, 0.044715
        %v4782 = vmul.f32 %v4734, 0.044715
        %v4783 = vmul.f32 %v4735, 0.044715
        %v4784 = vmul.f32 %v4736, 0.044715
        %v4785 = vmul.f32 %v4737, 0.044715
        %v4786 = vmul.f32 %v4738, 0.044715
        %v4787 = vmul.f32 %v4771, %v4723
        %v4788 = vmul.f32 %v4772, %v4724
        %v4789 = vmul.f32 %v4773, %v4725
        %v4790 = vmul.f32 %v4774, %v4726
        %v4791 = vmul.f32 %v4775, %v4727
        %v4792 = vmul.f32 %v4776, %v4728
        %v4793 = vmul.f32 %v4777, %v4729
        %v4794 = vmul.f32 %v4778, %v4730
        %v4795 = vmul.f32 %v4779, %v4731
        %v4796 = vmul.f32 %v4780, %v4732
        %v4797 = vmul.f32 %v4781, %v4733
        %v4798 = vmul.f32 %v4782, %v4734
        %v4799 = vmul.f32 %v4783, %v4735
        %v4800 = vmul.f32 %v4784, %v4736
        %v4801 = vmul.f32 %v4785, %v4737
        %v4802 = vmul.f32 %v4786, %v4738
        %v4803 = vmul.f32 %v4787, %v4723
        %v4804 = vmul.f32 %v4788, %v4724
        %v4805 = vmul.f32 %v4789, %v4725
        %v4806 = vmul.f32 %v4790, %v4726
        %v4807 = vmul.f32 %v4791, %v4727
        %v4808 = vmul.f32 %v4792, %v4728
        %v4809 = vmul.f32 %v4793, %v4729
        %v4810 = vmul.f32 %v4794, %v4730
        %v4811 = vmul.f32 %v4795, %v4731
        %v4812 = vmul.f32 %v4796, %v4732
        %v4813 = vmul.f32 %v4797, %v4733
        %v4814 = vmul.f32 %v4798, %v4734
        %v4815 = vmul.f32 %v4799, %v4735
        %v4816 = vmul.f32 %v4800, %v4736
        %v4817 = vmul.f32 %v4801, %v4737
        %v4818 = vmul.f32 %v4802, %v4738
        %v4819 = vadd.f32 %v4723, %v4803
        %v4820 = vadd.f32 %v4724, %v4804
        %v4821 = vadd.f32 %v4725, %v4805
        %v4822 = vadd.f32 %v4726, %v4806
        %v4823 = vadd.f32 %v4727, %v4807
        %v4824 = vadd.f32 %v4728, %v4808
        %v4825 = vadd.f32 %v4729, %v4809
        %v4826 = vadd.f32 %v4730, %v4810
        %v4827 = vadd.f32 %v4731, %v4811
        %v4828 = vadd.f32 %v4732, %v4812
        %v4829 = vadd.f32 %v4733, %v4813
        %v4830 = vadd.f32 %v4734, %v4814
        %v4831 = vadd.f32 %v4735, %v4815
        %v4832 = vadd.f32 %v4736, %v4816
        %v4833 = vadd.f32 %v4737, %v4817
        %v4834 = vadd.f32 %v4738, %v4818
        %v4835 = vmul.f32 %v4819, 0.7978846
        %v4836 = vmul.f32 %v4820, 0.7978846
        %v4837 = vmul.f32 %v4821, 0.7978846
        %v4838 = vmul.f32 %v4822, 0.7978846
        %v4839 = vmul.f32 %v4823, 0.7978846
        %v4840 = vmul.f32 %v4824, 0.7978846
        %v4841 = vmul.f32 %v4825, 0.7978846
        %v4842 = vmul.f32 %v4826, 0.7978846
        %v4843 = vmul.f32 %v4827, 0.7978846
        %v4844 = vmul.f32 %v4828, 0.7978846
        %v4845 = vmul.f32 %v4829, 0.7978846
        %v4846 = vmul.f32 %v4830, 0.7978846
        %v4847 = vmul.f32 %v4831, 0.7978846
        %v4848 = vmul.f32 %v4832, 0.7978846
        %v4849 = vmul.f32 %v4833, 0.7978846
        %v4850 = vmul.f32 %v4834, 0.7978846
        %v4851 = vtanh.pop %v4835
        %v4852 = vtanh.pop %v4836
        %v4853 = vtanh.pop %v4837
        %v4854 = vtanh.pop %v4838
        %v4855 = vtanh.pop %v4839
        %v4856 = vtanh.pop %v4840
        %v4857 = vtanh.pop %v4841
        %v4858 = vtanh.pop %v4842
        %v4859 = vtanh.pop %v4843
        %v4860 = vtanh.pop %v4844
        %v4861 = vtanh.pop %v4845
        %v4862 = vtanh.pop %v4846
        %v4863 = vtanh.pop %v4847
        %v4864 = vtanh.pop %v4848
        %v4865 = vtanh.pop %v4849
        %v4866 = vtanh.pop %v4850
        %v4867 = vadd.f32 %v4851, 1.0
        %v4868 = vadd.f32 %v4852, 1.0
        %v4869 = vadd.f32 %v4853, 1.0
        %v4870 = vadd.f32 %v4854, 1.0
        %v4871 = vadd.f32 %v4855, 1.0
        %v4872 = vadd.f32 %v4856, 1.0
        %v4873 = vadd.f32 %v4857, 1.0
        %v4874 = vadd.f32 %v4858, 1.0
        %v4875 = vadd.f32 %v4859, 1.0
        %v4876 = vadd.f32 %v4860, 1.0
        %v4877 = vadd.f32 %v4861, 1.0
        %v4878 = vadd.f32 %v4862, 1.0
        %v4879 = vadd.f32 %v4863, 1.0
        %v4880 = vadd.f32 %v4864, 1.0
        %v4881 = vadd.f32 %v4865, 1.0
        %v4882 = vadd.f32 %v4866, 1.0
        %v4883 = vmul.f32 %v4755, %v4867
        %v4884 = vmul.f32 %v4756, %v4868
        %v4885 = vmul.f32 %v4757, %v4869
        %v4886 = vmul.f32 %v4758, %v4870
        %v4887 = vmul.f32 %v4759, %v4871
        %v4888 = vmul.f32 %v4760, %v4872
        %v4889 = vmul.f32 %v4761, %v4873
        %v4890 = vmul.f32 %v4762, %v4874
        %v4891 = vmul.f32 %v4763, %v4875
        %v4892 = vmul.f32 %v4764, %v4876
        %v4893 = vmul.f32 %v4765, %v4877
        %v4894 = vmul.f32 %v4766, %v4878
        %v4895 = vmul.f32 %v4767, %v4879
        %v4896 = vmul.f32 %v4768, %v4880
        %v4897 = vmul.f32 %v4769, %v4881
        %v4898 = vmul.f32 %v4770, %v4882
        %v4899 = vmul.f32 %v4883, %v4739
        %v4900 = vmul.f32 %v4884, %v4740
        %v4901 = vmul.f32 %v4885, %v4741
        %v4902 = vmul.f32 %v4886, %v4742
        %v4903 = vmul.f32 %v4887, %v4743
        %v4904 = vmul.f32 %v4888, %v4744
        %v4905 = vmul.f32 %v4889, %v4745
        %v4906 = vmul.f32 %v4890, %v4746
        %v4907 = vmul.f32 %v4891, %v4747
        %v4908 = vmul.f32 %v4892, %v4748
        %v4909 = vmul.f32 %v4893, %v4749
        %v4910 = vmul.f32 %v4894, %v4750
        %v4911 = vmul.f32 %v4895, %v4751
        %v4912 = vmul.f32 %v4896, %v4752
        %v4913 = vmul.f32 %v4897, %v4753
        %v4914 = vmul.f32 %v4898, %v4754
        %v4915 = vld [vmem:[%s9] sm:$0xf]
        %v4916 = vld [vmem:[%s9 + $0x4] sm:$0xf]
        %v4917 = vpack.c.bf16 %v4903, %v4899
        %v4918 = vpack.c.bf16 %v4904, %v4900
        %v4919 = vpack.c.bf16 %v4905, %v4901
        %v4920 = vpack.c.bf16 %v4906, %v4902
        %v4921 = vpack.c.bf16 %v4911, %v4907
        %v4922 = vpack.c.bf16 %v4912, %v4908
        %v4923 = vpack.c.bf16 %v4913, %v4909
        %v4924 = vpack.c.bf16 %v4914, %v4910
        %4925 = vset.pattern.permute.xlu0 5
        %4926 = vperm.xlu0 %4925, %v372
        %v4927 = vpop.permute.xlu0 %4926
        %4929 = vset.pattern.permute.xlu0 5
        %4930 = vperm.xlu0 %4929, %v373
        %v4931 = vpop.permute.xlu0 %4930
        %v4935 = vunpack.c.l.b16 %v4915
        %v4936 = vunpack.c.l.b16 %v4916
        %v4937 = vpack.c.b16 %v4936, %v4935
        %vm4938 = vcmask 261120
        %v4940 = vsel %vm4938, %v4937, 0
        %4942 = vmatprep.subr.bf16.mxu0 %v4918
        %4943 = vmatpush1.bf16.msra.mxu0 %v4917
        %4944 = vmatprep.subr.bf16.mxu0 %v4922
        %4945 = vmatpush1.bf16.msra.mxu0 %v4921
        %4946 = vmatprep.subr.bf16.mxu0 0
        %4947 = vmatpush1.bf16.msra.mxu0 0
        %4948 = vmatprep.subr.bf16.mxu0 0
        %4949 = vmatpush1.bf16.msra.mxu0 0
        %4950 = vmatprep.subr.bf16.mxu0 0
        %4951 = vmatpush1.bf16.msra.mxu0 0
        %4952 = vmatprep.subr.bf16.mxu0 0
        %4953 = vmatpush1.bf16.msra.mxu0 0
        %4954 = vmatprep.subr.bf16.mxu0 0
        %4955 = vmatpush1.bf16.msra.mxu0 0
        %4956 = vmatprep.subr.bf16.mxu0 0
        %4957 = vmatpush1.bf16.msra.mxu0 0
        %4958 = vmatprep.subr.bf16.mxu0 0
        %4959 = vmatpush1.bf16.msra.mxu0 0
        %4960 = vmatprep.subr.bf16.mxu0 0
        %4961 = vmatpush1.bf16.msra.mxu0 0
        %4962 = vmatprep.subr.bf16.mxu0 0
        %4963 = vmatpush1.bf16.msra.mxu0 0
        %4964 = vmatprep.subr.bf16.mxu0 0
        %4965 = vmatpush1.bf16.msra.mxu0 0
        %4966 = vmatprep.subr.bf16.mxu0 0
        %4967 = vmatpush1.bf16.msra.mxu0 0
        %4968 = vmatprep.subr.bf16.mxu0 0
        %4969 = vmatpush1.bf16.msra.mxu0 0
        %4970 = vmatprep.subr.bf16.mxu0 0
        %4971 = vmatpush1.bf16.msra.mxu0 0
        %4972 = vmatprep.subr.bf16.mxu0 0
        %4973 = vmatpush1.bf16.msra.mxu0 0
        %4974 = vmatprep.mubr.bf16.mxu0 0
        %4975 = vmatmul.mubr.bf16.gmra.mrb[0].mxu0 %v4940
        %v4976 = vpop.f32.mrb[0].mxu0
        %v4977 = vadd.f32 %v4927, %v4976
        %v4978 = vpop.f32.mrb[0].mxu0
        %v4979 = vadd.f32 %v4927, %v4978
        %v4980 = vpop.f32.mrb[0].mxu0
        %v4981 = vadd.f32 %v4931, %v4980
        %v4982 = vpop.f32.mrb[0].mxu0
        %v4983 = vadd.f32 %v4931, %v4982
        %4984 = vdwg.mxu0
        %4985 = vmatprep.subr.bf16.mxu0 %v4920
        %4986 = vmatpush1.bf16.msra.mxu0 %v4919
        %4987 = vmatprep.subr.bf16.mxu0 %v4924
        %4988 = vmatpush1.bf16.msra.mxu0 %v4923
        %4989 = vmatprep.subr.bf16.mxu0 0
        %4990 = vmatpush1.bf16.msra.mxu0 0
        %4991 = vmatprep.subr.bf16.mxu0 0
        %4992 = vmatpush1.bf16.msra.mxu0 0
        %4993 = vmatprep.subr.bf16.mxu0 0
        %4994 = vmatpush1.bf16.msra.mxu0 0
        %4995 = vmatprep.subr.bf16.mxu0 0
        %4996 = vmatpush1.bf16.msra.mxu0 0
        %4997 = vmatprep.subr.bf16.mxu0 0
        %4998 = vmatpush1.bf16.msra.mxu0 0
        %4999 = vmatprep.subr.bf16.mxu0 0
        %5000 = vmatpush1.bf16.msra.mxu0 0
        %5001 = vmatprep.subr.bf16.mxu0 0
        %5002 = vmatpush1.bf16.msra.mxu0 0
        %5003 = vmatprep.subr.bf16.mxu0 0
        %5004 = vmatpush1.bf16.msra.mxu0 0
        %5005 = vmatprep.subr.bf16.mxu0 0
        %5006 = vmatpush1.bf16.msra.mxu0 0
        %5007 = vmatprep.subr.bf16.mxu0 0
        %5008 = vmatpush1.bf16.msra.mxu0 0
        %5009 = vmatprep.subr.bf16.mxu0 0
        %5010 = vmatpush1.bf16.msra.mxu0 0
        %5011 = vmatprep.subr.bf16.mxu0 0
        %5012 = vmatpush1.bf16.msra.mxu0 0
        %5013 = vmatprep.subr.bf16.mxu0 0
        %5014 = vmatpush1.bf16.msra.mxu0 0
        %5015 = vmatprep.subr.bf16.mxu0 0
        %5016 = vmatpush1.bf16.msra.mxu0 0
        %5017 = vmatprep.mubr.bf16.mxu0 0
        %5018 = vmatmul.mubr.bf16.gmra.mrb[0].mxu0 %v4940
        %v5019 = vpop.f32.mrb[0].mxu0
        %v5020 = vadd.f32 %v4927, %v5019
        %v5021 = vpop.f32.mrb[0].mxu0
        %v5022 = vadd.f32 %v4927, %v5021
        %v5023 = vpop.f32.mrb[0].mxu0
        %v5024 = vadd.f32 %v4931, %v5023
        %v5025 = vpop.f32.mrb[0].mxu0
        %v5026 = vadd.f32 %v4931, %v5025
        %5027 = vdwg.mxu0
        %v5028 = vadd.f32 %v2693, %v4977
        %v5029 = vadd.f32 %v2694, %v4979
        %v5030 = vadd.f32 %v2695, %v5020
        %v5031 = vadd.f32 %v2696, %v5022
        %v5032 = vadd.f32 %v2697, %v4981
        %v5033 = vadd.f32 %v2698, %v4983
        %v5034 = vadd.f32 %v2699, %v5024
        %v5035 = vadd.f32 %v2700, %v5026
        %v5036 = vpack.c.bf16 %v5032, %v5028
        %v5037 = vpack.c.bf16 %v5033, %v5029
        %v5038 = vpack.c.bf16 %v5034, %v5030
        %v5039 = vpack.c.bf16 %v5035, %v5031
        %v5044 = vunpack.c.l.b16 %v5036
        %v5045 = vunpack.c.l.b16 %v5037
        %v5046 = vunpack.c.l.b16 %v5038
        %v5047 = vunpack.c.l.b16 %v5039
        %v5048 = vunpack.c.h.b16 %v5036
        %v5049 = vunpack.c.h.b16 %v5037
        %v5050 = vunpack.c.h.b16 %v5038
        %v5051 = vunpack.c.h.b16 %v5039
        %v5052 = vpack.c.b16 %v5045, %v5044
        %v5053 = vpack.c.b16 %v5047, %v5046
        %v5054 = vpack.c.b16 %v5049, %v5048
        %v5055 = vpack.c.b16 %v5051, %v5050
        %5060 = vst [vmem:[%s352] sm:$0xff] %v5052
        %5061 = vst [vmem:[%s352 + $0x8] sm:$0xff] %v5053
        %5062 = vst [vmem:[%s352 + $0x10] sm:$0xff] %v5054
        %5063 = vst [vmem:[%s352 + $0x18] sm:$0xff] %v5055
        %s5064 = sand.u32 %s247, 1
        %s5065 = scalar_lea.sflag [#allocation4], %s5064
        %s5066 = sand.u32 %s247, 1
        %s5067 = smul.addr %s5066, 32
        %s5068 = scalar_lea.vmem [#allocation3], %s5067
        // Predicated region
        $region61: #{tpu_custom_call.1} parent=59 // pred_check
          %p5069 = pneg %p257
        $region62: #{tpu_custom_call.1} parent=59 // pred_check_branch
          %5071 = sbr.rel (%p5069) target = $region64
        $region63: #{tpu_custom_call.1} parent=59 // pred_region
          %s5073 = ssub.s32 512, 512
          %5074 = vsyncadd %s5065, %s5073
          %s5075 = smul.addr %s24, 8
          %s5076 = smul.addr %s5075, 64
          %s5077 = scalar_lea.hbm %s10, %s5076
          %s5078 = sshll.u32 %s5068, 4
          %s5079 = int_to_ptr.vmem [resolvable:$true] %s5078
          %5084 = dma.vmem_to_hbm [thread:$0]  %s5079, 512, %s5077, %s5065, 256, 256, 16
        $region64: #{tpu_custom_call.1} parent=59 // pred_fallthru
          _
      $region60: #{tpu_custom_call.1} parent=5 // pred_fallthru
        _
      %p5085 = scmp.le.s32.totalorder 2, %s19
      // Predicated region
      $region65: #{tpu_custom_call.1} parent=5 // pred_check
        %p5086 = pneg %p5085
      $region66: #{tpu_custom_call.1} parent=5 // pred_check_branch
        %5088 = sbr.rel (%p5086) target = $region68
      $region67: #{tpu_custom_call.1} parent=5 // pred_region
        %s5089 = ssub.s32 %s19, 2
        // Predicated region
        $region69: #{tpu_custom_call.1} parent=67 // pred_check
          %p5090 = pneg %p263
        $region70: #{tpu_custom_call.1} parent=67 // pred_check_branch
          %5092 = sbr.rel (%p5090) target = $region72
        $region71: #{tpu_custom_call.1} parent=67 // pred_region
          %s5093 = sand.u32 %s248, 1
          %s5094 = scalar_lea.sflag [#allocation4], %s5093
          %s5095 = sand.u32 %s248, 1
          %s5096 = smul.addr %s5095, 32
          %s5097 = scalar_lea.vmem [#allocation3], %s5096
          %5098 = dma.done %s5094, 512
        $region72: #{tpu_custom_call.1} parent=67 // pred_fallthru
          _
      $region68: #{tpu_custom_call.1} parent=5 // pred_fallthru
        _
    $region6: #{tpu_custom_call.1} parent=1 // loop_footer
      %s23 = sadd.s32 1, %s19
    $region7: #{tpu_custom_call.1} parent=1 // loop_footer_branch
      %18 = sbr.rel target = $region3
    $region8: #{tpu_custom_call.1} parent=1 // loop_exit
      _
    %5099 = vsyncpa [#allocation4], 1
    %s5100 = scalar_lea.sflag [#allocation4], 1
    %5101 = vsyncpa %s5100, 1

</llo_original>
